<compile_context>
chip_gen: v7x
topology: tpu7x:2x2x1
jax: 0.10.0
libtpu: 0.0.40
codegen_flags: <defaults>
</compile_context>

<pallas_src>
import functools

import jax
import jax.numpy as jnp
from jax.experimental import pallas as pl
from jax.experimental.pallas import tpu as pltpu


def _convlstm_kernel(x_hbm, h_hbm, c_ref, wx_ref, wh_ref, b_ref,
                     wci_ref, wcf_ref, wco_ref,
                     h_out_ref, c_out_ref,
                     x_scr, h_scr, dma_sem, *,
                     H, W, Cin, Ch, kh, kw, pad_h, pad_w, base, S):
    # x_hbm:  (B, Cin, H*W)   raw HBM ref (memory_space=pl.ANY)
    # h_hbm:  (B, Ch,  H*W)   raw HBM ref
    # c_ref:  (1, Ch, H*W)    c_cur block, lane-dense
    # wx_ref: (kh, kw, 4*Ch, Cin)   per-tap conv weights for the x channels
    # wh_ref: (kh, kw, 4*Ch, Ch)    per-tap conv weights for the h channels
    # b_ref:  (4*Ch, 1)       conv bias (f32)
    # wci/wcf/wco_ref: (Ch, H*W)    peephole weights, lane-dense
    # h_out_ref / c_out_ref: (1, Ch, H*W)
    # x_scr: (Cin, S), h_scr: (Ch, S)  flat padded images; data pixel (r, c)
    #                                  lives at lane index base + r*W + c.
    HW = H * W
    b = pl.program_id(0)

    # --- DMA x[b] / h[b] straight into the interior of the padded scratch ----
    cp_x = pltpu.make_async_copy(x_hbm.at[b], x_scr.at[:, base:base + HW],
                                 dma_sem.at[0])
    cp_h = pltpu.make_async_copy(h_hbm.at[b], h_scr.at[:, base:base + HW],
                                 dma_sem.at[1])
    cp_x.start()
    cp_h.start()

    # --- zero only the padding borders (disjoint from the DMA'd interior) ----
    if base > 0:
        x_scr[:, :base] = jnp.zeros((Cin, base), x_scr.dtype)
        h_scr[:, :base] = jnp.zeros((Ch, base), h_scr.dtype)
    tail = S - (base + HW)
    if tail > 0:
        x_scr[:, base + HW:] = jnp.zeros((Cin, tail), x_scr.dtype)
        h_scr[:, base + HW:] = jnp.zeros((Ch, tail), h_scr.dtype)

    # --- per-dx lane masks for horizontal taps (hoisted, reused over dy) -----
    col_masks = {}
    if kw > 1:
        col = jax.lax.broadcasted_iota(jnp.int32, (1, HW), 1) % W
        for dx in range(kw):
            off = dx - pad_w
            if off != 0:
                col_masks[dx] = jnp.logical_and(col + off >= 0, col + off < W)

    cp_x.wait()
    cp_h.wait()

    # --- conv = kh*kw*2 accumulated matmuls, 4 gates fused in M = 4*Ch -------
    acc = jnp.zeros((4 * Ch, HW), jnp.float32)
    for dy in range(kh):
        for dx in range(kw):
            s0 = base + (dy - pad_h) * W + (dx - pad_w)   # static lane offset
            for scr, wref in ((x_scr, wx_ref), (h_scr, wh_ref)):
                win = scr[:, s0:s0 + HW]                  # (Csrc, H*W)
                if dx in col_masks:
                    win = jnp.where(col_masks[dx], win, 0.0).astype(win.dtype)
                acc = acc + jnp.dot(wref[dy, dx], win,
                                    preferred_element_type=jnp.float32)
    preact = acc + b_ref[...].astype(jnp.float32)         # bias added once

    # --- lane-dense pointwise gate math, (Ch, H*W) per gate ------------------
    c_cur = c_ref[0].astype(jnp.float32)
    w_ci = wci_ref[...].astype(jnp.float32)
    w_cf = wcf_ref[...].astype(jnp.float32)
    w_co = wco_ref[...].astype(jnp.float32)

    def sigmoid(z):
        # Exact rewrite: sigmoid(z) = 0.5 * tanh(0.5*z) + 0.5  (single EUP op).
        return 0.5 * jnp.tanh(0.5 * z) + 0.5

    # Gate order / naming matches the PyTorch forward exactly.
    cc_input_gate = preact[0 * Ch:1 * Ch]
    cc_forget_gate = preact[1 * Ch:2 * Ch]
    cc_output_gate = preact[2 * Ch:3 * Ch]
    cc_output = preact[3 * Ch:4 * Ch]

    input_gate = sigmoid(cc_input_gate + w_ci * c_cur)
    forget_gate = sigmoid(cc_forget_gate + w_cf * c_cur)
    output = jnp.tanh(cc_output_gate)
    c_next = forget_gate * c_cur + input_gate * output
    output_gate = sigmoid(cc_output + w_co * c_next)
    h_next = output_gate * jnp.tanh(c_next)

    h_out_ref[0] = h_next.astype(h_out_ref.dtype)
    c_out_ref[0] = c_next.astype(c_out_ref.dtype)


def convlstm_cell_pallas(x_nchw, h_nchw, c_nchw, w_oihw, bias, wci_nchw,
                         wcf_nchw, wco_nchw, kernel_size):
    """ConvLSTMCell.forward.  Inputs follow the PyTorch NCHW / OIHW convention."""
    kh, kw = kernel_size
    pad_h, pad_w = kh // 2, kw // 2

    B, Cin, H, W = x_nchw.shape
    Ch = h_nchw.shape[1]
    HW = H * W
    dtype = x_nchw.dtype

    # Flat padded-image geometry: data pixel (r, c) lives at lane base + r*W + c.
    lead = pad_h * W + pad_w
    base = ((lead + 127) // 128) * 128 if lead > 0 else 0  # lane-tile aligned interior
    tail = (kh - 1 - pad_h) * W + (kw - 1 - pad_w)
    S = base + HW + tail

    # ---- layout glue (pure reshapes + one tiny weight transpose; no pads) ----
    x_flat = x_nchw.reshape(B, Cin, HW)
    h_flat = h_nchw.reshape(B, Ch, HW)
    c_flat = c_nchw.reshape(B, Ch, HW)
    w_x = jnp.transpose(w_oihw[:, :Cin], (2, 3, 0, 1)).astype(dtype)  # (kh,kw,4Ch,Cin)
    w_h = jnp.transpose(w_oihw[:, Cin:], (2, 3, 0, 1)).astype(dtype)  # (kh,kw,4Ch,Ch)
    b_col = bias.reshape(4 * Ch, 1).astype(jnp.float32)
    wci = wci_nchw.reshape(Ch, HW)
    wcf = wcf_nchw.reshape(Ch, HW)
    wco = wco_nchw.reshape(Ch, HW)

    kernel = functools.partial(
        _convlstm_kernel, H=H, W=W, Cin=Cin, Ch=Ch, kh=kh, kw=kw,
        pad_h=pad_h, pad_w=pad_w, base=base, S=S)

    h_flat_next, c_flat_next = pl.pallas_call(
        kernel,
        out_shape=(jax.ShapeDtypeStruct((B, Ch, HW), dtype),   # h_next
                   jax.ShapeDtypeStruct((B, Ch, HW), dtype)),  # c_next
        grid=(B,),
        in_specs=[
            pl.BlockSpec(memory_space=pl.ANY),                         # x (HBM)
            pl.BlockSpec(memory_space=pl.ANY),                         # h_cur (HBM)
            pl.BlockSpec((1, Ch, HW), lambda b: (b, 0, 0)),            # c_cur
            pl.BlockSpec((kh, kw, 4 * Ch, Cin), lambda b: (0, 0, 0, 0)),  # w_x
            pl.BlockSpec((kh, kw, 4 * Ch, Ch), lambda b: (0, 0, 0, 0)),   # w_h
            pl.BlockSpec((4 * Ch, 1), lambda b: (0, 0)),               # bias
            pl.BlockSpec((Ch, HW), lambda b: (0, 0)),                  # W_ci
            pl.BlockSpec((Ch, HW), lambda b: (0, 0)),                  # W_cf
            pl.BlockSpec((Ch, HW), lambda b: (0, 0)),                  # W_co
        ],
        out_specs=(
            pl.BlockSpec((1, Ch, HW), lambda b: (b, 0, 0)),
            pl.BlockSpec((1, Ch, HW), lambda b: (b, 0, 0)),
        ),
        scratch_shapes=[
            pltpu.VMEM((Cin, S), dtype),      # flat padded x image
            pltpu.VMEM((Ch, S), dtype),       # flat padded h image
            pltpu.SemaphoreType.DMA((2,)),
        ],
        input_output_aliases={2: 1},          # c_cur buffer -> c_next
        compiler_params=pltpu.CompilerParams(
            dimension_semantics=("parallel",),
            vmem_limit_bytes=32 * 1024 * 1024),
    )(x_flat, h_flat, c_flat, w_x, w_h, b_col, wci, wcf, wco)

    h_next = h_flat_next.reshape(B, Ch, H, W)
    c_next = c_flat_next.reshape(B, Ch, H, W)
    return h_next, c_next


def convlstm_cell_reference(x, h, c, w_oihw, bias, wci, wcf, wco, kernel_size):
    """Plain-JAX reference (NCHW), mirrors the PyTorch forward exactly."""
    kh, kw = kernel_size
    pad_h, pad_w = kh // 2, kw // 2
    cat = jnp.concatenate([x, h], axis=1)
    conv = jax.lax.conv_general_dilated(
        cat, w_oihw, window_strides=(1, 1),
        padding=((pad_h, pad_h), (pad_w, pad_w)),
        dimension_numbers=("NCHW", "OIHW", "NCHW"))
    conv = conv + bias[None, :, None, None]
    cc_i, cc_f, cc_og, cc_o = jnp.split(conv, 4, axis=1)
    input_gate = jax.nn.sigmoid(cc_i + wci * c)
    forget_gate = jax.nn.sigmoid(cc_f + wcf * c)
    output = jnp.tanh(cc_og)
    c_next = forget_gate * c + input_gate * output
    output_gate = jax.nn.sigmoid(cc_o + wco * c_next)
    h_next = output_gate * jnp.tanh(c_next)
    return h_next, c_next


if __name__ == "__main__":
    # Small, forward-consistent shapes.
    B = 2
    input_dim = 4
    hidden_dim = 8
    H = W = 16
    kernel_size = (3, 3)
    dtype = jnp.float32

    key = jax.random.PRNGKey(0)
    keys = jax.random.split(key, 8)

    x = jax.random.normal(keys[0], (B, input_dim, H, W), dtype)
    h_cur = jax.random.normal(keys[1], (B, hidden_dim, H, W), dtype)
    c_cur = jax.random.normal(keys[2], (B, hidden_dim, H, W), dtype)

    # Deterministic parameter init (nn.Conv2d weight/bias, peephole params).
    fan_in = (input_dim + hidden_dim) * kernel_size[0] * kernel_size[1]
    scale = 1.0 / jnp.sqrt(jnp.asarray(fan_in, dtype))
    w_conv = scale * jax.random.normal(
        keys[3], (4 * hidden_dim, input_dim + hidden_dim, *kernel_size), dtype)
    b_conv = scale * jax.random.normal(keys[4], (4 * hidden_dim,), dtype)
    # Module inits these to zeros; use small random values to exercise the math.
    W_ci = 0.1 * jax.random.normal(keys[5], (1, hidden_dim, H, W), dtype)
    W_cf = 0.1 * jax.random.normal(keys[6], (1, hidden_dim, H, W), dtype)
    W_co = 0.1 * jax.random.normal(keys[7], (1, hidden_dim, H, W), dtype)

    run = jax.jit(functools.partial(convlstm_cell_pallas, kernel_size=kernel_size))
    h_next, c_next = run(x, h_cur, c_cur, w_conv, b_conv, W_ci, W_cf, W_co)
    jax.block_until_ready((h_next, c_next))

    h_ref, c_ref = convlstm_cell_reference(
        x, h_cur, c_cur, w_conv, b_conv, W_ci, W_cf, W_co, kernel_size)

    assert h_next.shape == (B, hidden_dim, H, W)
    assert c_next.shape == (B, hidden_dim, H, W)
    assert jnp.allclose(h_next, h_ref, atol=5e-5, rtol=5e-5)
    assert jnp.allclose(c_next, c_ref, atol=5e-5, rtol=5e-5)

    print("KERNEL_OK")
</pallas_src>

<mosaic_0001>
module attributes {stable_mosaic.version = 11 : i64} {
  func.func @_convlstm_kernel(%arg0: i32, %arg1: memref<2x4x256xf32, #tpu.memory_space<any>>, %arg2: memref<2x8x256xf32, #tpu.memory_space<any>>, %arg3: memref<1x8x256xf32, #tpu.memory_space<vmem>>, %arg4: memref<3x3x32x4xf32, #tpu.memory_space<vmem>>, %arg5: memref<3x3x32x8xf32, #tpu.memory_space<vmem>>, %arg6: memref<32x1xf32, #tpu.memory_space<vmem>>, %arg7: memref<8x256xf32, #tpu.memory_space<vmem>>, %arg8: memref<8x256xf32, #tpu.memory_space<vmem>>, %arg9: memref<8x256xf32, #tpu.memory_space<vmem>>, %arg10: memref<1x8x256xf32, #tpu.memory_space<vmem>>, %arg11: memref<1x8x256xf32, #tpu.memory_space<vmem>>, %arg12: memref<4x401xf32, #tpu.memory_space<vmem>>, %arg13: memref<8x401xf32, #tpu.memory_space<vmem>>, %arg14: memref<2x!tpu.dma_semaphore, #tpu.memory_space<semaphore_mem>>) attributes {dimension_semantics = [#tpu.dimension_semantics<parallel>], iteration_bounds = array<i64: 2>, scalar_prefetch = 0 : i64, scratch_operands = 3 : i64, tpu.core_type = #tpu.core_type<tc>, window_params = [{}, {}, {transform_indices = @transform_2, window_bounds = array<i64: 1, 8, 256>}, {pipeline_mode = #tpu.pipeline_mode<synchronous>, transform_indices = @transform_3, window_bounds = array<i64: 3, 3, 32, 4>}, {pipeline_mode = #tpu.pipeline_mode<synchronous>, transform_indices = @transform_4, window_bounds = array<i64: 3, 3, 32, 8>}, {pipeline_mode = #tpu.pipeline_mode<synchronous>, transform_indices = @transform_5, window_bounds = array<i64: 32, 1>}, {pipeline_mode = #tpu.pipeline_mode<synchronous>, transform_indices = @transform_6, window_bounds = array<i64: 8, 256>}, {pipeline_mode = #tpu.pipeline_mode<synchronous>, transform_indices = @transform_7, window_bounds = array<i64: 8, 256>}, {pipeline_mode = #tpu.pipeline_mode<synchronous>, transform_indices = @transform_8, window_bounds = array<i64: 8, 256>}, {transform_indices = @transform_9, window_bounds = array<i64: 1, 8, 256>}, {transform_indices = @transform_10, window_bounds = array<i64: 1, 8, 256>}]} {
    %c0_i32 = arith.constant 0 : i32
    %c0_i32_0 = arith.constant 0 : i32
    %c0_i32_1 = arith.constant 0 : i32
    %0 = tpu.memref_slice %arg1[%arg0, %c0_i32_0, %c0_i32_1] : memref<2x4x256xf32, #tpu.memory_space<any>> -> memref<1x4x256xf32, #tpu.memory_space<any>>
    %1 = tpu.memref_squeeze %0 : memref<1x4x256xf32, #tpu.memory_space<any>> -> memref<4x256xf32, #tpu.memory_space<any>>
    %c0_i32_2 = arith.constant 0 : i32
    %c128_i32 = arith.constant 128 : i32
    %2 = tpu.memref_slice %arg12[%c0_i32_2, %c128_i32] : memref<4x401xf32, #tpu.memory_space<vmem>> -> memref<4x256xf32, #tpu.memory_space<vmem>>
    %3 = tpu.memref_slice %arg14[%c0_i32] : memref<2x!tpu.dma_semaphore, #tpu.memory_space<semaphore_mem>> -> memref<1x!tpu.dma_semaphore, #tpu.memory_space<semaphore_mem>>
    %4 = tpu.memref_squeeze %3 : memref<1x!tpu.dma_semaphore, #tpu.memory_space<semaphore_mem>> -> memref<!tpu.dma_semaphore, #tpu.memory_space<semaphore_mem>>
    tpu.enqueue_dma source(%1 : memref<4x256xf32, #tpu.memory_space<any>>) target(%2 : memref<4x256xf32, #tpu.memory_space<vmem>>) target_semaphore(%4 : memref<!tpu.dma_semaphore, #tpu.memory_space<semaphore_mem>>)
    %c1_i32 = arith.constant 1 : i32
    %c0_i32_3 = arith.constant 0 : i32
    %c0_i32_4 = arith.constant 0 : i32
    %5 = tpu.memref_slice %arg2[%arg0, %c0_i32_3, %c0_i32_4] : memref<2x8x256xf32, #tpu.memory_space<any>> -> memref<1x8x256xf32, #tpu.memory_space<any>>
    %6 = tpu.memref_squeeze %5 : memref<1x8x256xf32, #tpu.memory_space<any>> -> memref<8x256xf32, #tpu.memory_space<any>>
    %c0_i32_5 = arith.constant 0 : i32
    %c128_i32_6 = arith.constant 128 : i32
    %7 = tpu.memref_slice %arg13[%c0_i32_5, %c128_i32_6] : memref<8x401xf32, #tpu.memory_space<vmem>> -> memref<8x256xf32, #tpu.memory_space<vmem>>
    %8 = tpu.memref_slice %arg14[%c1_i32] : memref<2x!tpu.dma_semaphore, #tpu.memory_space<semaphore_mem>> -> memref<1x!tpu.dma_semaphore, #tpu.memory_space<semaphore_mem>>
    %9 = tpu.memref_squeeze %8 : memref<1x!tpu.dma_semaphore, #tpu.memory_space<semaphore_mem>> -> memref<!tpu.dma_semaphore, #tpu.memory_space<semaphore_mem>>
    tpu.enqueue_dma source(%6 : memref<8x256xf32, #tpu.memory_space<any>>) target(%7 : memref<8x256xf32, #tpu.memory_space<vmem>>) target_semaphore(%9 : memref<!tpu.dma_semaphore, #tpu.memory_space<semaphore_mem>>)
    %cst = arith.constant 0.000000e+00 : f32
    %10 = vector.broadcast %cst : f32 to vector<4x128xf32>
    %c0 = arith.constant 0 : index
    %c0_7 = arith.constant 0 : index
    %11 = vector.load %arg12[%c0, %c0_7] : memref<4x401xf32, #tpu.memory_space<vmem>>, vector<4x128xf32>
    tpu.vector_store %arg12[%c0, %c0_7], %10 {strides = array<i32>} : memref<4x401xf32, #tpu.memory_space<vmem>>, vector<4x128xf32>,
    %cst_8 = arith.constant 0.000000e+00 : f32
    %12 = vector.broadcast %cst_8 : f32 to vector<8x128xf32>
    %c0_9 = arith.constant 0 : index
    %c0_10 = arith.constant 0 : index
    %13 = vector.load %arg13[%c0_9, %c0_10] : memref<8x401xf32, #tpu.memory_space<vmem>>, vector<8x128xf32>
    tpu.vector_store %arg13[%c0_9, %c0_10], %12 {strides = array<i32>} : memref<8x401xf32, #tpu.memory_space<vmem>>, vector<8x128xf32>,
    %cst_11 = arith.constant 0.000000e+00 : f32
    %14 = vector.broadcast %cst_11 : f32 to vector<4x17xf32>
    %c0_12 = arith.constant 0 : index
    %c384 = arith.constant 384 : index
    %15 = vector.load %arg12[%c0_12, %c384] : memref<4x401xf32, #tpu.memory_space<vmem>>, vector<4x17xf32>
    tpu.vector_store %arg12[%c0_12, %c384], %14 {strides = array<i32>} : memref<4x401xf32, #tpu.memory_space<vmem>>, vector<4x17xf32>,
    %cst_13 = arith.constant 0.000000e+00 : f32
    %16 = vector.broadcast %cst_13 : f32 to vector<8x17xf32>
    %c0_14 = arith.constant 0 : index
    %c384_15 = arith.constant 384 : index
    %17 = vector.load %arg13[%c0_14, %c384_15] : memref<8x401xf32, #tpu.memory_space<vmem>>, vector<8x17xf32>
    tpu.vector_store %arg13[%c0_14, %c384_15], %16 {strides = array<i32>} : memref<8x401xf32, #tpu.memory_space<vmem>>, vector<8x17xf32>,
    %18 = tpu.iota {dimensions = array<i32: 1>} : vector<1x256xi32>
    %c16_i32 = arith.constant 16 : i32
    %c0_i32_16 = arith.constant 0 : i32
    %19 = arith.cmpi eq, %c16_i32, %c0_i32_16 : i32
    %c1_i32_17 = arith.constant 1 : i32
    %20 = arith.select %19, %c1_i32_17, %c16_i32 : i32
    %21 = vector.broadcast %20 : i32 to vector<1x256xi32>
    %22 = arith.remsi %18, %21 : vector<1x256xi32>
    %c0_i32_18 = arith.constant 0 : i32
    %23 = vector.broadcast %c0_i32_18 : i32 to vector<1x256xi32>
    %24 = arith.cmpi ne, %22, %23 : vector<1x256xi32>
    %c0_i32_19 = arith.constant 0 : i32
    %25 = vector.broadcast %c0_i32_19 : i32 to vector<1x256xi32>
    %26 = arith.cmpi slt, %22, %25 : vector<1x256xi32>
    %c0_i32_20 = arith.constant 0 : i32
    %27 = arith.cmpi slt, %20, %c0_i32_20 : i32
    %28 = vector.broadcast %27 : i1 to vector<1x256xi1>
    %29 = vector.broadcast %28 : vector<1x256xi1> to vector<1x256xi1>
    %30 = arith.xori %26, %29 : vector<1x256xi1>
    %31 = arith.andi %30, %24 : vector<1x256xi1>
    %32 = vector.broadcast %20 : i32 to vector<1x256xi32>
    %33 = arith.addi %22, %32 : vector<1x256xi32>
    %34 = arith.select %31, %33, %22 : vector<1x256xi1>, vector<1x256xi32>
    %c-1_i32 = arith.constant -1 : i32
    %35 = vector.broadcast %c-1_i32 : i32 to vector<1x256xi32>
    %36 = arith.addi %34, %35 : vector<1x256xi32>
    %c0_i32_21 = arith.constant 0 : i32
    %37 = vector.broadcast %c0_i32_21 : i32 to vector<1x256xi32>
    %38 = arith.cmpi sge, %36, %37 : vector<1x256xi32>
    %c-1_i32_22 = arith.constant -1 : i32
    %39 = vector.broadcast %c-1_i32_22 : i32 to vector<1x256xi32>
    %40 = arith.addi %34, %39 : vector<1x256xi32>
    %c16_i32_23 = arith.constant 16 : i32
    %41 = vector.broadcast %c16_i32_23 : i32 to vector<1x256xi32>
    %42 = arith.cmpi slt, %40, %41 : vector<1x256xi32>
    %43 = arith.andi %38, %42 : vector<1x256xi1>
    %c1_i32_24 = arith.constant 1 : i32
    %44 = vector.broadcast %c1_i32_24 : i32 to vector<1x256xi32>
    %45 = arith.addi %34, %44 : vector<1x256xi32>
    %c0_i32_25 = arith.constant 0 : i32
    %46 = vector.broadcast %c0_i32_25 : i32 to vector<1x256xi32>
    %47 = arith.cmpi sge, %45, %46 : vector<1x256xi32>
    %c1_i32_26 = arith.constant 1 : i32
    %48 = vector.broadcast %c1_i32_26 : i32 to vector<1x256xi32>
    %49 = arith.addi %34, %48 : vector<1x256xi32>
    %c16_i32_27 = arith.constant 16 : i32
    %50 = vector.broadcast %c16_i32_27 : i32 to vector<1x256xi32>
    %51 = arith.cmpi slt, %49, %50 : vector<1x256xi32>
    %52 = arith.andi %47, %51 : vector<1x256xi1>
    %c0_i32_28 = arith.constant 0 : i32
    %c0_i32_29 = arith.constant 0 : i32
    %c0_i32_30 = arith.constant 0 : i32
    %53 = tpu.memref_slice %arg1[%arg0, %c0_i32_29, %c0_i32_30] : memref<2x4x256xf32, #tpu.memory_space<any>> -> memref<1x4x256xf32, #tpu.memory_space<any>>
    %54 = tpu.memref_squeeze %53 : memref<1x4x256xf32, #tpu.memory_space<any>> -> memref<4x256xf32, #tpu.memory_space<any>>
    %c0_i32_31 = arith.constant 0 : i32
    %c128_i32_32 = arith.constant 128 : i32
    %55 = tpu.memref_slice %arg12[%c0_i32_31, %c128_i32_32] : memref<4x401xf32, #tpu.memory_space<vmem>> -> memref<4x256xf32, #tpu.memory_space<vmem>>
    %56 = tpu.memref_slice %arg14[%c0_i32_28] : memref<2x!tpu.dma_semaphore, #tpu.memory_space<semaphore_mem>> -> memref<1x!tpu.dma_semaphore, #tpu.memory_space<semaphore_mem>>
    %57 = tpu.memref_squeeze %56 : memref<1x!tpu.dma_semaphore, #tpu.memory_space<semaphore_mem>> -> memref<!tpu.dma_semaphore, #tpu.memory_space<semaphore_mem>>
    tpu.wait_dma2 semaphore(%57 : memref<!tpu.dma_semaphore, #tpu.memory_space<semaphore_mem>>) src(%54 : memref<4x256xf32, #tpu.memory_space<any>>) dst(%55 : memref<4x256xf32, #tpu.memory_space<vmem>>)
    %c1_i32_33 = arith.constant 1 : i32
    %c0_i32_34 = arith.constant 0 : i32
    %c0_i32_35 = arith.constant 0 : i32
    %58 = tpu.memref_slice %arg2[%arg0, %c0_i32_34, %c0_i32_35] : memref<2x8x256xf32, #tpu.memory_space<any>> -> memref<1x8x256xf32, #tpu.memory_space<any>>
    %59 = tpu.memref_squeeze %58 : memref<1x8x256xf32, #tpu.memory_space<any>> -> memref<8x256xf32, #tpu.memory_space<any>>
    %c0_i32_36 = arith.constant 0 : i32
    %c128_i32_37 = arith.constant 128 : i32
    %60 = tpu.memref_slice %arg13[%c0_i32_36, %c128_i32_37] : memref<8x401xf32, #tpu.memory_space<vmem>> -> memref<8x256xf32, #tpu.memory_space<vmem>>
    %61 = tpu.memref_slice %arg14[%c1_i32_33] : memref<2x!tpu.dma_semaphore, #tpu.memory_space<semaphore_mem>> -> memref<1x!tpu.dma_semaphore, #tpu.memory_space<semaphore_mem>>
    %62 = tpu.memref_squeeze %61 : memref<1x!tpu.dma_semaphore, #tpu.memory_space<semaphore_mem>> -> memref<!tpu.dma_semaphore, #tpu.memory_space<semaphore_mem>>
    tpu.wait_dma2 semaphore(%62 : memref<!tpu.dma_semaphore, #tpu.memory_space<semaphore_mem>>) src(%59 : memref<8x256xf32, #tpu.memory_space<any>>) dst(%60 : memref<8x256xf32, #tpu.memory_space<vmem>>)
    %cst_38 = arith.constant 0.000000e+00 : f32
    %63 = vector.broadcast %cst_38 : f32 to vector<32x256xf32>
    %c0_39 = arith.constant 0 : index
    %c111 = arith.constant 111 : index
    %64 = vector.load %arg12[%c0_39, %c111] : memref<4x401xf32, #tpu.memory_space<vmem>>, vector<4x256xf32>
    %cst_40 = arith.constant 0.000000e+00 : f32
    %65 = vector.shape_cast %43 : vector<1x256xi1> to vector<1x256xi1>
    %66 = vector.broadcast %65 : vector<1x256xi1> to vector<4x256xi1>
    %67 = vector.broadcast %cst_40 : f32 to vector<4x256xf32>
    %68 = arith.select %66, %64, %67 : vector<4x256xi1>, vector<4x256xf32>
    %c0_41 = arith.constant 0 : index
    %c0_42 = arith.constant 0 : index
    %c0_43 = arith.constant 0 : index
    %c0_44 = arith.constant 0 : index
    %69 = vector.load %arg4[%c0_41, %c0_42, %c0_43, %c0_44] : memref<3x3x32x4xf32, #tpu.memory_space<vmem>>, vector<1x1x32x4xf32>
    %70 = vector.shape_cast %69 : vector<1x1x32x4xf32> to vector<32x4xf32>
    %cst_45 = arith.constant dense<0.000000e+00> : vector<32x256xf32>
    %71 = tpu.matmul %70, %68, %cst_45 {dimension_numbers = #tpu.dot_dimension_numbers<[1], [0], [0], [1], [0, 0, 1, 1], [], []>} : vector<32x4xf32>, vector<4x256xf32>, vector<32x256xf32> -> vector<32x256xf32>
    %72 = arith.addf %63, %71 : vector<32x256xf32>
    %c0_46 = arith.constant 0 : index
    %c111_47 = arith.constant 111 : index
    %73 = vector.load %arg13[%c0_46, %c111_47] : memref<8x401xf32, #tpu.memory_space<vmem>>, vector<8x256xf32>
    %cst_48 = arith.constant 0.000000e+00 : f32
    %74 = vector.shape_cast %43 : vector<1x256xi1> to vector<1x256xi1>
    %75 = vector.broadcast %74 : vector<1x256xi1> to vector<8x256xi1>
    %76 = vector.broadcast %cst_48 : f32 to vector<8x256xf32>
    %77 = arith.select %75, %73, %76 : vector<8x256xi1>, vector<8x256xf32>
    %c0_49 = arith.constant 0 : index
    %c0_50 = arith.constant 0 : index
    %c0_51 = arith.constant 0 : index
    %c0_52 = arith.constant 0 : index
    %78 = vector.load %arg5[%c0_49, %c0_50, %c0_51, %c0_52] : memref<3x3x32x8xf32, #tpu.memory_space<vmem>>, vector<1x1x32x8xf32>
    %79 = vector.shape_cast %78 : vector<1x1x32x8xf32> to vector<32x8xf32>
    %cst_53 = arith.constant dense<0.000000e+00> : vector<32x256xf32>
    %80 = tpu.matmul %79, %77, %cst_53 {dimension_numbers = #tpu.dot_dimension_numbers<[1], [0], [0], [1], [0, 0, 1, 1], [], []>} : vector<32x8xf32>, vector<8x256xf32>, vector<32x256xf32> -> vector<32x256xf32>
    %81 = arith.addf %72, %80 : vector<32x256xf32>
    %c0_54 = arith.constant 0 : index
    %c112 = arith.constant 112 : index
    %82 = vector.load %arg12[%c0_54, %c112] : memref<4x401xf32, #tpu.memory_space<vmem>>, vector<4x256xf32>
    %c0_55 = arith.constant 0 : index
    %c1 = arith.constant 1 : index
    %c0_56 = arith.constant 0 : index
    %c0_57 = arith.constant 0 : index
    %83 = vector.load %arg4[%c0_55, %c1, %c0_56, %c0_57] : memref<3x3x32x4xf32, #tpu.memory_space<vmem>>, vector<1x1x32x4xf32>
    %84 = vector.shape_cast %83 : vector<1x1x32x4xf32> to vector<32x4xf32>
    %cst_58 = arith.constant dense<0.000000e+00> : vector<32x256xf32>
    %85 = tpu.matmul %84, %82, %cst_58 {dimension_numbers = #tpu.dot_dimension_numbers<[1], [0], [0], [1], [0, 0, 1, 1], [], []>} : vector<32x4xf32>, vector<4x256xf32>, vector<32x256xf32> -> vector<32x256xf32>
    %86 = arith.addf %81, %85 : vector<32x256xf32>
    %c0_59 = arith.constant 0 : index
    %c112_60 = arith.constant 112 : index
    %87 = vector.load %arg13[%c0_59, %c112_60] : memref<8x401xf32, #tpu.memory_space<vmem>>, vector<8x256xf32>
    %c0_61 = arith.constant 0 : index
    %c1_62 = arith.constant 1 : index
    %c0_63 = arith.constant 0 : index
    %c0_64 = arith.constant 0 : index
    %88 = vector.load %arg5[%c0_61, %c1_62, %c0_63, %c0_64] : memref<3x3x32x8xf32, #tpu.memory_space<vmem>>, vector<1x1x32x8xf32>
    %89 = vector.shape_cast %88 : vector<1x1x32x8xf32> to vector<32x8xf32>
    %cst_65 = arith.constant dense<0.000000e+00> : vector<32x256xf32>
    %90 = tpu.matmul %89, %87, %cst_65 {dimension_numbers = #tpu.dot_dimension_numbers<[1], [0], [0], [1], [0, 0, 1, 1], [], []>} : vector<32x8xf32>, vector<8x256xf32>, vector<32x256xf32> -> vector<32x256xf32>
    %91 = arith.addf %86, %90 : vector<32x256xf32>
    %c0_66 = arith.constant 0 : index
    %c113 = arith.constant 113 : index
    %92 = vector.load %arg12[%c0_66, %c113] : memref<4x401xf32, #tpu.memory_space<vmem>>, vector<4x256xf32>
    %cst_67 = arith.constant 0.000000e+00 : f32
    %93 = vector.shape_cast %52 : vector<1x256xi1> to vector<1x256xi1>
    %94 = vector.broadcast %93 : vector<1x256xi1> to vector<4x256xi1>
    %95 = vector.broadcast %cst_67 : f32 to vector<4x256xf32>
    %96 = arith.select %94, %92, %95 : vector<4x256xi1>, vector<4x256xf32>
    %c0_68 = arith.constant 0 : index
    %c2 = arith.constant 2 : index
    %c0_69 = arith.constant 0 : index
    %c0_70 = arith.constant 0 : index
    %97 = vector.load %arg4[%c0_68, %c2, %c0_69, %c0_70] : memref<3x3x32x4xf32, #tpu.memory_space<vmem>>, vector<1x1x32x4xf32>
    %98 = vector.shape_cast %97 : vector<1x1x32x4xf32> to vector<32x4xf32>
    %cst_71 = arith.constant dense<0.000000e+00> : vector<32x256xf32>
    %99 = tpu.matmul %98, %96, %cst_71 {dimension_numbers = #tpu.dot_dimension_numbers<[1], [0], [0], [1], [0, 0, 1, 1], [], []>} : vector<32x4xf32>, vector<4x256xf32>, vector<32x256xf32> -> vector<32x256xf32>
    %100 = arith.addf %91, %99 : vector<32x256xf32>
    %c0_72 = arith.constant 0 : index
    %c113_73 = arith.constant 113 : index
    %101 = vector.load %arg13[%c0_72, %c113_73] : memref<8x401xf32, #tpu.memory_space<vmem>>, vector<8x256xf32>
    %cst_74 = arith.constant 0.000000e+00 : f32
    %102 = vector.shape_cast %52 : vector<1x256xi1> to vector<1x256xi1>
    %103 = vector.broadcast %102 : vector<1x256xi1> to vector<8x256xi1>
    %104 = vector.broadcast %cst_74 : f32 to vector<8x256xf32>
    %105 = arith.select %103, %101, %104 : vector<8x256xi1>, vector<8x256xf32>
    %c0_75 = arith.constant 0 : index
    %c2_76 = arith.constant 2 : index
    %c0_77 = arith.constant 0 : index
    %c0_78 = arith.constant 0 : index
    %106 = vector.load %arg5[%c0_75, %c2_76, %c0_77, %c0_78] : memref<3x3x32x8xf32, #tpu.memory_space<vmem>>, vector<1x1x32x8xf32>
    %107 = vector.shape_cast %106 : vector<1x1x32x8xf32> to vector<32x8xf32>
    %cst_79 = arith.constant dense<0.000000e+00> : vector<32x256xf32>
    %108 = tpu.matmul %107, %105, %cst_79 {dimension_numbers = #tpu.dot_dimension_numbers<[1], [0], [0], [1], [0, 0, 1, 1], [], []>} : vector<32x8xf32>, vector<8x256xf32>, vector<32x256xf32> -> vector<32x256xf32>
    %109 = arith.addf %100, %108 : vector<32x256xf32>
    %c0_80 = arith.constant 0 : index
    %c127 = arith.constant 127 : index
    %110 = vector.load %arg12[%c0_80, %c127] : memref<4x401xf32, #tpu.memory_space<vmem>>, vector<4x256xf32>
    %cst_81 = arith.constant 0.000000e+00 : f32
    %111 = vector.shape_cast %43 : vector<1x256xi1> to vector<1x256xi1>
    %112 = vector.broadcast %111 : vector<1x256xi1> to vector<4x256xi1>
    %113 = vector.broadcast %cst_81 : f32 to vector<4x256xf32>
    %114 = arith.select %112, %110, %113 : vector<4x256xi1>, vector<4x256xf32>
    %c1_82 = arith.constant 1 : index
    %c0_83 = arith.constant 0 : index
    %c0_84 = arith.constant 0 : index
    %c0_85 = arith.constant 0 : index
    %115 = vector.load %arg4[%c1_82, %c0_83, %c0_84, %c0_85] : memref<3x3x32x4xf32, #tpu.memory_space<vmem>>, vector<1x1x32x4xf32>
    %116 = vector.shape_cast %115 : vector<1x1x32x4xf32> to vector<32x4xf32>
    %cst_86 = arith.constant dense<0.000000e+00> : vector<32x256xf32>
    %117 = tpu.matmul %116, %114, %cst_86 {dimension_numbers = #tpu.dot_dimension_numbers<[1], [0], [0], [1], [0, 0, 1, 1], [], []>} : vector<32x4xf32>, vector<4x256xf32>, vector<32x256xf32> -> vector<32x256xf32>
    %118 = arith.addf %109, %117 : vector<32x256xf32>
    %c0_87 = arith.constant 0 : index
    %c127_88 = arith.constant 127 : index
    %119 = vector.load %arg13[%c0_87, %c127_88] : memref<8x401xf32, #tpu.memory_space<vmem>>, vector<8x256xf32>
    %cst_89 = arith.constant 0.000000e+00 : f32
    %120 = vector.shape_cast %43 : vector<1x256xi1> to vector<1x256xi1>
    %121 = vector.broadcast %120 : vector<1x256xi1> to vector<8x256xi1>
    %122 = vector.broadcast %cst_89 : f32 to vector<8x256xf32>
    %123 = arith.select %121, %119, %122 : vector<8x256xi1>, vector<8x256xf32>
    %c1_90 = arith.constant 1 : index
    %c0_91 = arith.constant 0 : index
    %c0_92 = arith.constant 0 : index
    %c0_93 = arith.constant 0 : index
    %124 = vector.load %arg5[%c1_90, %c0_91, %c0_92, %c0_93] : memref<3x3x32x8xf32, #tpu.memory_space<vmem>>, vector<1x1x32x8xf32>
    %125 = vector.shape_cast %124 : vector<1x1x32x8xf32> to vector<32x8xf32>
    %cst_94 = arith.constant dense<0.000000e+00> : vector<32x256xf32>
    %126 = tpu.matmul %125, %123, %cst_94 {dimension_numbers = #tpu.dot_dimension_numbers<[1], [0], [0], [1], [0, 0, 1, 1], [], []>} : vector<32x8xf32>, vector<8x256xf32>, vector<32x256xf32> -> vector<32x256xf32>
    %127 = arith.addf %118, %126 : vector<32x256xf32>
    %c0_95 = arith.constant 0 : index
    %c128 = arith.constant 128 : index
    %128 = vector.load %arg12[%c0_95, %c128] : memref<4x401xf32, #tpu.memory_space<vmem>>, vector<4x256xf32>
    %c1_96 = arith.constant 1 : index
    %c1_97 = arith.constant 1 : index
    %c0_98 = arith.constant 0 : index
    %c0_99 = arith.constant 0 : index
    %129 = vector.load %arg4[%c1_96, %c1_97, %c0_98, %c0_99] : memref<3x3x32x4xf32, #tpu.memory_space<vmem>>, vector<1x1x32x4xf32>
    %130 = vector.shape_cast %129 : vector<1x1x32x4xf32> to vector<32x4xf32>
    %cst_100 = arith.constant dense<0.000000e+00> : vector<32x256xf32>
    %131 = tpu.matmul %130, %128, %cst_100 {dimension_numbers = #tpu.dot_dimension_numbers<[1], [0], [0], [1], [0, 0, 1, 1], [], []>} : vector<32x4xf32>, vector<4x256xf32>, vector<32x256xf32> -> vector<32x256xf32>
    %132 = arith.addf %127, %131 : vector<32x256xf32>
    %c0_101 = arith.constant 0 : index
    %c128_102 = arith.constant 128 : index
    %133 = vector.load %arg13[%c0_101, %c128_102] : memref<8x401xf32, #tpu.memory_space<vmem>>, vector<8x256xf32>
    %c1_103 = arith.constant 1 : index
    %c1_104 = arith.constant 1 : index
    %c0_105 = arith.constant 0 : index
    %c0_106 = arith.constant 0 : index
    %134 = vector.load %arg5[%c1_103, %c1_104, %c0_105, %c0_106] : memref<3x3x32x8xf32, #tpu.memory_space<vmem>>, vector<1x1x32x8xf32>
    %135 = vector.shape_cast %134 : vector<1x1x32x8xf32> to vector<32x8xf32>
    %cst_107 = arith.constant dense<0.000000e+00> : vector<32x256xf32>
    %136 = tpu.matmul %135, %133, %cst_107 {dimension_numbers = #tpu.dot_dimension_numbers<[1], [0], [0], [1], [0, 0, 1, 1], [], []>} : vector<32x8xf32>, vector<8x256xf32>, vector<32x256xf32> -> vector<32x256xf32>
    %137 = arith.addf %132, %136 : vector<32x256xf32>
    %c0_108 = arith.constant 0 : index
    %c129 = arith.constant 129 : index
    %138 = vector.load %arg12[%c0_108, %c129] : memref<4x401xf32, #tpu.memory_space<vmem>>, vector<4x256xf32>
    %cst_109 = arith.constant 0.000000e+00 : f32
    %139 = vector.shape_cast %52 : vector<1x256xi1> to vector<1x256xi1>
    %140 = vector.broadcast %139 : vector<1x256xi1> to vector<4x256xi1>
    %141 = vector.broadcast %cst_109 : f32 to vector<4x256xf32>
    %142 = arith.select %140, %138, %141 : vector<4x256xi1>, vector<4x256xf32>
    %c1_110 = arith.constant 1 : index
    %c2_111 = arith.constant 2 : index
    %c0_112 = arith.constant 0 : index
    %c0_113 = arith.constant 0 : index
    %143 = vector.load %arg4[%c1_110, %c2_111, %c0_112, %c0_113] : memref<3x3x32x4xf32, #tpu.memory_space<vmem>>, vector<1x1x32x4xf32>
    %144 = vector.shape_cast %143 : vector<1x1x32x4xf32> to vector<32x4xf32>
    %cst_114 = arith.constant dense<0.000000e+00> : vector<32x256xf32>
    %145 = tpu.matmul %144, %142, %cst_114 {dimension_numbers = #tpu.dot_dimension_numbers<[1], [0], [0], [1], [0, 0, 1, 1], [], []>} : vector<32x4xf32>, vector<4x256xf32>, vector<32x256xf32> -> vector<32x256xf32>
    %146 = arith.addf %137, %145 : vector<32x256xf32>
    %c0_115 = arith.constant 0 : index
    %c129_116 = arith.constant 129 : index
    %147 = vector.load %arg13[%c0_115, %c129_116] : memref<8x401xf32, #tpu.memory_space<vmem>>, vector<8x256xf32>
    %cst_117 = arith.constant 0.000000e+00 : f32
    %148 = vector.shape_cast %52 : vector<1x256xi1> to vector<1x256xi1>
    %149 = vector.broadcast %148 : vector<1x256xi1> to vector<8x256xi1>
    %150 = vector.broadcast %cst_117 : f32 to vector<8x256xf32>
    %151 = arith.select %149, %147, %150 : vector<8x256xi1>, vector<8x256xf32>
    %c1_118 = arith.constant 1 : index
    %c2_119 = arith.constant 2 : index
    %c0_120 = arith.constant 0 : index
    %c0_121 = arith.constant 0 : index
    %152 = vector.load %arg5[%c1_118, %c2_119, %c0_120, %c0_121] : memref<3x3x32x8xf32, #tpu.memory_space<vmem>>, vector<1x1x32x8xf32>
    %153 = vector.shape_cast %152 : vector<1x1x32x8xf32> to vector<32x8xf32>
    %cst_122 = arith.constant dense<0.000000e+00> : vector<32x256xf32>
    %154 = tpu.matmul %153, %151, %cst_122 {dimension_numbers = #tpu.dot_dimension_numbers<[1], [0], [0], [1], [0, 0, 1, 1], [], []>} : vector<32x8xf32>, vector<8x256xf32>, vector<32x256xf32> -> vector<32x256xf32>
    %155 = arith.addf %146, %154 : vector<32x256xf32>
    %c0_123 = arith.constant 0 : index
    %c143 = arith.constant 143 : index
    %156 = vector.load %arg12[%c0_123, %c143] : memref<4x401xf32, #tpu.memory_space<vmem>>, vector<4x256xf32>
    %cst_124 = arith.constant 0.000000e+00 : f32
    %157 = vector.shape_cast %43 : vector<1x256xi1> to vector<1x256xi1>
    %158 = vector.broadcast %157 : vector<1x256xi1> to vector<4x256xi1>
    %159 = vector.broadcast %cst_124 : f32 to vector<4x256xf32>
    %160 = arith.select %158, %156, %159 : vector<4x256xi1>, vector<4x256xf32>
    %c2_125 = arith.constant 2 : index
    %c0_126 = arith.constant 0 : index
    %c0_127 = arith.constant 0 : index
    %c0_128 = arith.constant 0 : index
    %161 = vector.load %arg4[%c2_125, %c0_126, %c0_127, %c0_128] : memref<3x3x32x4xf32, #tpu.memory_space<vmem>>, vector<1x1x32x4xf32>
    %162 = vector.shape_cast %161 : vector<1x1x32x4xf32> to vector<32x4xf32>
    %cst_129 = arith.constant dense<0.000000e+00> : vector<32x256xf32>
    %163 = tpu.matmul %162, %160, %cst_129 {dimension_numbers = #tpu.dot_dimension_numbers<[1], [0], [0], [1], [0, 0, 1, 1], [], []>} : vector<32x4xf32>, vector<4x256xf32>, vector<32x256xf32> -> vector<32x256xf32>
    %164 = arith.addf %155, %163 : vector<32x256xf32>
    %c0_130 = arith.constant 0 : index
    %c143_131 = arith.constant 143 : index
    %165 = vector.load %arg13[%c0_130, %c143_131] : memref<8x401xf32, #tpu.memory_space<vmem>>, vector<8x256xf32>
    %cst_132 = arith.constant 0.000000e+00 : f32
    %166 = vector.shape_cast %43 : vector<1x256xi1> to vector<1x256xi1>
    %167 = vector.broadcast %166 : vector<1x256xi1> to vector<8x256xi1>
    %168 = vector.broadcast %cst_132 : f32 to vector<8x256xf32>
    %169 = arith.select %167, %165, %168 : vector<8x256xi1>, vector<8x256xf32>
    %c2_133 = arith.constant 2 : index
    %c0_134 = arith.constant 0 : index
    %c0_135 = arith.constant 0 : index
    %c0_136 = arith.constant 0 : index
    %170 = vector.load %arg5[%c2_133, %c0_134, %c0_135, %c0_136] : memref<3x3x32x8xf32, #tpu.memory_space<vmem>>, vector<1x1x32x8xf32>
    %171 = vector.shape_cast %170 : vector<1x1x32x8xf32> to vector<32x8xf32>
    %cst_137 = arith.constant dense<0.000000e+00> : vector<32x256xf32>
    %172 = tpu.matmul %171, %169, %cst_137 {dimension_numbers = #tpu.dot_dimension_numbers<[1], [0], [0], [1], [0, 0, 1, 1], [], []>} : vector<32x8xf32>, vector<8x256xf32>, vector<32x256xf32> -> vector<32x256xf32>
    %173 = arith.addf %164, %172 : vector<32x256xf32>
    %c0_138 = arith.constant 0 : index
    %c144 = arith.constant 144 : index
    %174 = vector.load %arg12[%c0_138, %c144] : memref<4x401xf32, #tpu.memory_space<vmem>>, vector<4x256xf32>
    %c2_139 = arith.constant 2 : index
    %c1_140 = arith.constant 1 : index
    %c0_141 = arith.constant 0 : index
    %c0_142 = arith.constant 0 : index
    %175 = vector.load %arg4[%c2_139, %c1_140, %c0_141, %c0_142] : memref<3x3x32x4xf32, #tpu.memory_space<vmem>>, vector<1x1x32x4xf32>
    %176 = vector.shape_cast %175 : vector<1x1x32x4xf32> to vector<32x4xf32>
    %cst_143 = arith.constant dense<0.000000e+00> : vector<32x256xf32>
    %177 = tpu.matmul %176, %174, %cst_143 {dimension_numbers = #tpu.dot_dimension_numbers<[1], [0], [0], [1], [0, 0, 1, 1], [], []>} : vector<32x4xf32>, vector<4x256xf32>, vector<32x256xf32> -> vector<32x256xf32>
    %178 = arith.addf %173, %177 : vector<32x256xf32>
    %c0_144 = arith.constant 0 : index
    %c144_145 = arith.constant 144 : index
    %179 = vector.load %arg13[%c0_144, %c144_145] : memref<8x401xf32, #tpu.memory_space<vmem>>, vector<8x256xf32>
    %c2_146 = arith.constant 2 : index
    %c1_147 = arith.constant 1 : index
    %c0_148 = arith.constant 0 : index
    %c0_149 = arith.constant 0 : index
    %180 = vector.load %arg5[%c2_146, %c1_147, %c0_148, %c0_149] : memref<3x3x32x8xf32, #tpu.memory_space<vmem>>, vector<1x1x32x8xf32>
    %181 = vector.shape_cast %180 : vector<1x1x32x8xf32> to vector<32x8xf32>
    %cst_150 = arith.constant dense<0.000000e+00> : vector<32x256xf32>
    %182 = tpu.matmul %181, %179, %cst_150 {dimension_numbers = #tpu.dot_dimension_numbers<[1], [0], [0], [1], [0, 0, 1, 1], [], []>} : vector<32x8xf32>, vector<8x256xf32>, vector<32x256xf32> -> vector<32x256xf32>
    %183 = arith.addf %178, %182 : vector<32x256xf32>
    %c0_151 = arith.constant 0 : index
    %c145 = arith.constant 145 : index
    %184 = vector.load %arg12[%c0_151, %c145] : memref<4x401xf32, #tpu.memory_space<vmem>>, vector<4x256xf32>
    %cst_152 = arith.constant 0.000000e+00 : f32
    %185 = vector.shape_cast %52 : vector<1x256xi1> to vector<1x256xi1>
    %186 = vector.broadcast %185 : vector<1x256xi1> to vector<4x256xi1>
    %187 = vector.broadcast %cst_152 : f32 to vector<4x256xf32>
    %188 = arith.select %186, %184, %187 : vector<4x256xi1>, vector<4x256xf32>
    %c2_153 = arith.constant 2 : index
    %c2_154 = arith.constant 2 : index
    %c0_155 = arith.constant 0 : index
    %c0_156 = arith.constant 0 : index
    %189 = vector.load %arg4[%c2_153, %c2_154, %c0_155, %c0_156] : memref<3x3x32x4xf32, #tpu.memory_space<vmem>>, vector<1x1x32x4xf32>
    %190 = vector.shape_cast %189 : vector<1x1x32x4xf32> to vector<32x4xf32>
    %cst_157 = arith.constant dense<0.000000e+00> : vector<32x256xf32>
    %191 = tpu.matmul %190, %188, %cst_157 {dimension_numbers = #tpu.dot_dimension_numbers<[1], [0], [0], [1], [0, 0, 1, 1], [], []>} : vector<32x4xf32>, vector<4x256xf32>, vector<32x256xf32> -> vector<32x256xf32>
    %192 = arith.addf %183, %191 : vector<32x256xf32>
    %c0_158 = arith.constant 0 : index
    %c145_159 = arith.constant 145 : index
    %193 = vector.load %arg13[%c0_158, %c145_159] : memref<8x401xf32, #tpu.memory_space<vmem>>, vector<8x256xf32>
    %cst_160 = arith.constant 0.000000e+00 : f32
    %194 = vector.shape_cast %52 : vector<1x256xi1> to vector<1x256xi1>
    %195 = vector.broadcast %194 : vector<1x256xi1> to vector<8x256xi1>
    %196 = vector.broadcast %cst_160 : f32 to vector<8x256xf32>
    %197 = arith.select %195, %193, %196 : vector<8x256xi1>, vector<8x256xf32>
    %c2_161 = arith.constant 2 : index
    %c2_162 = arith.constant 2 : index
    %c0_163 = arith.constant 0 : index
    %c0_164 = arith.constant 0 : index
    %198 = vector.load %arg5[%c2_161, %c2_162, %c0_163, %c0_164] : memref<3x3x32x8xf32, #tpu.memory_space<vmem>>, vector<1x1x32x8xf32>
    %199 = vector.shape_cast %198 : vector<1x1x32x8xf32> to vector<32x8xf32>
    %cst_165 = arith.constant dense<0.000000e+00> : vector<32x256xf32>
    %200 = tpu.matmul %199, %197, %cst_165 {dimension_numbers = #tpu.dot_dimension_numbers<[1], [0], [0], [1], [0, 0, 1, 1], [], []>} : vector<32x8xf32>, vector<8x256xf32>, vector<32x256xf32> -> vector<32x256xf32>
    %201 = arith.addf %192, %200 : vector<32x256xf32>
    %c0_166 = arith.constant 0 : index
    %c0_167 = arith.constant 0 : index
    %202 = vector.load %arg6[%c0_166, %c0_167] : memref<32x1xf32, #tpu.memory_space<vmem>>, vector<32x1xf32>
    %203 = vector.broadcast %202 : vector<32x1xf32> to vector<32x256xf32>
    %204 = arith.addf %201, %203 : vector<32x256xf32>
    %c0_168 = arith.constant 0 : index
    %c0_169 = arith.constant 0 : index
    %c0_170 = arith.constant 0 : index
    %205 = vector.load %arg3[%c0_168, %c0_169, %c0_170] : memref<1x8x256xf32, #tpu.memory_space<vmem>>, vector<1x8x256xf32>
    %206 = vector.shape_cast %205 : vector<1x8x256xf32> to vector<8x256xf32>
    %c0_171 = arith.constant 0 : index
    %c0_172 = arith.constant 0 : index
    %207 = vector.load %arg7[%c0_171, %c0_172] : memref<8x256xf32, #tpu.memory_space<vmem>>, vector<8x256xf32>
    %c0_173 = arith.constant 0 : index
    %c0_174 = arith.constant 0 : index
    %208 = vector.load %arg8[%c0_173, %c0_174] : memref<8x256xf32, #tpu.memory_space<vmem>>, vector<8x256xf32>
    %c0_175 = arith.constant 0 : index
    %c0_176 = arith.constant 0 : index
    %209 = vector.load %arg9[%c0_175, %c0_176] : memref<8x256xf32, #tpu.memory_space<vmem>>, vector<8x256xf32>
    %210 = vector.extract_strided_slice %204 {offsets = [0, 0], sizes = [8, 256], strides = [1, 1]} : vector<32x256xf32> to vector<8x256xf32>
    %211 = vector.extract_strided_slice %204 {offsets = [8, 0], sizes = [8, 256], strides = [1, 1]} : vector<32x256xf32> to vector<8x256xf32>
    %212 = vector.extract_strided_slice %204 {offsets = [16, 0], sizes = [8, 256], strides = [1, 1]} : vector<32x256xf32> to vector<8x256xf32>
    %213 = vector.extract_strided_slice %204 {offsets = [24, 0], sizes = [8, 256], strides = [1, 1]} : vector<32x256xf32> to vector<8x256xf32>
    %214 = arith.mulf %207, %206 : vector<8x256xf32>
    %215 = arith.addf %210, %214 : vector<8x256xf32>
    %cst_177 = arith.constant 5.000000e-01 : f32
    %216 = vector.broadcast %cst_177 : f32 to vector<8x256xf32>
    %217 = arith.mulf %216, %215 : vector<8x256xf32>
    %218 = math.tanh %217 : vector<8x256xf32>
    %cst_178 = arith.constant 5.000000e-01 : f32
    %219 = vector.broadcast %cst_178 : f32 to vector<8x256xf32>
    %220 = arith.mulf %219, %218 : vector<8x256xf32>
    %cst_179 = arith.constant 5.000000e-01 : f32
    %221 = vector.broadcast %cst_179 : f32 to vector<8x256xf32>
    %222 = arith.addf %220, %221 : vector<8x256xf32>
    %223 = arith.mulf %208, %206 : vector<8x256xf32>
    %224 = arith.addf %211, %223 : vector<8x256xf32>
    %cst_180 = arith.constant 5.000000e-01 : f32
    %225 = vector.broadcast %cst_180 : f32 to vector<8x256xf32>
    %226 = arith.mulf %225, %224 : vector<8x256xf32>
    %227 = math.tanh %226 : vector<8x256xf32>
    %cst_181 = arith.constant 5.000000e-01 : f32
    %228 = vector.broadcast %cst_181 : f32 to vector<8x256xf32>
    %229 = arith.mulf %228, %227 : vector<8x256xf32>
    %cst_182 = arith.constant 5.000000e-01 : f32
    %230 = vector.broadcast %cst_182 : f32 to vector<8x256xf32>
    %231 = arith.addf %229, %230 : vector<8x256xf32>
    %232 = math.tanh %212 : vector<8x256xf32>
    %233 = arith.mulf %231, %206 : vector<8x256xf32>
    %234 = arith.mulf %222, %232 : vector<8x256xf32>
    %235 = arith.addf %233, %234 : vector<8x256xf32>
    %236 = arith.mulf %209, %235 : vector<8x256xf32>
    %237 = arith.addf %213, %236 : vector<8x256xf32>
    %cst_183 = arith.constant 5.000000e-01 : f32
    %238 = vector.broadcast %cst_183 : f32 to vector<8x256xf32>
    %239 = arith.mulf %238, %237 : vector<8x256xf32>
    %240 = math.tanh %239 : vector<8x256xf32>
    %cst_184 = arith.constant 5.000000e-01 : f32
    %241 = vector.broadcast %cst_184 : f32 to vector<8x256xf32>
    %242 = arith.mulf %241, %240 : vector<8x256xf32>
    %cst_185 = arith.constant 5.000000e-01 : f32
    %243 = vector.broadcast %cst_185 : f32 to vector<8x256xf32>
    %244 = arith.addf %242, %243 : vector<8x256xf32>
    %245 = math.tanh %235 : vector<8x256xf32>
    %246 = arith.mulf %244, %245 : vector<8x256xf32>
    %c0_186 = arith.constant 0 : index
    %c0_187 = arith.constant 0 : index
    %c0_188 = arith.constant 0 : index
    %247 = vector.load %arg10[%c0_186, %c0_187, %c0_188] : memref<1x8x256xf32, #tpu.memory_space<vmem>>, vector<1x8x256xf32>
    %248 = vector.shape_cast %247 : vector<1x8x256xf32> to vector<8x256xf32>
    %249 = vector.shape_cast %246 : vector<8x256xf32> to vector<1x8x256xf32>
    tpu.vector_store %arg10[%c0_186, %c0_187, %c0_188], %249 {strides = array<i32>} : memref<1x8x256xf32, #tpu.memory_space<vmem>>, vector<1x8x256xf32>,
    %c0_189 = arith.constant 0 : index
    %c0_190 = arith.constant 0 : index
    %c0_191 = arith.constant 0 : index
    %250 = vector.load %arg11[%c0_189, %c0_190, %c0_191] : memref<1x8x256xf32, #tpu.memory_space<vmem>>, vector<1x8x256xf32>
    %251 = vector.shape_cast %250 : vector<1x8x256xf32> to vector<8x256xf32>
    %252 = vector.shape_cast %235 : vector<8x256xf32> to vector<1x8x256xf32>
    tpu.vector_store %arg11[%c0_189, %c0_190, %c0_191], %252 {strides = array<i32>} : memref<1x8x256xf32, #tpu.memory_space<vmem>>, vector<1x8x256xf32>,
    return
  }
  func.func @transform_2(%arg0: i32) -> (i32, i32, i32) {
    %c0_i32 = arith.constant 0 : i32
    %c0_i32_0 = arith.constant 0 : i32
    %c0_i32_1 = arith.constant 0 : i32
    return %arg0, %c0_i32, %c0_i32_0 : i32, i32, i32
  }
  func.func @transform_3(%arg0: i32) -> (i32, i32, i32, i32) {
    %c0_i32 = arith.constant 0 : i32
    %c0_i32_0 = arith.constant 0 : i32
    %c0_i32_1 = arith.constant 0 : i32
    %c0_i32_2 = arith.constant 0 : i32
    %c0_i32_3 = arith.constant 0 : i32
    return %c0_i32, %c0_i32_0, %c0_i32_1, %c0_i32_2 : i32, i32, i32, i32
  }
  func.func @transform_4(%arg0: i32) -> (i32, i32, i32, i32) {
    %c0_i32 = arith.constant 0 : i32
    %c0_i32_0 = arith.constant 0 : i32
    %c0_i32_1 = arith.constant 0 : i32
    %c0_i32_2 = arith.constant 0 : i32
    %c0_i32_3 = arith.constant 0 : i32
    return %c0_i32, %c0_i32_0, %c0_i32_1, %c0_i32_2 : i32, i32, i32, i32
  }
  func.func @transform_5(%arg0: i32) -> (i32, i32) {
    %c0_i32 = arith.constant 0 : i32
    %c0_i32_0 = arith.constant 0 : i32
    %c0_i32_1 = arith.constant 0 : i32
    return %c0_i32, %c0_i32_0 : i32, i32
  }
  func.func @transform_6(%arg0: i32) -> (i32, i32) {
    %c0_i32 = arith.constant 0 : i32
    %c0_i32_0 = arith.constant 0 : i32
    %c0_i32_1 = arith.constant 0 : i32
    return %c0_i32, %c0_i32_0 : i32, i32
  }
  func.func @transform_7(%arg0: i32) -> (i32, i32) {
    %c0_i32 = arith.constant 0 : i32
    %c0_i32_0 = arith.constant 0 : i32
    %c0_i32_1 = arith.constant 0 : i32
    return %c0_i32, %c0_i32_0 : i32, i32
  }
  func.func @transform_8(%arg0: i32) -> (i32, i32) {
    %c0_i32 = arith.constant 0 : i32
    %c0_i32_0 = arith.constant 0 : i32
    %c0_i32_1 = arith.constant 0 : i32
    return %c0_i32, %c0_i32_0 : i32, i32
  }
  func.func @transform_9(%arg0: i32) -> (i32, i32, i32) {
    %c0_i32 = arith.constant 0 : i32
    %c0_i32_0 = arith.constant 0 : i32
    %c0_i32_1 = arith.constant 0 : i32
    return %arg0, %c0_i32, %c0_i32_0 : i32, i32, i32
  }
  func.func @transform_10(%arg0: i32) -> (i32, i32, i32) {
    %c0_i32 = arith.constant 0 : i32
    %c0_i32_0 = arith.constant 0 : i32
    %c0_i32_1 = arith.constant 0 : i32
    return %arg0, %c0_i32, %c0_i32_0 : i32, i32, i32
  }
}

</mosaic_0001>

<llo_original>
// kernel: convlstm_cell_pallas.1
$region0: #{convlstm_cell_pallas.1}
  #allocation0 [shape = 'u32[]', space=smem, size = 0x4, offset = 0x4, fixed_abs, tag = 'smem constant byte address 0x4 - core index']
  #allocation1 [shape = 'u32[144,128]{1,0:T(1,128)}', space=vmem, size = 0x12000, scoped, tag = 'internal scratch']
  #allocation2 [shape = 'f32[4,401]{1,0:T(4,128)}', space=vmem, size = 0x2000, scoped, tag = 'scratch operand']
  #allocation3 [shape = 'f32[8,401]{1,0:T(8,128)}', space=vmem, size = 0x4000, scoped, tag = 'scratch operand']
  #allocation4 [shape = 's32[2]{0}', space=sflag, size = 0x8, scoped, tag = 'scratch operand']
  #allocation5 [shape = 's32[]', space=sflag, size = 0x4, offset = 0, fixed_abs, tag = 'sflag constant byte address 0x0 - dummy sync flag']
  #allocation6 [shape = 's32[]', space=sflag, size = 0x4, offset = 0, fixed_abs, tag = 'sflag constant byte address 0x0 - dummy sync flag']
  %s0 = inlined_call_operand.vmem [shape: f32[2,4,256], index: 0, kind: input, shape index: {}]
  %s1 = inlined_call_operand.vmem [shape: f32[2,8,256], index: 1, kind: input, shape index: {}]
  %s2 = inlined_call_operand.vmem [shape: f32[2,8,256], index: 2, kind: input, shape index: {}, may-alias: {2,10}]
  %s3 = inlined_call_operand.vmem [shape: f32[3,3,32,4], index: 3, kind: input, shape index: {}]
  %s4 = inlined_call_operand.vmem [shape: f32[3,3,32,8], index: 4, kind: input, shape index: {}]
  %s5 = inlined_call_operand.vmem [shape: f32[32,1], index: 5, kind: input, shape index: {}]
  %s6 = inlined_call_operand.vmem [shape: f32[8,256], index: 6, kind: input, shape index: {}]
  %s7 = inlined_call_operand.vmem [shape: f32[8,256], index: 7, kind: input, shape index: {}]
  %s8 = inlined_call_operand.vmem [shape: f32[8,256], index: 8, kind: input, shape index: {}]
  %s9 = inlined_call_operand.vmem [shape: f32[2,8,256], index: 9, kind: output, shape index: {0}]
  %s10 = inlined_call_operand.vmem [shape: f32[2,8,256], index: 10, kind: output, shape index: {1}, may-alias: {2,10}]
  %11 = xla_tuple %s9, %s10
  %s12 = sld [smem:[#allocation0]]
  $region137: #{convlstm_cell_pallas.1} parent=0
    _
  %s14 = ssub.s32 1, %s12
  %s15 = scalar_select 0, %s14, %s12
  loop: start=0, step=1, limit=4
  $region2: #{convlstm_cell_pallas.1} parent=0 // loop_pre_header
    _
  $region3: #{convlstm_cell_pallas.1} parent=0 // loop_header
    %s17 = sphi 0, %s21
    %p18 = scmp.ge.s32.totalorder %s17, 4
    %s27 = sphi 0, %s29
    %s30 = sphi 0, %s27
    %s31 = sphi 0, %s30
    %s47 = sphi 0, %s31
    %s51 = sphi 0, %s51
    %s53 = sphi 0, %s51
    %s54 = sphi 0, %s53
    %s68 = sphi 0, %s54
    %s72 = sphi 0, %s72
    %s74 = sphi 0, %s72
    %s75 = sphi 0, %s74
    %s89 = sphi 0, %s75
    %s93 = sphi 0, %s93
    %s95 = sphi 0, %s93
    %s96 = sphi 0, %s95
    %s110 = sphi 0, %s96
    %s114 = sphi 0, %s114
    %s116 = sphi 0, %s114
    %s117 = sphi 0, %s116
    %s131 = sphi 0, %s117
    %s135 = sphi 0, %s135
    %s137 = sphi 0, %s135
    %s138 = sphi 0, %s137
    %s152 = sphi 0, %s138
    %s156 = sphi 0, %s156
    %s158 = sphi 0, %s156
    %s159 = sphi 0, %s158
    %s173 = sphi 0, %s159
    %s179 = sphi 0, %s181
    %s182 = sphi 0, %s179
    %s183 = sphi 0, %s182
    %s199 = sphi 0, %s183
    %s205 = sphi 0, %s207
    %s208 = sphi 0, %s205
    %s209 = sphi 0, %s208
    %s225 = sphi 0, %s209
  $region4: #{convlstm_cell_pallas.1} parent=0 // loop_header_branch
    %20 = sbr.rel (%p18) target = $region8
  $region5: #{convlstm_cell_pallas.1} parent=0 // loop_body
    %s22 = ssub.s32 %s17, 1
    %s23 = ssub.s32 %s17, 2
    %s24 = sadd.s32 %s17, 1
    %s25 = ssub.s32 %s17, %s24
    %p26 = scmp.eq.s32.totalorder %s25, 0
    %s28 = sadd.s32 %s27, 1
    %s29 = scalar_select %p26, %s27, %s28
    %p32 = pneg %p26
    %p33 = scmp.eq.s32.totalorder %s17, 1
    %p34 = por %p32, %p33
    %p35 = scmp.ne.s32.totalorder %s27, %s30
    %p36 = scmp.eq.s32.totalorder %s17, 0
    %p37 = por %p35, %p36
    %p38 = scmp.ne.s32.totalorder %s27, %s30
    %p39 = scmp.eq.s32.totalorder %s22, 1
    %p40 = por %p38, %p39
    %p41 = scmp.ne.s32.totalorder %s30, %s31
    %p42 = scmp.eq.s32.totalorder %s22, 0
    %p43 = por %p41, %p42
    %p44 = scmp.ne.s32.totalorder %s30, %s31
    %p45 = scmp.eq.s32.totalorder %s23, 1
    %p46 = por %p44, %p45
    %p48 = scmp.ne.s32.totalorder %s31, %s47
    %p49 = scmp.eq.s32.totalorder %s23, 0
    %p50 = por %p48, %p49
    %s52 = sadd.s32 %s51, 1
    %p55 = scmp.eq.s32.totalorder %s17, 1
    %p56 = scmp.ne.s32.totalorder %s51, %s53
    %p57 = scmp.eq.s32.totalorder %s17, 0
    %p58 = por %p56, %p57
    %p59 = scmp.ne.s32.totalorder %s51, %s53
    %p60 = scmp.eq.s32.totalorder %s22, 1
    %p61 = por %p59, %p60
    %p62 = scmp.ne.s32.totalorder %s53, %s54
    %p63 = scmp.eq.s32.totalorder %s22, 0
    %p64 = por %p62, %p63
    %p65 = scmp.ne.s32.totalorder %s53, %s54
    %p66 = scmp.eq.s32.totalorder %s23, 1
    %p67 = por %p65, %p66
    %p69 = scmp.ne.s32.totalorder %s54, %s68
    %p70 = scmp.eq.s32.totalorder %s23, 0
    %p71 = por %p69, %p70
    %s73 = sadd.s32 %s72, 1
    %p76 = scmp.eq.s32.totalorder %s17, 1
    %p77 = scmp.ne.s32.totalorder %s72, %s74
    %p78 = scmp.eq.s32.totalorder %s17, 0
    %p79 = por %p77, %p78
    %p80 = scmp.ne.s32.totalorder %s72, %s74
    %p81 = scmp.eq.s32.totalorder %s22, 1
    %p82 = por %p80, %p81
    %p83 = scmp.ne.s32.totalorder %s74, %s75
    %p84 = scmp.eq.s32.totalorder %s22, 0
    %p85 = por %p83, %p84
    %p86 = scmp.ne.s32.totalorder %s74, %s75
    %p87 = scmp.eq.s32.totalorder %s23, 1
    %p88 = por %p86, %p87
    %p90 = scmp.ne.s32.totalorder %s75, %s89
    %p91 = scmp.eq.s32.totalorder %s23, 0
    %p92 = por %p90, %p91
    %s94 = sadd.s32 %s93, 1
    %p97 = scmp.eq.s32.totalorder %s17, 1
    %p98 = scmp.ne.s32.totalorder %s93, %s95
    %p99 = scmp.eq.s32.totalorder %s17, 0
    %p100 = por %p98, %p99
    %p101 = scmp.ne.s32.totalorder %s93, %s95
    %p102 = scmp.eq.s32.totalorder %s22, 1
    %p103 = por %p101, %p102
    %p104 = scmp.ne.s32.totalorder %s95, %s96
    %p105 = scmp.eq.s32.totalorder %s22, 0
    %p106 = por %p104, %p105
    %p107 = scmp.ne.s32.totalorder %s95, %s96
    %p108 = scmp.eq.s32.totalorder %s23, 1
    %p109 = por %p107, %p108
    %p111 = scmp.ne.s32.totalorder %s96, %s110
    %p112 = scmp.eq.s32.totalorder %s23, 0
    %p113 = por %p111, %p112
    %s115 = sadd.s32 %s114, 1
    %p118 = scmp.eq.s32.totalorder %s17, 1
    %p119 = scmp.ne.s32.totalorder %s114, %s116
    %p120 = scmp.eq.s32.totalorder %s17, 0
    %p121 = por %p119, %p120
    %p122 = scmp.ne.s32.totalorder %s114, %s116
    %p123 = scmp.eq.s32.totalorder %s22, 1
    %p124 = por %p122, %p123
    %p125 = scmp.ne.s32.totalorder %s116, %s117
    %p126 = scmp.eq.s32.totalorder %s22, 0
    %p127 = por %p125, %p126
    %p128 = scmp.ne.s32.totalorder %s116, %s117
    %p129 = scmp.eq.s32.totalorder %s23, 1
    %p130 = por %p128, %p129
    %p132 = scmp.ne.s32.totalorder %s117, %s131
    %p133 = scmp.eq.s32.totalorder %s23, 0
    %p134 = por %p132, %p133
    %s136 = sadd.s32 %s135, 1
    %p139 = scmp.eq.s32.totalorder %s17, 1
    %p140 = scmp.ne.s32.totalorder %s135, %s137
    %p141 = scmp.eq.s32.totalorder %s17, 0
    %p142 = por %p140, %p141
    %p143 = scmp.ne.s32.totalorder %s135, %s137
    %p144 = scmp.eq.s32.totalorder %s22, 1
    %p145 = por %p143, %p144
    %p146 = scmp.ne.s32.totalorder %s137, %s138
    %p147 = scmp.eq.s32.totalorder %s22, 0
    %p148 = por %p146, %p147
    %p149 = scmp.ne.s32.totalorder %s137, %s138
    %p150 = scmp.eq.s32.totalorder %s23, 1
    %p151 = por %p149, %p150
    %p153 = scmp.ne.s32.totalorder %s138, %s152
    %p154 = scmp.eq.s32.totalorder %s23, 0
    %p155 = por %p153, %p154
    %s157 = sadd.s32 %s156, 1
    %p160 = scmp.eq.s32.totalorder %s17, 1
    %p161 = scmp.ne.s32.totalorder %s156, %s158
    %p162 = scmp.eq.s32.totalorder %s17, 0
    %p163 = por %p161, %p162
    %p164 = scmp.ne.s32.totalorder %s156, %s158
    %p165 = scmp.eq.s32.totalorder %s22, 1
    %p166 = por %p164, %p165
    %p167 = scmp.ne.s32.totalorder %s158, %s159
    %p168 = scmp.eq.s32.totalorder %s22, 0
    %p169 = por %p167, %p168
    %p170 = scmp.ne.s32.totalorder %s158, %s159
    %p171 = scmp.eq.s32.totalorder %s23, 1
    %p172 = por %p170, %p171
    %p174 = scmp.ne.s32.totalorder %s159, %s173
    %p175 = scmp.eq.s32.totalorder %s23, 0
    %p176 = por %p174, %p175
    %s177 = ssub.s32 %s17, %s24
    %p178 = scmp.eq.s32.totalorder %s177, 0
    %s180 = sadd.s32 %s179, 1
    %s181 = scalar_select %p178, %s179, %s180
    %p184 = pneg %p178
    %p185 = scmp.eq.s32.totalorder %s17, 1
    %p186 = por %p184, %p185
    %p187 = scmp.ne.s32.totalorder %s179, %s182
    %p188 = scmp.eq.s32.totalorder %s17, 0
    %p189 = por %p187, %p188
    %p190 = scmp.ne.s32.totalorder %s179, %s182
    %p191 = scmp.eq.s32.totalorder %s22, 1
    %p192 = por %p190, %p191
    %p193 = scmp.ne.s32.totalorder %s182, %s183
    %p194 = scmp.eq.s32.totalorder %s22, 0
    %p195 = por %p193, %p194
    %p196 = scmp.ne.s32.totalorder %s182, %s183
    %p197 = scmp.eq.s32.totalorder %s23, 1
    %p198 = por %p196, %p197
    %p200 = scmp.ne.s32.totalorder %s183, %s199
    %p201 = scmp.eq.s32.totalorder %s23, 0
    %p202 = por %p200, %p201
    %s203 = ssub.s32 %s17, %s24
    %p204 = scmp.eq.s32.totalorder %s203, 0
    %s206 = sadd.s32 %s205, 1
    %s207 = scalar_select %p204, %s205, %s206
    %p210 = pneg %p204
    %p211 = scmp.eq.s32.totalorder %s17, 1
    %p212 = por %p210, %p211
    %p213 = scmp.ne.s32.totalorder %s205, %s208
    %p214 = scmp.eq.s32.totalorder %s17, 0
    %p215 = por %p213, %p214
    %p216 = scmp.ne.s32.totalorder %s205, %s208
    %p217 = scmp.eq.s32.totalorder %s22, 1
    %p218 = por %p216, %p217
    %p219 = scmp.ne.s32.totalorder %s208, %s209
    %p220 = scmp.eq.s32.totalorder %s22, 0
    %p221 = por %p219, %p220
    %p222 = scmp.ne.s32.totalorder %s208, %s209
    %p223 = scmp.eq.s32.totalorder %s23, 1
    %p224 = por %p222, %p223
    %p226 = scmp.ne.s32.totalorder %s209, %s225
    %p227 = scmp.eq.s32.totalorder %s23, 0
    %p228 = por %p226, %p227
    %p229 = scmp.le.s32.totalorder 1, %s17
    %p230 = scmp.lt.s32.totalorder %s17, 3
    %p231 = pnand %p229, %p230
    %p232 = pneg %p231
    // Predicated region
    $region9: #{convlstm_cell_pallas.1} parent=5 // pred_check
      _
    $region10: #{convlstm_cell_pallas.1} parent=5 // pred_check_branch
      %234 = sbr.rel (%p231) target = $region12
    $region11: #{convlstm_cell_pallas.1} parent=5 // pred_region
      %s235 = ssub.s32 %s17, 1
      // Predicated region
      $region13: #{convlstm_cell_pallas.1} parent=11 // pred_check
        %p236 = pneg %p64
      $region14: #{convlstm_cell_pallas.1} parent=11 // pred_check_branch
        %238 = sbr.rel (%p236) target = $region16
      $region15: #{convlstm_cell_pallas.1} parent=11 // pred_region
        _
      $region16: #{convlstm_cell_pallas.1} parent=11 // pred_fallthru
        _
      // Predicated region
      $region17: #{convlstm_cell_pallas.1} parent=11 // pred_check
        %p239 = pneg %p85
      $region18: #{convlstm_cell_pallas.1} parent=11 // pred_check_branch
        %241 = sbr.rel (%p239) target = $region20
      $region19: #{convlstm_cell_pallas.1} parent=11 // pred_region
        _
      $region20: #{convlstm_cell_pallas.1} parent=11 // pred_fallthru
        _
      // Predicated region
      $region21: #{convlstm_cell_pallas.1} parent=11 // pred_check
        %p242 = pneg %p106
      $region22: #{convlstm_cell_pallas.1} parent=11 // pred_check_branch
        %244 = sbr.rel (%p242) target = $region24
      $region23: #{convlstm_cell_pallas.1} parent=11 // pred_region
        _
      $region24: #{convlstm_cell_pallas.1} parent=11 // pred_fallthru
        _
      // Predicated region
      $region25: #{convlstm_cell_pallas.1} parent=11 // pred_check
        %p245 = pneg %p127
      $region26: #{convlstm_cell_pallas.1} parent=11 // pred_check_branch
        %247 = sbr.rel (%p245) target = $region28
      $region27: #{convlstm_cell_pallas.1} parent=11 // pred_region
        _
      $region28: #{convlstm_cell_pallas.1} parent=11 // pred_fallthru
        _
      // Predicated region
      $region29: #{convlstm_cell_pallas.1} parent=11 // pred_check
        %p248 = pneg %p148
      $region30: #{convlstm_cell_pallas.1} parent=11 // pred_check_branch
        %250 = sbr.rel (%p248) target = $region32
      $region31: #{convlstm_cell_pallas.1} parent=11 // pred_region
        _
      $region32: #{convlstm_cell_pallas.1} parent=11 // pred_fallthru
        _
      // Predicated region
      $region33: #{convlstm_cell_pallas.1} parent=11 // pred_check
        %p251 = pneg %p169
      $region34: #{convlstm_cell_pallas.1} parent=11 // pred_check_branch
        %253 = sbr.rel (%p251) target = $region36
      $region35: #{convlstm_cell_pallas.1} parent=11 // pred_region
        _
      $region36: #{convlstm_cell_pallas.1} parent=11 // pred_fallthru
        _
    $region12: #{convlstm_cell_pallas.1} parent=5 // pred_fallthru
      _
    %p254 = scmp.lt.s32.totalorder %s17, 2
    // Predicated region
    $region37: #{convlstm_cell_pallas.1} parent=5 // pred_check
      %p255 = pneg %p254
    $region38: #{convlstm_cell_pallas.1} parent=5 // pred_check_branch
      %257 = sbr.rel (%p255) target = $region40
    $region39: #{convlstm_cell_pallas.1} parent=5 // pred_region
      // Predicated region
      $region41: #{convlstm_cell_pallas.1} parent=39 // pred_check
        %p258 = pneg %p37
      $region42: #{convlstm_cell_pallas.1} parent=39 // pred_check_branch
        %260 = sbr.rel (%p258) target = $region44
      $region43: #{convlstm_cell_pallas.1} parent=39 // pred_region
        %p261 = scmp.lt.s32.totalorder %s17, 1
        %s262 = scalar_select %p261, %s17, 1
        %s263 = smul.addr %s262, 2
        %s264 = smul.addr %s263, 8
        %s265 = scalar_lea.vmem %s2, %s264
      $region44: #{convlstm_cell_pallas.1} parent=39 // pred_fallthru
        _
    $region40: #{convlstm_cell_pallas.1} parent=5 // pred_fallthru
      _
    %p266 = scmp.le.s32.totalorder 1, %s17
    %p267 = scmp.lt.s32.totalorder %s17, 3
    %p268 = pnand %p266, %p267
    %p269 = pneg %p268
    // Predicated region
    $region45: #{convlstm_cell_pallas.1} parent=5 // pred_check
      _
    $region46: #{convlstm_cell_pallas.1} parent=5 // pred_check_branch
      %271 = sbr.rel (%p268) target = $region48
    $region47: #{convlstm_cell_pallas.1} parent=5 // pred_region
      %s272 = ssub.s32 %s17, 1
      %p273 = scmp.lt.s32.totalorder %s22, 1
      %s274 = scalar_select %p273, %s22, 1
      %s275 = smul.addr %s274, 2
      %s276 = smul.addr %s275, 8
      %s277 = scalar_lea.vmem %s2, %s276
      %p278 = pneg %p43
      %p279 = pneg %p40
      %p280 = pneg %p64
      %p281 = pneg %p61
      %p282 = pneg %p85
      %p283 = pneg %p82
      %p284 = pneg %p106
      %p285 = pneg %p103
      %p286 = pneg %p127
      %p287 = pneg %p124
      %p288 = pneg %p148
      %p289 = pneg %p145
      %p290 = pneg %p169
      %p291 = pneg %p166
      %p292 = pneg %p195
      %p293 = pneg %p192
      %p294 = scmp.lt.s32.totalorder %s22, 1
      %s295 = scalar_select %p294, %s22, 1
      %s296 = smul.addr %s295, 2
      %s297 = smul.addr %s296, 8
      %s298 = scalar_lea.vmem %s9, %s297
      %p299 = pneg %p221
      %p300 = pneg %p218
      %p301 = scmp.lt.s32.totalorder %s22, 1
      %s302 = scalar_select %p301, %s22, 1
      %s303 = smul.addr %s302, 2
      %s304 = smul.addr %s303, 8
      %s305 = scalar_lea.vmem %s10, %s304
      %p306 = scmp.lt.s32.totalorder %s22, 1
      %s307 = scalar_select %p306, %s22, 1
      %s308 = smul.addr %s307, 2
      %s309 = smul.addr %s308, 8
      %s310 = scalar_lea.vmem %s2, %s309
      %p311 = scmp.lt.s32.totalorder %s22, 1
      %s312 = scalar_select %p311, %s22, 1
      %s313 = smul.addr %s312, 2
      %s314 = smul.addr %s313, 8
      %s315 = scalar_lea.vmem %s9, %s314
      %p316 = scmp.lt.s32.totalorder %s22, 1
      %s317 = scalar_select %p316, %s22, 1
      %s318 = smul.addr %s317, 2
      %s319 = smul.addr %s318, 8
      %s320 = scalar_lea.vmem %s10, %s319
      %s321 = smul.u32 %s22, 2
      %s322 = smul.addr %s321, 4
      %s323 = scalar_lea.vmem %s0, %s322
      %s324 = scalar_lea.vmem [#allocation2], 4
      %p326 = scmp.lt.u32.totalorder 8, 8
      %p327 = pneg %p326
      // Predicated region
      $region49: #{convlstm_cell_pallas.1} parent=47 // pred_check
        _
      $region50: #{convlstm_cell_pallas.1} parent=47 // pred_check_branch
        %329 = sbr.rel (%p326) target = $region52
      $region51: #{convlstm_cell_pallas.1} parent=47 // pred_region
        %s344 = sand.u32 8, 7
        %p345 = scmp.eq.s32.totalorder %s344, 0
        // Predicated region
        $region64: #{convlstm_cell_pallas.1} parent=51 // pred_check
          %p346 = pneg %p345
        $region65: #{convlstm_cell_pallas.1} parent=51 // pred_check_branch
          %348 = sbr.rel (%p346) target = $region67
        $region66: #{convlstm_cell_pallas.1} parent=51 // pred_region
          loop: start=0, step=1, limit=1
          $region68: #{convlstm_cell_pallas.1} parent=66 // loop_pre_header
            _
          $region69: #{convlstm_cell_pallas.1} parent=66 // loop_header
            %s350 = sphi 0, %s354
            %p351 = scmp.ge.s32.totalorder %s350, 1
            %s355 = sphi %s323, %s323
            %s356 = sphi %s324, %s324
          $region70: #{convlstm_cell_pallas.1} parent=66 // loop_header_branch
            %353 = sbr.rel (%p351) target = $region74
          $region71: #{convlstm_cell_pallas.1} parent=66 // loop_body
            %v357 = vld [vmem:[%s355] sm:$0xff]
            %358 = vst [vmem:[%s356] sm:$0xff] %v357
          $region72: #{convlstm_cell_pallas.1} parent=66 // loop_footer
            %s354 = sadd.s32 1, %s350
          $region73: #{convlstm_cell_pallas.1} parent=66 // loop_footer_branch
            %349 = sbr.rel target = $region69
          $region74: #{convlstm_cell_pallas.1} parent=66 // loop_exit
            _
        $region67: #{convlstm_cell_pallas.1} parent=51 // pred_fallthru
          _
        %p359 = pneg %p345
        // Predicated region
        $region75: #{convlstm_cell_pallas.1} parent=51 // pred_check
          _
        $region76: #{convlstm_cell_pallas.1} parent=51 // pred_check_branch
          %361 = sbr.rel (%p345) target = $region78
        $region77: #{convlstm_cell_pallas.1} parent=51 // pred_region
          %s362 = sand.u32 8, 7
        $region78: #{convlstm_cell_pallas.1} parent=51 // pred_fallthru
          _
      $region52: #{convlstm_cell_pallas.1} parent=47 // pred_fallthru
        _
      // Predicated region
      $region53: #{convlstm_cell_pallas.1} parent=47 // pred_check
        %p330 = pneg %p326
      $region54: #{convlstm_cell_pallas.1} parent=47 // pred_check_branch
        %332 = sbr.rel (%p330) target = $region56
      $region55: #{convlstm_cell_pallas.1} parent=47 // pred_region
        %s333 = sshllo.u32 0, 8
        loop: start=0, step=1, limit=1
        $region57: #{convlstm_cell_pallas.1} parent=55 // loop_pre_header
          _
        $region58: #{convlstm_cell_pallas.1} parent=55 // loop_header
          %s335 = sphi 0, %s339
          %p336 = scmp.ge.s32.totalorder %s335, 1
          %s340 = sphi %s323, %s323
          %s341 = sphi %s324, %s324
        $region59: #{convlstm_cell_pallas.1} parent=55 // loop_header_branch
          %338 = sbr.rel (%p336) target = $region63
        $region60: #{convlstm_cell_pallas.1} parent=55 // loop_body
          %v342 = vld [vmem:[%s340] sm:%s333]
          %343 = vst [vmem:[%s341] sm:%s333] %v342
        $region61: #{convlstm_cell_pallas.1} parent=55 // loop_footer
          %s339 = sadd.s32 1, %s335
        $region62: #{convlstm_cell_pallas.1} parent=55 // loop_footer_branch
          %334 = sbr.rel target = $region58
        $region63: #{convlstm_cell_pallas.1} parent=55 // loop_exit
          _
      $region56: #{convlstm_cell_pallas.1} parent=47 // pred_fallthru
        _
      // Predicated region
      $region79: #{convlstm_cell_pallas.1} parent=47 // pred_check
        _
      $region80: #{convlstm_cell_pallas.1} parent=47 // pred_check_branch
        %365 = sbr.rel (0) target = $region82
      $region81: #{convlstm_cell_pallas.1} parent=47 // pred_region
        %366 = vsyncadd [#allocation4], 128
      $region82: #{convlstm_cell_pallas.1} parent=47 // pred_fallthru
        _
      %s367 = smul.addr %s321, 8
      %s368 = scalar_lea.vmem %s1, %s367
      %s369 = scalar_lea.vmem [#allocation3], 8
      %s370 = scalar_lea.sflag [#allocation4], 1
      %p372 = scmp.lt.u32.totalorder 16, 8
      %p373 = pneg %p372
      // Predicated region
      $region83: #{convlstm_cell_pallas.1} parent=47 // pred_check
        _
      $region84: #{convlstm_cell_pallas.1} parent=47 // pred_check_branch
        %375 = sbr.rel (%p372) target = $region86
      $region85: #{convlstm_cell_pallas.1} parent=47 // pred_region
        %s390 = sand.u32 16, 7
        %p391 = scmp.eq.s32.totalorder %s390, 0
        // Predicated region
        $region98: #{convlstm_cell_pallas.1} parent=85 // pred_check
          %p392 = pneg %p391
        $region99: #{convlstm_cell_pallas.1} parent=85 // pred_check_branch
          %394 = sbr.rel (%p392) target = $region101
        $region100: #{convlstm_cell_pallas.1} parent=85 // pred_region
          loop: start=0, step=1, limit=1
          $region102: #{convlstm_cell_pallas.1} parent=100 // loop_pre_header
            _
          $region103: #{convlstm_cell_pallas.1} parent=100 // loop_header
            %s396 = sphi 0, %s400
            %p397 = scmp.ge.s32.totalorder %s396, 1
            %s401 = sphi %s368, %s368
            %s402 = sphi %s369, %s369
          $region104: #{convlstm_cell_pallas.1} parent=100 // loop_header_branch
            %399 = sbr.rel (%p397) target = $region108
          $region105: #{convlstm_cell_pallas.1} parent=100 // loop_body
            %v403 = vld [vmem:[%s401] sm:$0xff]
            %404 = vst [vmem:[%s402] sm:$0xff] %v403
            %v405 = vld [vmem:[%s401 + $0x8] sm:$0xff]
            %406 = vst [vmem:[%s402 + $0x8] sm:$0xff] %v405
          $region106: #{convlstm_cell_pallas.1} parent=100 // loop_footer
            %s400 = sadd.s32 1, %s396
          $region107: #{convlstm_cell_pallas.1} parent=100 // loop_footer_branch
            %395 = sbr.rel target = $region103
          $region108: #{convlstm_cell_pallas.1} parent=100 // loop_exit
            _
        $region101: #{convlstm_cell_pallas.1} parent=85 // pred_fallthru
          _
        %p407 = pneg %p391
        // Predicated region
        $region109: #{convlstm_cell_pallas.1} parent=85 // pred_check
          _
        $region110: #{convlstm_cell_pallas.1} parent=85 // pred_check_branch
          %409 = sbr.rel (%p391) target = $region112
        $region111: #{convlstm_cell_pallas.1} parent=85 // pred_region
          %s410 = sand.u32 16, 7
        $region112: #{convlstm_cell_pallas.1} parent=85 // pred_fallthru
          _
      $region86: #{convlstm_cell_pallas.1} parent=47 // pred_fallthru
        _
      // Predicated region
      $region87: #{convlstm_cell_pallas.1} parent=47 // pred_check
        %p376 = pneg %p372
      $region88: #{convlstm_cell_pallas.1} parent=47 // pred_check_branch
        %378 = sbr.rel (%p376) target = $region90
      $region89: #{convlstm_cell_pallas.1} parent=47 // pred_region
        %s379 = sshllo.u32 0, 16
        loop: start=0, step=1, limit=1
        $region91: #{convlstm_cell_pallas.1} parent=89 // loop_pre_header
          _
        $region92: #{convlstm_cell_pallas.1} parent=89 // loop_header
          %s381 = sphi 0, %s385
          %p382 = scmp.ge.s32.totalorder %s381, 1
          %s386 = sphi %s368, %s368
          %s387 = sphi %s369, %s369
        $region93: #{convlstm_cell_pallas.1} parent=89 // loop_header_branch
          %384 = sbr.rel (%p382) target = $region97
        $region94: #{convlstm_cell_pallas.1} parent=89 // loop_body
          %v388 = vld [vmem:[%s386] sm:%s379]
          %389 = vst [vmem:[%s387] sm:%s379] %v388
        $region95: #{convlstm_cell_pallas.1} parent=89 // loop_footer
          %s385 = sadd.s32 1, %s381
        $region96: #{convlstm_cell_pallas.1} parent=89 // loop_footer_branch
          %380 = sbr.rel target = $region92
        $region97: #{convlstm_cell_pallas.1} parent=89 // loop_exit
          _
      $region90: #{convlstm_cell_pallas.1} parent=47 // pred_fallthru
        _
      // Predicated region
      $region113: #{convlstm_cell_pallas.1} parent=47 // pred_check
        _
      $region114: #{convlstm_cell_pallas.1} parent=47 // pred_check_branch
        %413 = sbr.rel (0) target = $region116
      $region115: #{convlstm_cell_pallas.1} parent=47 // pred_region
        %414 = vsyncadd %s370, 256
      $region116: #{convlstm_cell_pallas.1} parent=47 // pred_fallthru
        _
      %415 = vst [vmem:[#allocation2] sm:$0xf] 0.0
      %416 = vst [vmem:[#allocation3] sm:$0xff] 0.0
      %vm417 = vcmask 134144
      %418 = vst.msk [vmem:[#allocation2 + $0xc] sm:$0xf] %vm417, 0.0
      %vm419 = vcmask 138240
      %420 = vst.msk [vmem:[#allocation3 + $0x18] sm:$0xff] %vm419, 0.0
      %v421 = vlaneseq
      %v422 = vand.u32 %v421, 127
      %v423 = vadd.s32 %v422, 128
      %vm424 = vcmp.lt.s32.totalorder %v422, 0
      %v425 = vsub.s32 0, %v422
      %v426 = vsel %vm424, %v425, %v422
      %v427 = vshrl.u32 %v426, 4
      %v428 = vand.u32 %v426, 15
      %v429 = vsub.s32 0, %v428
      %v430 = vsel %vm424, %v429, %v428
      %vm431 = vcmp.lt.s32.totalorder %v423, 0
      %v432 = vsub.s32 0, %v423
      %v433 = vsel %vm431, %v432, %v423
      %v434 = vshrl.u32 %v433, 4
      %v435 = vand.u32 %v433, 15
      %v436 = vsub.s32 0, %v435
      %v437 = vsel %vm431, %v436, %v435
      %vm438 = vcmp.ne.s32.totalorder %v430, 0
      %vm439 = vcmp.ne.s32.totalorder %v437, 0
      %vm440 = vcmp.lt.s32.totalorder %v430, 0
      %vm441 = vcmp.lt.s32.totalorder %v437, 0
      %vm442 = vmand %vm440, %vm438
      %vm443 = vmand %vm441, %vm439
      %v444 = vadd.s32 %v430, 16
      %v445 = vadd.s32 %v437, 16
      %v446 = vsel %vm442, %v444, %v430
      %v447 = vsel %vm443, %v445, %v437
      %v448 = vadd.s32 %v446, 4294967295
      %v449 = vadd.s32 %v447, 4294967295
      %vm450 = vcmp.ge.s32.totalorder %v448, 0
      %vm451 = vcmp.ge.s32.totalorder %v449, 0
      %vm452 = vcmp.lt.s32.totalorder %v448, 16
      %vm453 = vcmp.lt.s32.totalorder %v449, 16
      %vm454 = vmand %vm450, %vm452
      %vm455 = vmand %vm451, %vm453
      %v456 = vadd.s32 %v446, 1
      %v457 = vadd.s32 %v447, 1
      %vm458 = vcmp.ge.s32.totalorder %v456, 0
      %vm459 = vcmp.ge.s32.totalorder %v457, 0
      %vm460 = vcmp.lt.s32.totalorder %v456, 16
      %vm461 = vcmp.lt.s32.totalorder %v457, 16
      %vm462 = vmand %vm458, %vm460
      %vm463 = vmand %vm459, %vm461
      %s464 = smul.u32 4, 1
      %s465 = smul.u32 %s464, 2
      %s466 = sshll.u32 %s465, 4
      %467 = dma.done [#allocation4], %s466
      %s468 = smul.u32 8, 1
      %s469 = smul.u32 %s468, 2
      %s470 = sshll.u32 %s469, 4
      %471 = dma.done %s370, %s470
      %v472 = vld [vmem:[#allocation2] sm:$0xff]
      %v473 = vld [vmem:[#allocation2 + $0x8] sm:$0xf]
      %v474 = vsel %vm454, 1, 0
      %v475 = vsel %vm455, 1, 0
      %vm476 = vcmp.eq.s32.totalorder %v474, 1
      %vm477 = vcmp.eq.s32.totalorder %v475, 1
      %v480 = vcombine.high %v472, %v472
      %481 = vrot.lane.b32.xlu0 %v472, 17
      %v482 = vpop.permute.xlu0 %481
      %483 = vrot.lane.b32.xlu0 %v480, 17
      %v484 = vpop.permute.xlu0 %483
      %485 = vrot.lane.b32.xlu0 %v473, 17
      %v486 = vpop.permute.xlu0 %485
      %v487 = vsel %vm419, %v482, %v484
      %v488 = vsel %vm419, %v484, %v486
      %v491 = vsel %vm476, %v487, 0.0
      %v492 = vsel %vm477, %v488, 0.0
      %v493 = vld [vmem:[%s3] sm:$0xff]
      %v494 = vld [vmem:[%s3 + $0x8] sm:$0xff]
      %v495 = vld [vmem:[%s3 + $0x10] sm:$0xff]
      %v496 = vld [vmem:[%s3 + $0x18] sm:$0xff]
      %v497 = vld [vmem:[#allocation3] sm:$0xff]
      %v498 = vld [vmem:[#allocation3 + $0x8] sm:$0xff]
      %v499 = vld [vmem:[#allocation3 + $0x10] sm:$0xff]
      %503 = vrot.lane.b32.xlu0 %v497, 17
      %v504 = vpop.permute.xlu0 %503
      %505 = vrot.lane.b32.xlu0 %v498, 17
      %v506 = vpop.permute.xlu0 %505
      %507 = vrot.lane.b32.xlu0 %v499, 17
      %v508 = vpop.permute.xlu0 %507
      %v509 = vsel %vm419, %v504, %v506
      %v510 = vsel %vm419, %v506, %v508
      %v513 = vsel %vm476, %v509, 0.0
      %v514 = vsel %vm477, %v510, 0.0
      %v515 = vld [vmem:[%s4] sm:$0xff]
      %v516 = vld [vmem:[%s4 + $0x8] sm:$0xff]
      %v517 = vld [vmem:[%s4 + $0x10] sm:$0xff]
      %v518 = vld [vmem:[%s4 + $0x18] sm:$0xff]
      %vm519 = vcmask 64512
      %v521 = vsel %vm519, %v515, 0
      %v524 = vsel %vm519, %v516, 0
      %v527 = vsel %vm519, %v517, 0
      %v530 = vsel %vm519, %v518, 0
      %532 = vmatprep.subr.mxu0 %v514
      %533 = vmatpush1.msra.mxu0 %v513
      %534 = vmatprep.subr.mxu0 0.0
      %535 = vmatpush1.msra.mxu0 0.0
      %536 = vmatprep.subr.mxu0 0.0
      %537 = vmatpush1.msra.mxu0 0.0
      %538 = vmatprep.subr.mxu0 0.0
      %539 = vmatpush1.msra.mxu0 0.0
      %540 = vmatprep.subr.mxu0 0.0
      %541 = vmatpush1.msra.mxu0 0.0
      %542 = vmatprep.subr.mxu0 0.0
      %543 = vmatpush1.msra.mxu0 0.0
      %544 = vmatprep.subr.mxu0 0.0
      %545 = vmatpush1.msra.mxu0 0.0
      %546 = vmatprep.subr.mxu0 0.0
      %547 = vmatpush1.msra.mxu0 0.0
      %548 = vmatprep.subr.mxu0 0.0
      %549 = vmatpush1.msra.mxu0 0.0
      %550 = vmatprep.subr.mxu0 0.0
      %551 = vmatpush1.msra.mxu0 0.0
      %552 = vmatprep.subr.mxu0 0.0
      %553 = vmatpush1.msra.mxu0 0.0
      %554 = vmatprep.subr.mxu0 0.0
      %555 = vmatpush1.msra.mxu0 0.0
      %556 = vmatprep.subr.mxu0 0.0
      %557 = vmatpush1.msra.mxu0 0.0
      %558 = vmatprep.subr.mxu0 0.0
      %559 = vmatpush1.msra.mxu0 0.0
      %560 = vmatprep.subr.mxu0 0.0
      %561 = vmatpush1.msra.mxu0 0.0
      %562 = vmatprep.subr.mxu0 0.0
      %563 = vmatpush1.msra.mxu0 0.0
      %564 = vmatprep.subr.mxu0 0.0
      %565 = vmatpush1.msra.mxu0 0.0
      %566 = vmatprep.subr.mxu0 0.0
      %567 = vmatpush1.msra.mxu0 0.0
      %568 = vmatprep.subr.mxu0 0.0
      %569 = vmatpush1.msra.mxu0 0.0
      %570 = vmatprep.subr.mxu0 0.0
      %571 = vmatpush1.msra.mxu0 0.0
      %572 = vmatprep.subr.mxu0 0.0
      %573 = vmatpush1.msra.mxu0 0.0
      %574 = vmatprep.subr.mxu0 0.0
      %575 = vmatpush1.msra.mxu0 0.0
      %576 = vmatprep.subr.mxu0 0.0
      %577 = vmatpush1.msra.mxu0 0.0
      %578 = vmatprep.subr.mxu0 0.0
      %579 = vmatpush1.msra.mxu0 0.0
      %580 = vmatprep.subr.mxu0 0.0
      %581 = vmatpush1.msra.mxu0 0.0
      %582 = vmatprep.subr.mxu0 0.0
      %583 = vmatpush1.msra.mxu0 0.0
      %584 = vmatprep.subr.mxu0 0.0
      %585 = vmatpush1.msra.mxu0 0.0
      %586 = vmatprep.subr.mxu0 0.0
      %587 = vmatpush1.msra.mxu0 0.0
      %588 = vmatprep.subr.mxu0 0.0
      %589 = vmatpush1.msra.mxu0 0.0
      %590 = vmatprep.subr.mxu0 0.0
      %591 = vmatpush1.msra.mxu0 0.0
      %592 = vmatprep.subr.mxu0 0.0
      %593 = vmatpush1.msra.mxu0 0.0
      %594 = vmatprep.subr.mxu0 0.0
      %595 = vmatpush1.msra.mxu0 0.0
      %596 = vmatprep.mubr.f32.mxu0 0.0
      %597 = vmatmul.mubr.f32.gmra.mrb[0].mxu0 %v521
      %v598 = vpop.f32.mrb[0].mxu0
      %v599 = vadd.f32 0.0, %v598
      %v600 = vpop.f32.mrb[0].mxu0
      %v601 = vadd.f32 0.0, %v600
      %602 = vmatprep.mubr.f32.mxu0 0.0
      %603 = vmatmul.mubr.f32.gmra.mrb[0].mxu0 %v524
      %v604 = vpop.f32.mrb[0].mxu0
      %v605 = vadd.f32 0.0, %v604
      %v606 = vpop.f32.mrb[0].mxu0
      %v607 = vadd.f32 0.0, %v606
      %608 = vmatprep.mubr.f32.mxu0 0.0
      %609 = vmatmul.mubr.f32.gmra.mrb[0].mxu0 %v527
      %v610 = vpop.f32.mrb[0].mxu0
      %v611 = vadd.f32 0.0, %v610
      %v612 = vpop.f32.mrb[0].mxu0
      %v613 = vadd.f32 0.0, %v612
      %614 = vmatprep.mubr.f32.mxu0 0.0
      %615 = vmatmul.mubr.f32.gmra.mrb[0].mxu0 %v530
      %v616 = vpop.f32.mrb[0].mxu0
      %v617 = vadd.f32 0.0, %v616
      %v618 = vpop.f32.mrb[0].mxu0
      %v619 = vadd.f32 0.0, %v618
      %620 = vdwg.mxu0
      %vm621 = vcmask 31744
      %v623 = vsel %vm621, %v493, 0
      %v626 = vsel %vm621, %v494, 0
      %v629 = vsel %vm621, %v495, 0
      %v632 = vsel %vm621, %v496, 0
      %vm634 = vcmask 1043456
      %v636 = vsel %vm634, %v491, 0
      %v639 = vsel %vm634, %v492, 0
      %641 = vmatprep.subr.mxu0 %v639
      %642 = vmatpush1.msra.mxu0 %v636
      %643 = vmatprep.subr.mxu0 0.0
      %644 = vmatpush1.msra.mxu0 0.0
      %645 = vmatprep.subr.mxu0 0.0
      %646 = vmatpush1.msra.mxu0 0.0
      %647 = vmatprep.subr.mxu0 0.0
      %648 = vmatpush1.msra.mxu0 0.0
      %649 = vmatprep.subr.mxu0 0.0
      %650 = vmatpush1.msra.mxu0 0.0
      %651 = vmatprep.subr.mxu0 0.0
      %652 = vmatpush1.msra.mxu0 0.0
      %653 = vmatprep.subr.mxu0 0.0
      %654 = vmatpush1.msra.mxu0 0.0
      %655 = vmatprep.subr.mxu0 0.0
      %656 = vmatpush1.msra.mxu0 0.0
      %657 = vmatprep.subr.mxu0 0.0
      %658 = vmatpush1.msra.mxu0 0.0
      %659 = vmatprep.subr.mxu0 0.0
      %660 = vmatpush1.msra.mxu0 0.0
      %661 = vmatprep.subr.mxu0 0.0
      %662 = vmatpush1.msra.mxu0 0.0
      %663 = vmatprep.subr.mxu0 0.0
      %664 = vmatpush1.msra.mxu0 0.0
      %665 = vmatprep.subr.mxu0 0.0
      %666 = vmatpush1.msra.mxu0 0.0
      %667 = vmatprep.subr.mxu0 0.0
      %668 = vmatpush1.msra.mxu0 0.0
      %669 = vmatprep.subr.mxu0 0.0
      %670 = vmatpush1.msra.mxu0 0.0
      %671 = vmatprep.subr.mxu0 0.0
      %672 = vmatpush1.msra.mxu0 0.0
      %673 = vmatprep.subr.mxu0 0.0
      %674 = vmatpush1.msra.mxu0 0.0
      %675 = vmatprep.subr.mxu0 0.0
      %676 = vmatpush1.msra.mxu0 0.0
      %677 = vmatprep.subr.mxu0 0.0
      %678 = vmatpush1.msra.mxu0 0.0
      %679 = vmatprep.subr.mxu0 0.0
      %680 = vmatpush1.msra.mxu0 0.0
      %681 = vmatprep.subr.mxu0 0.0
      %682 = vmatpush1.msra.mxu0 0.0
      %683 = vmatprep.subr.mxu0 0.0
      %684 = vmatpush1.msra.mxu0 0.0
      %685 = vmatprep.subr.mxu0 0.0
      %686 = vmatpush1.msra.mxu0 0.0
      %687 = vmatprep.subr.mxu0 0.0
      %688 = vmatpush1.msra.mxu0 0.0
      %689 = vmatprep.subr.mxu0 0.0
      %690 = vmatpush1.msra.mxu0 0.0
      %691 = vmatprep.subr.mxu0 0.0
      %692 = vmatpush1.msra.mxu0 0.0
      %693 = vmatprep.subr.mxu0 0.0
      %694 = vmatpush1.msra.mxu0 0.0
      %695 = vmatprep.subr.mxu0 0.0
      %696 = vmatpush1.msra.mxu0 0.0
      %697 = vmatprep.subr.mxu0 0.0
      %698 = vmatpush1.msra.mxu0 0.0
      %699 = vmatprep.subr.mxu0 0.0
      %700 = vmatpush1.msra.mxu0 0.0
      %701 = vmatprep.subr.mxu0 0.0
      %702 = vmatpush1.msra.mxu0 0.0
      %703 = vmatprep.subr.mxu0 0.0
      %704 = vmatpush1.msra.mxu0 0.0
      %705 = vmatprep.mubr.f32.mxu0 0.0
      %706 = vmatmul.mubr.f32.gmra.mrb[0].mxu0 %v623
      %v707 = vpop.f32.mrb[0].mxu0
      %v708 = vadd.f32 %v599, %v707
      %v709 = vpop.f32.mrb[0].mxu0
      %v710 = vadd.f32 %v601, %v709
      %711 = vmatprep.mubr.f32.mxu0 0.0
      %712 = vmatmul.mubr.f32.gmra.mrb[0].mxu0 %v626
      %v713 = vpop.f32.mrb[0].mxu0
      %v714 = vadd.f32 %v605, %v713
      %v715 = vpop.f32.mrb[0].mxu0
      %v716 = vadd.f32 %v607, %v715
      %717 = vmatprep.mubr.f32.mxu0 0.0
      %718 = vmatmul.mubr.f32.gmra.mrb[0].mxu0 %v629
      %v719 = vpop.f32.mrb[0].mxu0
      %v720 = vadd.f32 %v611, %v719
      %v721 = vpop.f32.mrb[0].mxu0
      %v722 = vadd.f32 %v613, %v721
      %723 = vmatprep.mubr.f32.mxu0 0.0
      %724 = vmatmul.mubr.f32.gmra.mrb[0].mxu0 %v632
      %v725 = vpop.f32.mrb[0].mxu0
      %v726 = vadd.f32 %v617, %v725
      %v727 = vpop.f32.mrb[0].mxu0
      %v728 = vadd.f32 %v619, %v727
      %729 = vdwg.mxu0
      %v730 = vld [vmem:[#allocation2] sm:$0xff]
      %v731 = vld [vmem:[#allocation2 + $0x8] sm:$0xf]
      %s732 = scalar_lea.vmem %s3, 32
      %v733 = vld [vmem:[%s732] sm:$0xff]
      %v734 = vld [vmem:[%s732 + $0x8] sm:$0xff]
      %v735 = vld [vmem:[%s732 + $0x10] sm:$0xff]
      %v736 = vld [vmem:[%s732 + $0x18] sm:$0xff]
      %v739 = vcombine.high %v730, %v730
      %740 = vrot.lane.b32.xlu0 %v730, 16
      %v741 = vpop.permute.xlu0 %740
      %742 = vrot.lane.b32.xlu0 %v739, 16
      %v743 = vpop.permute.xlu0 %742
      %744 = vrot.lane.b32.xlu0 %v731, 16
      %v745 = vpop.permute.xlu0 %744
      %vm746 = vcmask 130048
      %v747 = vsel %vm746, %v741, %v743
      %v748 = vsel %vm746, %v743, %v745
      %v750 = vsel %vm621, %v733, 0
      %v753 = vsel %vm621, %v734, 0
      %v756 = vsel %vm621, %v735, 0
      %v759 = vsel %vm621, %v736, 0
      %v761 = vsel %vm634, %v747, 0
      %v763 = vsel %vm634, %v748, 0
      %765 = vmatprep.subr.mxu0 %v763
      %766 = vmatpush1.msra.mxu0 %v761
      %767 = vmatprep.subr.mxu0 0.0
      %768 = vmatpush1.msra.mxu0 0.0
      %769 = vmatprep.subr.mxu0 0.0
      %770 = vmatpush1.msra.mxu0 0.0
      %771 = vmatprep.subr.mxu0 0.0
      %772 = vmatpush1.msra.mxu0 0.0
      %773 = vmatprep.subr.mxu0 0.0
      %774 = vmatpush1.msra.mxu0 0.0
      %775 = vmatprep.subr.mxu0 0.0
      %776 = vmatpush1.msra.mxu0 0.0
      %777 = vmatprep.subr.mxu0 0.0
      %778 = vmatpush1.msra.mxu0 0.0
      %779 = vmatprep.subr.mxu0 0.0
      %780 = vmatpush1.msra.mxu0 0.0
      %781 = vmatprep.subr.mxu0 0.0
      %782 = vmatpush1.msra.mxu0 0.0
      %783 = vmatprep.subr.mxu0 0.0
      %784 = vmatpush1.msra.mxu0 0.0
      %785 = vmatprep.subr.mxu0 0.0
      %786 = vmatpush1.msra.mxu0 0.0
      %787 = vmatprep.subr.mxu0 0.0
      %788 = vmatpush1.msra.mxu0 0.0
      %789 = vmatprep.subr.mxu0 0.0
      %790 = vmatpush1.msra.mxu0 0.0
      %791 = vmatprep.subr.mxu0 0.0
      %792 = vmatpush1.msra.mxu0 0.0
      %793 = vmatprep.subr.mxu0 0.0
      %794 = vmatpush1.msra.mxu0 0.0
      %795 = vmatprep.subr.mxu0 0.0
      %796 = vmatpush1.msra.mxu0 0.0
      %797 = vmatprep.subr.mxu0 0.0
      %798 = vmatpush1.msra.mxu0 0.0
      %799 = vmatprep.subr.mxu0 0.0
      %800 = vmatpush1.msra.mxu0 0.0
      %801 = vmatprep.subr.mxu0 0.0
      %802 = vmatpush1.msra.mxu0 0.0
      %803 = vmatprep.subr.mxu0 0.0
      %804 = vmatpush1.msra.mxu0 0.0
      %805 = vmatprep.subr.mxu0 0.0
      %806 = vmatpush1.msra.mxu0 0.0
      %807 = vmatprep.subr.mxu0 0.0
      %808 = vmatpush1.msra.mxu0 0.0
      %809 = vmatprep.subr.mxu0 0.0
      %810 = vmatpush1.msra.mxu0 0.0
      %811 = vmatprep.subr.mxu0 0.0
      %812 = vmatpush1.msra.mxu0 0.0
      %813 = vmatprep.subr.mxu0 0.0
      %814 = vmatpush1.msra.mxu0 0.0
      %815 = vmatprep.subr.mxu0 0.0
      %816 = vmatpush1.msra.mxu0 0.0
      %817 = vmatprep.subr.mxu0 0.0
      %818 = vmatpush1.msra.mxu0 0.0
      %819 = vmatprep.subr.mxu0 0.0
      %820 = vmatpush1.msra.mxu0 0.0
      %821 = vmatprep.subr.mxu0 0.0
      %822 = vmatpush1.msra.mxu0 0.0
      %823 = vmatprep.subr.mxu0 0.0
      %824 = vmatpush1.msra.mxu0 0.0
      %825 = vmatprep.subr.mxu0 0.0
      %826 = vmatpush1.msra.mxu0 0.0
      %827 = vmatprep.subr.mxu0 0.0
      %828 = vmatpush1.msra.mxu0 0.0
      %829 = vmatprep.mubr.f32.mxu0 0.0
      %830 = vmatmul.mubr.f32.gmra.mrb[0].mxu0 %v750
      %v831 = vpop.f32.mrb[0].mxu0
      %v832 = vadd.f32 0.0, %v831
      %v833 = vpop.f32.mrb[0].mxu0
      %v834 = vadd.f32 0.0, %v833
      %835 = vmatprep.mubr.f32.mxu0 0.0
      %836 = vmatmul.mubr.f32.gmra.mrb[0].mxu0 %v753
      %v837 = vpop.f32.mrb[0].mxu0
      %v838 = vadd.f32 0.0, %v837
      %v839 = vpop.f32.mrb[0].mxu0
      %v840 = vadd.f32 0.0, %v839
      %841 = vmatprep.mubr.f32.mxu0 0.0
      %842 = vmatmul.mubr.f32.gmra.mrb[0].mxu0 %v756
      %v843 = vpop.f32.mrb[0].mxu0
      %v844 = vadd.f32 0.0, %v843
      %v845 = vpop.f32.mrb[0].mxu0
      %v846 = vadd.f32 0.0, %v845
      %847 = vmatprep.mubr.f32.mxu0 0.0
      %848 = vmatmul.mubr.f32.gmra.mrb[0].mxu0 %v759
      %v849 = vpop.f32.mrb[0].mxu0
      %v850 = vadd.f32 0.0, %v849
      %v851 = vpop.f32.mrb[0].mxu0
      %v852 = vadd.f32 0.0, %v851
      %853 = vdwg.mxu0
      %v854 = vadd.f32 %v708, %v832
      %v855 = vadd.f32 %v710, %v834
      %v856 = vadd.f32 %v714, %v838
      %v857 = vadd.f32 %v716, %v840
      %v858 = vadd.f32 %v720, %v844
      %v859 = vadd.f32 %v722, %v846
      %v860 = vadd.f32 %v726, %v850
      %v861 = vadd.f32 %v728, %v852
      %v862 = vld [vmem:[#allocation3] sm:$0xff]
      %v863 = vld [vmem:[#allocation3 + $0x8] sm:$0xff]
      %v864 = vld [vmem:[#allocation3 + $0x10] sm:$0xff]
      %s865 = scalar_lea.vmem %s4, 32
      %v866 = vld [vmem:[%s865] sm:$0xff]
      %v867 = vld [vmem:[%s865 + $0x8] sm:$0xff]
      %v868 = vld [vmem:[%s865 + $0x10] sm:$0xff]
      %v869 = vld [vmem:[%s865 + $0x18] sm:$0xff]
      %873 = vrot.lane.b32.xlu0 %v862, 16
      %v874 = vpop.permute.xlu0 %873
      %875 = vrot.lane.b32.xlu0 %v863, 16
      %v876 = vpop.permute.xlu0 %875
      %877 = vrot.lane.b32.xlu0 %v864, 16
      %v878 = vpop.permute.xlu0 %877
      %v879 = vsel %vm746, %v874, %v876
      %v880 = vsel %vm746, %v876, %v878
      %v884 = vsel %vm519, %v866, 0
      %v887 = vsel %vm519, %v867, 0
      %v890 = vsel %vm519, %v868, 0
      %v893 = vsel %vm519, %v869, 0
      %895 = vmatprep.subr.mxu0 %v880
      %896 = vmatpush1.msra.mxu0 %v879
      %897 = vmatprep.subr.mxu0 0.0
      %898 = vmatpush1.msra.mxu0 0.0
      %899 = vmatprep.subr.mxu0 0.0
      %900 = vmatpush1.msra.mxu0 0.0
      %901 = vmatprep.subr.mxu0 0.0
      %902 = vmatpush1.msra.mxu0 0.0
      %903 = vmatprep.subr.mxu0 0.0
      %904 = vmatpush1.msra.mxu0 0.0
      %905 = vmatprep.subr.mxu0 0.0
      %906 = vmatpush1.msra.mxu0 0.0
      %907 = vmatprep.subr.mxu0 0.0
      %908 = vmatpush1.msra.mxu0 0.0
      %909 = vmatprep.subr.mxu0 0.0
      %910 = vmatpush1.msra.mxu0 0.0
      %911 = vmatprep.subr.mxu0 0.0
      %912 = vmatpush1.msra.mxu0 0.0
      %913 = vmatprep.subr.mxu0 0.0
      %914 = vmatpush1.msra.mxu0 0.0
      %915 = vmatprep.subr.mxu0 0.0
      %916 = vmatpush1.msra.mxu0 0.0
      %917 = vmatprep.subr.mxu0 0.0
      %918 = vmatpush1.msra.mxu0 0.0
      %919 = vmatprep.subr.mxu0 0.0
      %920 = vmatpush1.msra.mxu0 0.0
      %921 = vmatprep.subr.mxu0 0.0
      %922 = vmatpush1.msra.mxu0 0.0
      %923 = vmatprep.subr.mxu0 0.0
      %924 = vmatpush1.msra.mxu0 0.0
      %925 = vmatprep.subr.mxu0 0.0
      %926 = vmatpush1.msra.mxu0 0.0
      %927 = vmatprep.subr.mxu0 0.0
      %928 = vmatpush1.msra.mxu0 0.0
      %929 = vmatprep.subr.mxu0 0.0
      %930 = vmatpush1.msra.mxu0 0.0
      %931 = vmatprep.subr.mxu0 0.0
      %932 = vmatpush1.msra.mxu0 0.0
      %933 = vmatprep.subr.mxu0 0.0
      %934 = vmatpush1.msra.mxu0 0.0
      %935 = vmatprep.subr.mxu0 0.0
      %936 = vmatpush1.msra.mxu0 0.0
      %937 = vmatprep.subr.mxu0 0.0
      %938 = vmatpush1.msra.mxu0 0.0
      %939 = vmatprep.subr.mxu0 0.0
      %940 = vmatpush1.msra.mxu0 0.0
      %941 = vmatprep.subr.mxu0 0.0
      %942 = vmatpush1.msra.mxu0 0.0
      %943 = vmatprep.subr.mxu0 0.0
      %944 = vmatpush1.msra.mxu0 0.0
      %945 = vmatprep.subr.mxu0 0.0
      %946 = vmatpush1.msra.mxu0 0.0
      %947 = vmatprep.subr.mxu0 0.0
      %948 = vmatpush1.msra.mxu0 0.0
      %949 = vmatprep.subr.mxu0 0.0
      %950 = vmatpush1.msra.mxu0 0.0
      %951 = vmatprep.subr.mxu0 0.0
      %952 = vmatpush1.msra.mxu0 0.0
      %953 = vmatprep.subr.mxu0 0.0
      %954 = vmatpush1.msra.mxu0 0.0
      %955 = vmatprep.subr.mxu0 0.0
      %956 = vmatpush1.msra.mxu0 0.0
      %957 = vmatprep.subr.mxu0 0.0
      %958 = vmatpush1.msra.mxu0 0.0
      %959 = vmatprep.mubr.f32.mxu0 0.0
      %960 = vmatmul.mubr.f32.gmra.mrb[0].mxu0 %v884
      %v961 = vpop.f32.mrb[0].mxu0
      %v962 = vadd.f32 0.0, %v961
      %v963 = vpop.f32.mrb[0].mxu0
      %v964 = vadd.f32 0.0, %v963
      %965 = vmatprep.mubr.f32.mxu0 0.0
      %966 = vmatmul.mubr.f32.gmra.mrb[0].mxu0 %v887
      %v967 = vpop.f32.mrb[0].mxu0
      %v968 = vadd.f32 0.0, %v967
      %v969 = vpop.f32.mrb[0].mxu0
      %v970 = vadd.f32 0.0, %v969
      %971 = vmatprep.mubr.f32.mxu0 0.0
      %972 = vmatmul.mubr.f32.gmra.mrb[0].mxu0 %v890
      %v973 = vpop.f32.mrb[0].mxu0
      %v974 = vadd.f32 0.0, %v973
      %v975 = vpop.f32.mrb[0].mxu0
      %v976 = vadd.f32 0.0, %v975
      %977 = vmatprep.mubr.f32.mxu0 0.0
      %978 = vmatmul.mubr.f32.gmra.mrb[0].mxu0 %v893
      %v979 = vpop.f32.mrb[0].mxu0
      %v980 = vadd.f32 0.0, %v979
      %v981 = vpop.f32.mrb[0].mxu0
      %v982 = vadd.f32 0.0, %v981
      %983 = vdwg.mxu0
      %v984 = vadd.f32 %v854, %v962
      %v985 = vadd.f32 %v855, %v964
      %v986 = vadd.f32 %v856, %v968
      %v987 = vadd.f32 %v857, %v970
      %v988 = vadd.f32 %v858, %v974
      %v989 = vadd.f32 %v859, %v976
      %v990 = vadd.f32 %v860, %v980
      %v991 = vadd.f32 %v861, %v982
      %v992 = vld [vmem:[#allocation2] sm:$0xff]
      %v993 = vld [vmem:[#allocation2 + $0x8] sm:$0xf]
      %v994 = vsel %vm462, 1, 0
      %v995 = vsel %vm463, 1, 0
      %vm996 = vcmp.eq.s32.totalorder %v994, 1
      %vm997 = vcmp.eq.s32.totalorder %v995, 1
      %v1000 = vcombine.high %v992, %v992
      %1001 = vrot.lane.b32.xlu0 %v992, 15
      %v1002 = vpop.permute.xlu0 %1001
      %1003 = vrot.lane.b32.xlu0 %v1000, 15
      %v1004 = vpop.permute.xlu0 %1003
      %1005 = vrot.lane.b32.xlu0 %v993, 15
      %v1006 = vpop.permute.xlu0 %1005
      %vm1007 = vcmask 121856
      %v1008 = vsel %vm1007, %v1002, %v1004
      %v1009 = vsel %vm1007, %v1004, %v1006
      %v1012 = vsel %vm996, %v1008, 0.0
      %v1013 = vsel %vm997, %v1009, 0.0
      %s1014 = scalar_lea.vmem %s3, 64
      %v1015 = vld [vmem:[%s1014] sm:$0xff]
      %v1016 = vld [vmem:[%s1014 + $0x8] sm:$0xff]
      %v1017 = vld [vmem:[%s1014 + $0x10] sm:$0xff]
      %v1018 = vld [vmem:[%s1014 + $0x18] sm:$0xff]
      %v1020 = vsel %vm621, %v1015, 0
      %v1023 = vsel %vm621, %v1016, 0
      %v1026 = vsel %vm621, %v1017, 0
      %v1029 = vsel %vm621, %v1018, 0
      %v1032 = vsel %vm634, %v1012, 0
      %v1035 = vsel %vm634, %v1013, 0
      %1037 = vmatprep.subr.mxu0 %v1035
      %1038 = vmatpush1.msra.mxu0 %v1032
      %1039 = vmatprep.subr.mxu0 0.0
      %1040 = vmatpush1.msra.mxu0 0.0
      %1041 = vmatprep.subr.mxu0 0.0
      %1042 = vmatpush1.msra.mxu0 0.0
      %1043 = vmatprep.subr.mxu0 0.0
      %1044 = vmatpush1.msra.mxu0 0.0
      %1045 = vmatprep.subr.mxu0 0.0
      %1046 = vmatpush1.msra.mxu0 0.0
      %1047 = vmatprep.subr.mxu0 0.0
      %1048 = vmatpush1.msra.mxu0 0.0
      %1049 = vmatprep.subr.mxu0 0.0
      %1050 = vmatpush1.msra.mxu0 0.0
      %1051 = vmatprep.subr.mxu0 0.0
      %1052 = vmatpush1.msra.mxu0 0.0
      %1053 = vmatprep.subr.mxu0 0.0
      %1054 = vmatpush1.msra.mxu0 0.0
      %1055 = vmatprep.subr.mxu0 0.0
      %1056 = vmatpush1.msra.mxu0 0.0
      %1057 = vmatprep.subr.mxu0 0.0
      %1058 = vmatpush1.msra.mxu0 0.0
      %1059 = vmatprep.subr.mxu0 0.0
      %1060 = vmatpush1.msra.mxu0 0.0
      %1061 = vmatprep.subr.mxu0 0.0
      %1062 = vmatpush1.msra.mxu0 0.0
      %1063 = vmatprep.subr.mxu0 0.0
      %1064 = vmatpush1.msra.mxu0 0.0
      %1065 = vmatprep.subr.mxu0 0.0
      %1066 = vmatpush1.msra.mxu0 0.0
      %1067 = vmatprep.subr.mxu0 0.0
      %1068 = vmatpush1.msra.mxu0 0.0
      %1069 = vmatprep.subr.mxu0 0.0
      %1070 = vmatpush1.msra.mxu0 0.0
      %1071 = vmatprep.subr.mxu0 0.0
      %1072 = vmatpush1.msra.mxu0 0.0
      %1073 = vmatprep.subr.mxu0 0.0
      %1074 = vmatpush1.msra.mxu0 0.0
      %1075 = vmatprep.subr.mxu0 0.0
      %1076 = vmatpush1.msra.mxu0 0.0
      %1077 = vmatprep.subr.mxu0 0.0
      %1078 = vmatpush1.msra.mxu0 0.0
      %1079 = vmatprep.subr.mxu0 0.0
      %1080 = vmatpush1.msra.mxu0 0.0
      %1081 = vmatprep.subr.mxu0 0.0
      %1082 = vmatpush1.msra.mxu0 0.0
      %1083 = vmatprep.subr.mxu0 0.0
      %1084 = vmatpush1.msra.mxu0 0.0
      %1085 = vmatprep.subr.mxu0 0.0
      %1086 = vmatpush1.msra.mxu0 0.0
      %1087 = vmatprep.subr.mxu0 0.0
      %1088 = vmatpush1.msra.mxu0 0.0
      %1089 = vmatprep.subr.mxu0 0.0
      %1090 = vmatpush1.msra.mxu0 0.0
      %1091 = vmatprep.subr.mxu0 0.0
      %1092 = vmatpush1.msra.mxu0 0.0
      %1093 = vmatprep.subr.mxu0 0.0
      %1094 = vmatpush1.msra.mxu0 0.0
      %1095 = vmatprep.subr.mxu0 0.0
      %1096 = vmatpush1.msra.mxu0 0.0
      %1097 = vmatprep.subr.mxu0 0.0
      %1098 = vmatpush1.msra.mxu0 0.0
      %1099 = vmatprep.subr.mxu0 0.0
      %1100 = vmatpush1.msra.mxu0 0.0
      %1101 = vmatprep.mubr.f32.mxu0 0.0
      %1102 = vmatmul.mubr.f32.gmra.mrb[0].mxu0 %v1020
      %v1103 = vpop.f32.mrb[0].mxu0
      %v1104 = vadd.f32 0.0, %v1103
      %v1105 = vpop.f32.mrb[0].mxu0
      %v1106 = vadd.f32 0.0, %v1105
      %1107 = vmatprep.mubr.f32.mxu0 0.0
      %1108 = vmatmul.mubr.f32.gmra.mrb[0].mxu0 %v1023
      %v1109 = vpop.f32.mrb[0].mxu0
      %v1110 = vadd.f32 0.0, %v1109
      %v1111 = vpop.f32.mrb[0].mxu0
      %v1112 = vadd.f32 0.0, %v1111
      %1113 = vmatprep.mubr.f32.mxu0 0.0
      %1114 = vmatmul.mubr.f32.gmra.mrb[0].mxu0 %v1026
      %v1115 = vpop.f32.mrb[0].mxu0
      %v1116 = vadd.f32 0.0, %v1115
      %v1117 = vpop.f32.mrb[0].mxu0
      %v1118 = vadd.f32 0.0, %v1117
      %1119 = vmatprep.mubr.f32.mxu0 0.0
      %1120 = vmatmul.mubr.f32.gmra.mrb[0].mxu0 %v1029
      %v1121 = vpop.f32.mrb[0].mxu0
      %v1122 = vadd.f32 0.0, %v1121
      %v1123 = vpop.f32.mrb[0].mxu0
      %v1124 = vadd.f32 0.0, %v1123
      %1125 = vdwg.mxu0
      %v1126 = vadd.f32 %v984, %v1104
      %v1127 = vadd.f32 %v985, %v1106
      %v1128 = vadd.f32 %v986, %v1110
      %v1129 = vadd.f32 %v987, %v1112
      %v1130 = vadd.f32 %v988, %v1116
      %v1131 = vadd.f32 %v989, %v1118
      %v1132 = vadd.f32 %v990, %v1122
      %v1133 = vadd.f32 %v991, %v1124
      %v1134 = vld [vmem:[#allocation3] sm:$0xff]
      %v1135 = vld [vmem:[#allocation3 + $0x8] sm:$0xff]
      %v1136 = vld [vmem:[#allocation3 + $0x10] sm:$0xff]
      %1140 = vrot.lane.b32.xlu0 %v1134, 15
      %v1141 = vpop.permute.xlu0 %1140
      %1142 = vrot.lane.b32.xlu0 %v1135, 15
      %v1143 = vpop.permute.xlu0 %1142
      %1144 = vrot.lane.b32.xlu0 %v1136, 15
      %v1145 = vpop.permute.xlu0 %1144
      %v1146 = vsel %vm1007, %v1141, %v1143
      %v1147 = vsel %vm1007, %v1143, %v1145
      %v1150 = vsel %vm996, %v1146, 0.0
      %v1151 = vsel %vm997, %v1147, 0.0
      %s1152 = scalar_lea.vmem %s4, 64
      %v1153 = vld [vmem:[%s1152] sm:$0xff]
      %v1154 = vld [vmem:[%s1152 + $0x8] sm:$0xff]
      %v1155 = vld [vmem:[%s1152 + $0x10] sm:$0xff]
      %v1156 = vld [vmem:[%s1152 + $0x18] sm:$0xff]
      %v1158 = vsel %vm519, %v1153, 0
      %v1161 = vsel %vm519, %v1154, 0
      %v1164 = vsel %vm519, %v1155, 0
      %v1167 = vsel %vm519, %v1156, 0
      %1169 = vmatprep.subr.mxu0 %v1151
      %1170 = vmatpush1.msra.mxu0 %v1150
      %1171 = vmatprep.subr.mxu0 0.0
      %1172 = vmatpush1.msra.mxu0 0.0
      %1173 = vmatprep.subr.mxu0 0.0
      %1174 = vmatpush1.msra.mxu0 0.0
      %1175 = vmatprep.subr.mxu0 0.0
      %1176 = vmatpush1.msra.mxu0 0.0
      %1177 = vmatprep.subr.mxu0 0.0
      %1178 = vmatpush1.msra.mxu0 0.0
      %1179 = vmatprep.subr.mxu0 0.0
      %1180 = vmatpush1.msra.mxu0 0.0
      %1181 = vmatprep.subr.mxu0 0.0
      %1182 = vmatpush1.msra.mxu0 0.0
      %1183 = vmatprep.subr.mxu0 0.0
      %1184 = vmatpush1.msra.mxu0 0.0
      %1185 = vmatprep.subr.mxu0 0.0
      %1186 = vmatpush1.msra.mxu0 0.0
      %1187 = vmatprep.subr.mxu0 0.0
      %1188 = vmatpush1.msra.mxu0 0.0
      %1189 = vmatprep.subr.mxu0 0.0
      %1190 = vmatpush1.msra.mxu0 0.0
      %1191 = vmatprep.subr.mxu0 0.0
      %1192 = vmatpush1.msra.mxu0 0.0
      %1193 = vmatprep.subr.mxu0 0.0
      %1194 = vmatpush1.msra.mxu0 0.0
      %1195 = vmatprep.subr.mxu0 0.0
      %1196 = vmatpush1.msra.mxu0 0.0
      %1197 = vmatprep.subr.mxu0 0.0
      %1198 = vmatpush1.msra.mxu0 0.0
      %1199 = vmatprep.subr.mxu0 0.0
      %1200 = vmatpush1.msra.mxu0 0.0
      %1201 = vmatprep.subr.mxu0 0.0
      %1202 = vmatpush1.msra.mxu0 0.0
      %1203 = vmatprep.subr.mxu0 0.0
      %1204 = vmatpush1.msra.mxu0 0.0
      %1205 = vmatprep.subr.mxu0 0.0
      %1206 = vmatpush1.msra.mxu0 0.0
      %1207 = vmatprep.subr.mxu0 0.0
      %1208 = vmatpush1.msra.mxu0 0.0
      %1209 = vmatprep.subr.mxu0 0.0
      %1210 = vmatpush1.msra.mxu0 0.0
      %1211 = vmatprep.subr.mxu0 0.0
      %1212 = vmatpush1.msra.mxu0 0.0
      %1213 = vmatprep.subr.mxu0 0.0
      %1214 = vmatpush1.msra.mxu0 0.0
      %1215 = vmatprep.subr.mxu0 0.0
      %1216 = vmatpush1.msra.mxu0 0.0
      %1217 = vmatprep.subr.mxu0 0.0
      %1218 = vmatpush1.msra.mxu0 0.0
      %1219 = vmatprep.subr.mxu0 0.0
      %1220 = vmatpush1.msra.mxu0 0.0
      %1221 = vmatprep.subr.mxu0 0.0
      %1222 = vmatpush1.msra.mxu0 0.0
      %1223 = vmatprep.subr.mxu0 0.0
      %1224 = vmatpush1.msra.mxu0 0.0
      %1225 = vmatprep.subr.mxu0 0.0
      %1226 = vmatpush1.msra.mxu0 0.0
      %1227 = vmatprep.subr.mxu0 0.0
      %1228 = vmatpush1.msra.mxu0 0.0
      %1229 = vmatprep.subr.mxu0 0.0
      %1230 = vmatpush1.msra.mxu0 0.0
      %1231 = vmatprep.subr.mxu0 0.0
      %1232 = vmatpush1.msra.mxu0 0.0
      %1233 = vmatprep.mubr.f32.mxu0 0.0
      %1234 = vmatmul.mubr.f32.gmra.mrb[0].mxu0 %v1158
      %v1235 = vpop.f32.mrb[0].mxu0
      %v1236 = vadd.f32 0.0, %v1235
      %v1237 = vpop.f32.mrb[0].mxu0
      %v1238 = vadd.f32 0.0, %v1237
      %1239 = vmatprep.mubr.f32.mxu0 0.0
      %1240 = vmatmul.mubr.f32.gmra.mrb[0].mxu0 %v1161
      %v1241 = vpop.f32.mrb[0].mxu0
      %v1242 = vadd.f32 0.0, %v1241
      %v1243 = vpop.f32.mrb[0].mxu0
      %v1244 = vadd.f32 0.0, %v1243
      %1245 = vmatprep.mubr.f32.mxu0 0.0
      %1246 = vmatmul.mubr.f32.gmra.mrb[0].mxu0 %v1164
      %v1247 = vpop.f32.mrb[0].mxu0
      %v1248 = vadd.f32 0.0, %v1247
      %v1249 = vpop.f32.mrb[0].mxu0
      %v1250 = vadd.f32 0.0, %v1249
      %1251 = vmatprep.mubr.f32.mxu0 0.0
      %1252 = vmatmul.mubr.f32.gmra.mrb[0].mxu0 %v1167
      %v1253 = vpop.f32.mrb[0].mxu0
      %v1254 = vadd.f32 0.0, %v1253
      %v1255 = vpop.f32.mrb[0].mxu0
      %v1256 = vadd.f32 0.0, %v1255
      %1257 = vdwg.mxu0
      %v1258 = vadd.f32 %v1126, %v1236
      %v1259 = vadd.f32 %v1127, %v1238
      %v1260 = vadd.f32 %v1128, %v1242
      %v1261 = vadd.f32 %v1129, %v1244
      %v1262 = vadd.f32 %v1130, %v1248
      %v1263 = vadd.f32 %v1131, %v1250
      %v1264 = vadd.f32 %v1132, %v1254
      %v1265 = vadd.f32 %v1133, %v1256
      %v1266 = vld [vmem:[#allocation2] sm:$0xff]
      %v1267 = vld [vmem:[#allocation2 + $0x8] sm:$0xf]
      %v1270 = vcombine.high %v1266, %v1266
      %1271 = vrot.lane.b32.xlu0 %v1266, 1
      %v1272 = vpop.permute.xlu0 %1271
      %1273 = vrot.lane.b32.xlu0 %v1270, 1
      %v1274 = vpop.permute.xlu0 %1273
      %1275 = vrot.lane.b32.xlu0 %v1267, 1
      %v1276 = vpop.permute.xlu0 %1275
      %vm1277 = vcmask 7168
      %v1278 = vsel %vm1277, %v1272, %v1274
      %v1279 = vsel %vm1277, %v1274, %v1276
      %v1282 = vsel %vm476, %v1278, 0.0
      %v1283 = vsel %vm477, %v1279, 0.0
      %s1284 = scalar_lea.vmem %s3, 96
      %v1285 = vld [vmem:[%s1284] sm:$0xff]
      %v1286 = vld [vmem:[%s1284 + $0x8] sm:$0xff]
      %v1287 = vld [vmem:[%s1284 + $0x10] sm:$0xff]
      %v1288 = vld [vmem:[%s1284 + $0x18] sm:$0xff]
      %v1290 = vsel %vm621, %v1285, 0
      %v1293 = vsel %vm621, %v1286, 0
      %v1296 = vsel %vm621, %v1287, 0
      %v1299 = vsel %vm621, %v1288, 0
      %v1302 = vsel %vm634, %v1282, 0
      %v1305 = vsel %vm634, %v1283, 0
      %1307 = vmatprep.subr.mxu0 %v1305
      %1308 = vmatpush1.msra.mxu0 %v1302
      %1309 = vmatprep.subr.mxu0 0.0
      %1310 = vmatpush1.msra.mxu0 0.0
      %1311 = vmatprep.subr.mxu0 0.0
      %1312 = vmatpush1.msra.mxu0 0.0
      %1313 = vmatprep.subr.mxu0 0.0
      %1314 = vmatpush1.msra.mxu0 0.0
      %1315 = vmatprep.subr.mxu0 0.0
      %1316 = vmatpush1.msra.mxu0 0.0
      %1317 = vmatprep.subr.mxu0 0.0
      %1318 = vmatpush1.msra.mxu0 0.0
      %1319 = vmatprep.subr.mxu0 0.0
      %1320 = vmatpush1.msra.mxu0 0.0
      %1321 = vmatprep.subr.mxu0 0.0
      %1322 = vmatpush1.msra.mxu0 0.0
      %1323 = vmatprep.subr.mxu0 0.0
      %1324 = vmatpush1.msra.mxu0 0.0
      %1325 = vmatprep.subr.mxu0 0.0
      %1326 = vmatpush1.msra.mxu0 0.0
      %1327 = vmatprep.subr.mxu0 0.0
      %1328 = vmatpush1.msra.mxu0 0.0
      %1329 = vmatprep.subr.mxu0 0.0
      %1330 = vmatpush1.msra.mxu0 0.0
      %1331 = vmatprep.subr.mxu0 0.0
      %1332 = vmatpush1.msra.mxu0 0.0
      %1333 = vmatprep.subr.mxu0 0.0
      %1334 = vmatpush1.msra.mxu0 0.0
      %1335 = vmatprep.subr.mxu0 0.0
      %1336 = vmatpush1.msra.mxu0 0.0
      %1337 = vmatprep.subr.mxu0 0.0
      %1338 = vmatpush1.msra.mxu0 0.0
      %1339 = vmatprep.subr.mxu0 0.0
      %1340 = vmatpush1.msra.mxu0 0.0
      %1341 = vmatprep.subr.mxu0 0.0
      %1342 = vmatpush1.msra.mxu0 0.0
      %1343 = vmatprep.subr.mxu0 0.0
      %1344 = vmatpush1.msra.mxu0 0.0
      %1345 = vmatprep.subr.mxu0 0.0
      %1346 = vmatpush1.msra.mxu0 0.0
      %1347 = vmatprep.subr.mxu0 0.0
      %1348 = vmatpush1.msra.mxu0 0.0
      %1349 = vmatprep.subr.mxu0 0.0
      %1350 = vmatpush1.msra.mxu0 0.0
      %1351 = vmatprep.subr.mxu0 0.0
      %1352 = vmatpush1.msra.mxu0 0.0
      %1353 = vmatprep.subr.mxu0 0.0
      %1354 = vmatpush1.msra.mxu0 0.0
      %1355 = vmatprep.subr.mxu0 0.0
      %1356 = vmatpush1.msra.mxu0 0.0
      %1357 = vmatprep.subr.mxu0 0.0
      %1358 = vmatpush1.msra.mxu0 0.0
      %1359 = vmatprep.subr.mxu0 0.0
      %1360 = vmatpush1.msra.mxu0 0.0
      %1361 = vmatprep.subr.mxu0 0.0
      %1362 = vmatpush1.msra.mxu0 0.0
      %1363 = vmatprep.subr.mxu0 0.0
      %1364 = vmatpush1.msra.mxu0 0.0
      %1365 = vmatprep.subr.mxu0 0.0
      %1366 = vmatpush1.msra.mxu0 0.0
      %1367 = vmatprep.subr.mxu0 0.0
      %1368 = vmatpush1.msra.mxu0 0.0
      %1369 = vmatprep.subr.mxu0 0.0
      %1370 = vmatpush1.msra.mxu0 0.0
      %1371 = vmatprep.mubr.f32.mxu0 0.0
      %1372 = vmatmul.mubr.f32.gmra.mrb[0].mxu0 %v1290
      %v1373 = vpop.f32.mrb[0].mxu0
      %v1374 = vadd.f32 0.0, %v1373
      %v1375 = vpop.f32.mrb[0].mxu0
      %v1376 = vadd.f32 0.0, %v1375
      %1377 = vmatprep.mubr.f32.mxu0 0.0
      %1378 = vmatmul.mubr.f32.gmra.mrb[0].mxu0 %v1293
      %v1379 = vpop.f32.mrb[0].mxu0
      %v1380 = vadd.f32 0.0, %v1379
      %v1381 = vpop.f32.mrb[0].mxu0
      %v1382 = vadd.f32 0.0, %v1381
      %1383 = vmatprep.mubr.f32.mxu0 0.0
      %1384 = vmatmul.mubr.f32.gmra.mrb[0].mxu0 %v1296
      %v1385 = vpop.f32.mrb[0].mxu0
      %v1386 = vadd.f32 0.0, %v1385
      %v1387 = vpop.f32.mrb[0].mxu0
      %v1388 = vadd.f32 0.0, %v1387
      %1389 = vmatprep.mubr.f32.mxu0 0.0
      %1390 = vmatmul.mubr.f32.gmra.mrb[0].mxu0 %v1299
      %v1391 = vpop.f32.mrb[0].mxu0
      %v1392 = vadd.f32 0.0, %v1391
      %v1393 = vpop.f32.mrb[0].mxu0
      %v1394 = vadd.f32 0.0, %v1393
      %1395 = vdwg.mxu0
      %v1396 = vadd.f32 %v1258, %v1374
      %v1397 = vadd.f32 %v1259, %v1376
      %v1398 = vadd.f32 %v1260, %v1380
      %v1399 = vadd.f32 %v1261, %v1382
      %v1400 = vadd.f32 %v1262, %v1386
      %v1401 = vadd.f32 %v1263, %v1388
      %v1402 = vadd.f32 %v1264, %v1392
      %v1403 = vadd.f32 %v1265, %v1394
      %v1404 = vld [vmem:[#allocation3] sm:$0xff]
      %v1405 = vld [vmem:[#allocation3 + $0x8] sm:$0xff]
      %v1406 = vld [vmem:[#allocation3 + $0x10] sm:$0xff]
      %1410 = vrot.lane.b32.xlu0 %v1404, 1
      %v1411 = vpop.permute.xlu0 %1410
      %1412 = vrot.lane.b32.xlu0 %v1405, 1
      %v1413 = vpop.permute.xlu0 %1412
      %1414 = vrot.lane.b32.xlu0 %v1406, 1
      %v1415 = vpop.permute.xlu0 %1414
      %v1416 = vsel %vm1277, %v1411, %v1413
      %v1417 = vsel %vm1277, %v1413, %v1415
      %v1420 = vsel %vm476, %v1416, 0.0
      %v1421 = vsel %vm477, %v1417, 0.0
      %s1422 = scalar_lea.vmem %s4, 96
      %v1423 = vld [vmem:[%s1422] sm:$0xff]
      %v1424 = vld [vmem:[%s1422 + $0x8] sm:$0xff]
      %v1425 = vld [vmem:[%s1422 + $0x10] sm:$0xff]
      %v1426 = vld [vmem:[%s1422 + $0x18] sm:$0xff]
      %v1428 = vsel %vm519, %v1423, 0
      %v1431 = vsel %vm519, %v1424, 0
      %v1434 = vsel %vm519, %v1425, 0
      %v1437 = vsel %vm519, %v1426, 0
      %1439 = vmatprep.subr.mxu0 %v1421
      %1440 = vmatpush1.msra.mxu0 %v1420
      %1441 = vmatprep.subr.mxu0 0.0
      %1442 = vmatpush1.msra.mxu0 0.0
      %1443 = vmatprep.subr.mxu0 0.0
      %1444 = vmatpush1.msra.mxu0 0.0
      %1445 = vmatprep.subr.mxu0 0.0
      %1446 = vmatpush1.msra.mxu0 0.0
      %1447 = vmatprep.subr.mxu0 0.0
      %1448 = vmatpush1.msra.mxu0 0.0
      %1449 = vmatprep.subr.mxu0 0.0
      %1450 = vmatpush1.msra.mxu0 0.0
      %1451 = vmatprep.subr.mxu0 0.0
      %1452 = vmatpush1.msra.mxu0 0.0
      %1453 = vmatprep.subr.mxu0 0.0
      %1454 = vmatpush1.msra.mxu0 0.0
      %1455 = vmatprep.subr.mxu0 0.0
      %1456 = vmatpush1.msra.mxu0 0.0
      %1457 = vmatprep.subr.mxu0 0.0
      %1458 = vmatpush1.msra.mxu0 0.0
      %1459 = vmatprep.subr.mxu0 0.0
      %1460 = vmatpush1.msra.mxu0 0.0
      %1461 = vmatprep.subr.mxu0 0.0
      %1462 = vmatpush1.msra.mxu0 0.0
      %1463 = vmatprep.subr.mxu0 0.0
      %1464 = vmatpush1.msra.mxu0 0.0
      %1465 = vmatprep.subr.mxu0 0.0
      %1466 = vmatpush1.msra.mxu0 0.0
      %1467 = vmatprep.subr.mxu0 0.0
      %1468 = vmatpush1.msra.mxu0 0.0
      %1469 = vmatprep.subr.mxu0 0.0
      %1470 = vmatpush1.msra.mxu0 0.0
      %1471 = vmatprep.subr.mxu0 0.0
      %1472 = vmatpush1.msra.mxu0 0.0
      %1473 = vmatprep.subr.mxu0 0.0
      %1474 = vmatpush1.msra.mxu0 0.0
      %1475 = vmatprep.subr.mxu0 0.0
      %1476 = vmatpush1.msra.mxu0 0.0
      %1477 = vmatprep.subr.mxu0 0.0
      %1478 = vmatpush1.msra.mxu0 0.0
      %1479 = vmatprep.subr.mxu0 0.0
      %1480 = vmatpush1.msra.mxu0 0.0
      %1481 = vmatprep.subr.mxu0 0.0
      %1482 = vmatpush1.msra.mxu0 0.0
      %1483 = vmatprep.subr.mxu0 0.0
      %1484 = vmatpush1.msra.mxu0 0.0
      %1485 = vmatprep.subr.mxu0 0.0
      %1486 = vmatpush1.msra.mxu0 0.0
      %1487 = vmatprep.subr.mxu0 0.0
      %1488 = vmatpush1.msra.mxu0 0.0
      %1489 = vmatprep.subr.mxu0 0.0
      %1490 = vmatpush1.msra.mxu0 0.0
      %1491 = vmatprep.subr.mxu0 0.0
      %1492 = vmatpush1.msra.mxu0 0.0
      %1493 = vmatprep.subr.mxu0 0.0
      %1494 = vmatpush1.msra.mxu0 0.0
      %1495 = vmatprep.subr.mxu0 0.0
      %1496 = vmatpush1.msra.mxu0 0.0
      %1497 = vmatprep.subr.mxu0 0.0
      %1498 = vmatpush1.msra.mxu0 0.0
      %1499 = vmatprep.subr.mxu0 0.0
      %1500 = vmatpush1.msra.mxu0 0.0
      %1501 = vmatprep.subr.mxu0 0.0
      %1502 = vmatpush1.msra.mxu0 0.0
      %1503 = vmatprep.mubr.f32.mxu0 0.0
      %1504 = vmatmul.mubr.f32.gmra.mrb[0].mxu0 %v1428
      %v1505 = vpop.f32.mrb[0].mxu0
      %v1506 = vadd.f32 0.0, %v1505
      %v1507 = vpop.f32.mrb[0].mxu0
      %v1508 = vadd.f32 0.0, %v1507
      %1509 = vmatprep.mubr.f32.mxu0 0.0
      %1510 = vmatmul.mubr.f32.gmra.mrb[0].mxu0 %v1431
      %v1511 = vpop.f32.mrb[0].mxu0
      %v1512 = vadd.f32 0.0, %v1511
      %v1513 = vpop.f32.mrb[0].mxu0
      %v1514 = vadd.f32 0.0, %v1513
      %1515 = vmatprep.mubr.f32.mxu0 0.0
      %1516 = vmatmul.mubr.f32.gmra.mrb[0].mxu0 %v1434
      %v1517 = vpop.f32.mrb[0].mxu0
      %v1518 = vadd.f32 0.0, %v1517
      %v1519 = vpop.f32.mrb[0].mxu0
      %v1520 = vadd.f32 0.0, %v1519
      %1521 = vmatprep.mubr.f32.mxu0 0.0
      %1522 = vmatmul.mubr.f32.gmra.mrb[0].mxu0 %v1437
      %v1523 = vpop.f32.mrb[0].mxu0
      %v1524 = vadd.f32 0.0, %v1523
      %v1525 = vpop.f32.mrb[0].mxu0
      %v1526 = vadd.f32 0.0, %v1525
      %1527 = vdwg.mxu0
      %v1528 = vadd.f32 %v1396, %v1506
      %v1529 = vadd.f32 %v1397, %v1508
      %v1530 = vadd.f32 %v1398, %v1512
      %v1531 = vadd.f32 %v1399, %v1514
      %v1532 = vadd.f32 %v1400, %v1518
      %v1533 = vadd.f32 %v1401, %v1520
      %v1534 = vadd.f32 %v1402, %v1524
      %v1535 = vadd.f32 %v1403, %v1526
      %v1536 = vld [vmem:[#allocation2 + $0x4] sm:$0xff]
      %s1537 = scalar_lea.vmem %s3, 128
      %v1538 = vld [vmem:[%s1537] sm:$0xff]
      %v1539 = vld [vmem:[%s1537 + $0x8] sm:$0xff]
      %v1540 = vld [vmem:[%s1537 + $0x10] sm:$0xff]
      %v1541 = vld [vmem:[%s1537 + $0x18] sm:$0xff]
      %v1543 = vcombine.high %v1536, %v1536
      %v1545 = vsel %vm621, %v1538, 0
      %v1548 = vsel %vm621, %v1539, 0
      %v1551 = vsel %vm621, %v1540, 0
      %v1554 = vsel %vm621, %v1541, 0
      %v1556 = vsel %vm634, %v1536, 0
      %v1558 = vsel %vm634, %v1543, 0
      %1560 = vmatprep.subr.mxu0 %v1558
      %1561 = vmatpush1.msra.mxu0 %v1556
      %1562 = vmatprep.subr.mxu0 0.0
      %1563 = vmatpush1.msra.mxu0 0.0
      %1564 = vmatprep.subr.mxu0 0.0
      %1565 = vmatpush1.msra.mxu0 0.0
      %1566 = vmatprep.subr.mxu0 0.0
      %1567 = vmatpush1.msra.mxu0 0.0
      %1568 = vmatprep.subr.mxu0 0.0
      %1569 = vmatpush1.msra.mxu0 0.0
      %1570 = vmatprep.subr.mxu0 0.0
      %1571 = vmatpush1.msra.mxu0 0.0
      %1572 = vmatprep.subr.mxu0 0.0
      %1573 = vmatpush1.msra.mxu0 0.0
      %1574 = vmatprep.subr.mxu0 0.0
      %1575 = vmatpush1.msra.mxu0 0.0
      %1576 = vmatprep.subr.mxu0 0.0
      %1577 = vmatpush1.msra.mxu0 0.0
      %1578 = vmatprep.subr.mxu0 0.0
      %1579 = vmatpush1.msra.mxu0 0.0
      %1580 = vmatprep.subr.mxu0 0.0
      %1581 = vmatpush1.msra.mxu0 0.0
      %1582 = vmatprep.subr.mxu0 0.0
      %1583 = vmatpush1.msra.mxu0 0.0
      %1584 = vmatprep.subr.mxu0 0.0
      %1585 = vmatpush1.msra.mxu0 0.0
      %1586 = vmatprep.subr.mxu0 0.0
      %1587 = vmatpush1.msra.mxu0 0.0
      %1588 = vmatprep.subr.mxu0 0.0
      %1589 = vmatpush1.msra.mxu0 0.0
      %1590 = vmatprep.subr.mxu0 0.0
      %1591 = vmatpush1.msra.mxu0 0.0
      %1592 = vmatprep.subr.mxu0 0.0
      %1593 = vmatpush1.msra.mxu0 0.0
      %1594 = vmatprep.subr.mxu0 0.0
      %1595 = vmatpush1.msra.mxu0 0.0
      %1596 = vmatprep.subr.mxu0 0.0
      %1597 = vmatpush1.msra.mxu0 0.0
      %1598 = vmatprep.subr.mxu0 0.0
      %1599 = vmatpush1.msra.mxu0 0.0
      %1600 = vmatprep.subr.mxu0 0.0
      %1601 = vmatpush1.msra.mxu0 0.0
      %1602 = vmatprep.subr.mxu0 0.0
      %1603 = vmatpush1.msra.mxu0 0.0
      %1604 = vmatprep.subr.mxu0 0.0
      %1605 = vmatpush1.msra.mxu0 0.0
      %1606 = vmatprep.subr.mxu0 0.0
      %1607 = vmatpush1.msra.mxu0 0.0
      %1608 = vmatprep.subr.mxu0 0.0
      %1609 = vmatpush1.msra.mxu0 0.0
      %1610 = vmatprep.subr.mxu0 0.0
      %1611 = vmatpush1.msra.mxu0 0.0
      %1612 = vmatprep.subr.mxu0 0.0
      %1613 = vmatpush1.msra.mxu0 0.0
      %1614 = vmatprep.subr.mxu0 0.0
      %1615 = vmatpush1.msra.mxu0 0.0
      %1616 = vmatprep.subr.mxu0 0.0
      %1617 = vmatpush1.msra.mxu0 0.0
      %1618 = vmatprep.subr.mxu0 0.0
      %1619 = vmatpush1.msra.mxu0 0.0
      %1620 = vmatprep.subr.mxu0 0.0
      %1621 = vmatpush1.msra.mxu0 0.0
      %1622 = vmatprep.subr.mxu0 0.0
      %1623 = vmatpush1.msra.mxu0 0.0
      %1624 = vmatprep.mubr.f32.mxu0 0.0
      %1625 = vmatmul.mubr.f32.gmra.mrb[0].mxu0 %v1545
      %v1626 = vpop.f32.mrb[0].mxu0
      %v1627 = vadd.f32 0.0, %v1626
      %v1628 = vpop.f32.mrb[0].mxu0
      %v1629 = vadd.f32 0.0, %v1628
      %1630 = vmatprep.mubr.f32.mxu0 0.0
      %1631 = vmatmul.mubr.f32.gmra.mrb[0].mxu0 %v1548
      %v1632 = vpop.f32.mrb[0].mxu0
      %v1633 = vadd.f32 0.0, %v1632
      %v1634 = vpop.f32.mrb[0].mxu0
      %v1635 = vadd.f32 0.0, %v1634
      %1636 = vmatprep.mubr.f32.mxu0 0.0
      %1637 = vmatmul.mubr.f32.gmra.mrb[0].mxu0 %v1551
      %v1638 = vpop.f32.mrb[0].mxu0
      %v1639 = vadd.f32 0.0, %v1638
      %v1640 = vpop.f32.mrb[0].mxu0
      %v1641 = vadd.f32 0.0, %v1640
      %1642 = vmatprep.mubr.f32.mxu0 0.0
      %1643 = vmatmul.mubr.f32.gmra.mrb[0].mxu0 %v1554
      %v1644 = vpop.f32.mrb[0].mxu0
      %v1645 = vadd.f32 0.0, %v1644
      %v1646 = vpop.f32.mrb[0].mxu0
      %v1647 = vadd.f32 0.0, %v1646
      %1648 = vdwg.mxu0
      %v1649 = vadd.f32 %v1528, %v1627
      %v1650 = vadd.f32 %v1529, %v1629
      %v1651 = vadd.f32 %v1530, %v1633
      %v1652 = vadd.f32 %v1531, %v1635
      %v1653 = vadd.f32 %v1532, %v1639
      %v1654 = vadd.f32 %v1533, %v1641
      %v1655 = vadd.f32 %v1534, %v1645
      %v1656 = vadd.f32 %v1535, %v1647
      %v1657 = vld [vmem:[#allocation3 + $0x8] sm:$0xff]
      %v1658 = vld [vmem:[#allocation3 + $0x10] sm:$0xff]
      %s1659 = scalar_lea.vmem %s4, 128
      %v1660 = vld [vmem:[%s1659] sm:$0xff]
      %v1661 = vld [vmem:[%s1659 + $0x8] sm:$0xff]
      %v1662 = vld [vmem:[%s1659 + $0x10] sm:$0xff]
      %v1663 = vld [vmem:[%s1659 + $0x18] sm:$0xff]
      %v1665 = vsel %vm519, %v1660, 0
      %v1668 = vsel %vm519, %v1661, 0
      %v1671 = vsel %vm519, %v1662, 0
      %v1674 = vsel %vm519, %v1663, 0
      %1676 = vmatprep.subr.mxu0 %v1658
      %1677 = vmatpush1.msra.mxu0 %v1657
      %1678 = vmatprep.subr.mxu0 0.0
      %1679 = vmatpush1.msra.mxu0 0.0
      %1680 = vmatprep.subr.mxu0 0.0
      %1681 = vmatpush1.msra.mxu0 0.0
      %1682 = vmatprep.subr.mxu0 0.0
      %1683 = vmatpush1.msra.mxu0 0.0
      %1684 = vmatprep.subr.mxu0 0.0
      %1685 = vmatpush1.msra.mxu0 0.0
      %1686 = vmatprep.subr.mxu0 0.0
      %1687 = vmatpush1.msra.mxu0 0.0
      %1688 = vmatprep.subr.mxu0 0.0
      %1689 = vmatpush1.msra.mxu0 0.0
      %1690 = vmatprep.subr.mxu0 0.0
      %1691 = vmatpush1.msra.mxu0 0.0
      %1692 = vmatprep.subr.mxu0 0.0
      %1693 = vmatpush1.msra.mxu0 0.0
      %1694 = vmatprep.subr.mxu0 0.0
      %1695 = vmatpush1.msra.mxu0 0.0
      %1696 = vmatprep.subr.mxu0 0.0
      %1697 = vmatpush1.msra.mxu0 0.0
      %1698 = vmatprep.subr.mxu0 0.0
      %1699 = vmatpush1.msra.mxu0 0.0
      %1700 = vmatprep.subr.mxu0 0.0
      %1701 = vmatpush1.msra.mxu0 0.0
      %1702 = vmatprep.subr.mxu0 0.0
      %1703 = vmatpush1.msra.mxu0 0.0
      %1704 = vmatprep.subr.mxu0 0.0
      %1705 = vmatpush1.msra.mxu0 0.0
      %1706 = vmatprep.subr.mxu0 0.0
      %1707 = vmatpush1.msra.mxu0 0.0
      %1708 = vmatprep.subr.mxu0 0.0
      %1709 = vmatpush1.msra.mxu0 0.0
      %1710 = vmatprep.subr.mxu0 0.0
      %1711 = vmatpush1.msra.mxu0 0.0
      %1712 = vmatprep.subr.mxu0 0.0
      %1713 = vmatpush1.msra.mxu0 0.0
      %1714 = vmatprep.subr.mxu0 0.0
      %1715 = vmatpush1.msra.mxu0 0.0
      %1716 = vmatprep.subr.mxu0 0.0
      %1717 = vmatpush1.msra.mxu0 0.0
      %1718 = vmatprep.subr.mxu0 0.0
      %1719 = vmatpush1.msra.mxu0 0.0
      %1720 = vmatprep.subr.mxu0 0.0
      %1721 = vmatpush1.msra.mxu0 0.0
      %1722 = vmatprep.subr.mxu0 0.0
      %1723 = vmatpush1.msra.mxu0 0.0
      %1724 = vmatprep.subr.mxu0 0.0
      %1725 = vmatpush1.msra.mxu0 0.0
      %1726 = vmatprep.subr.mxu0 0.0
      %1727 = vmatpush1.msra.mxu0 0.0
      %1728 = vmatprep.subr.mxu0 0.0
      %1729 = vmatpush1.msra.mxu0 0.0
      %1730 = vmatprep.subr.mxu0 0.0
      %1731 = vmatpush1.msra.mxu0 0.0
      %1732 = vmatprep.subr.mxu0 0.0
      %1733 = vmatpush1.msra.mxu0 0.0
      %1734 = vmatprep.subr.mxu0 0.0
      %1735 = vmatpush1.msra.mxu0 0.0
      %1736 = vmatprep.subr.mxu0 0.0
      %1737 = vmatpush1.msra.mxu0 0.0
      %1738 = vmatprep.subr.mxu0 0.0
      %1739 = vmatpush1.msra.mxu0 0.0
      %1740 = vmatprep.mubr.f32.mxu0 0.0
      %1741 = vmatmul.mubr.f32.gmra.mrb[0].mxu0 %v1665
      %v1742 = vpop.f32.mrb[0].mxu0
      %v1743 = vadd.f32 0.0, %v1742
      %v1744 = vpop.f32.mrb[0].mxu0
      %v1745 = vadd.f32 0.0, %v1744
      %1746 = vmatprep.mubr.f32.mxu0 0.0
      %1747 = vmatmul.mubr.f32.gmra.mrb[0].mxu0 %v1668
      %v1748 = vpop.f32.mrb[0].mxu0
      %v1749 = vadd.f32 0.0, %v1748
      %v1750 = vpop.f32.mrb[0].mxu0
      %v1751 = vadd.f32 0.0, %v1750
      %1752 = vmatprep.mubr.f32.mxu0 0.0
      %1753 = vmatmul.mubr.f32.gmra.mrb[0].mxu0 %v1671
      %v1754 = vpop.f32.mrb[0].mxu0
      %v1755 = vadd.f32 0.0, %v1754
      %v1756 = vpop.f32.mrb[0].mxu0
      %v1757 = vadd.f32 0.0, %v1756
      %1758 = vmatprep.mubr.f32.mxu0 0.0
      %1759 = vmatmul.mubr.f32.gmra.mrb[0].mxu0 %v1674
      %v1760 = vpop.f32.mrb[0].mxu0
      %v1761 = vadd.f32 0.0, %v1760
      %v1762 = vpop.f32.mrb[0].mxu0
      %v1763 = vadd.f32 0.0, %v1762
      %1764 = vdwg.mxu0
      %v1765 = vadd.f32 %v1649, %v1743
      %v1766 = vadd.f32 %v1650, %v1745
      %v1767 = vadd.f32 %v1651, %v1749
      %v1768 = vadd.f32 %v1652, %v1751
      %v1769 = vadd.f32 %v1653, %v1755
      %v1770 = vadd.f32 %v1654, %v1757
      %v1771 = vadd.f32 %v1655, %v1761
      %v1772 = vadd.f32 %v1656, %v1763
      %v1773 = vld [vmem:[#allocation2 + $0x4] sm:$0xff]
      %v1774 = vld [vmem:[#allocation2 + $0xc] sm:$0xf]
      %v1777 = vcombine.high %v1773, %v1773
      %1778 = vrot.lane.b32.xlu0 %v1773, 127
      %v1779 = vpop.permute.xlu0 %1778
      %1780 = vrot.lane.b32.xlu0 %v1777, 127
      %v1781 = vpop.permute.xlu0 %1780
      %1782 = vrot.lane.b32.xlu0 %v1774, 127
      %v1783 = vpop.permute.xlu0 %1782
      %vm1784 = vcmask 1039360
      %v1785 = vsel %vm1784, %v1779, %v1781
      %v1786 = vsel %vm1784, %v1781, %v1783
      %v1789 = vsel %vm996, %v1785, 0.0
      %v1790 = vsel %vm997, %v1786, 0.0
      %s1791 = scalar_lea.vmem %s3, 160
      %v1792 = vld [vmem:[%s1791] sm:$0xff]
      %v1793 = vld [vmem:[%s1791 + $0x8] sm:$0xff]
      %v1794 = vld [vmem:[%s1791 + $0x10] sm:$0xff]
      %v1795 = vld [vmem:[%s1791 + $0x18] sm:$0xff]
      %v1797 = vsel %vm621, %v1792, 0
      %v1800 = vsel %vm621, %v1793, 0
      %v1803 = vsel %vm621, %v1794, 0
      %v1806 = vsel %vm621, %v1795, 0
      %v1809 = vsel %vm634, %v1789, 0
      %v1812 = vsel %vm634, %v1790, 0
      %1814 = vmatprep.subr.mxu0 %v1812
      %1815 = vmatpush1.msra.mxu0 %v1809
      %1816 = vmatprep.subr.mxu0 0.0
      %1817 = vmatpush1.msra.mxu0 0.0
      %1818 = vmatprep.subr.mxu0 0.0
      %1819 = vmatpush1.msra.mxu0 0.0
      %1820 = vmatprep.subr.mxu0 0.0
      %1821 = vmatpush1.msra.mxu0 0.0
      %1822 = vmatprep.subr.mxu0 0.0
      %1823 = vmatpush1.msra.mxu0 0.0
      %1824 = vmatprep.subr.mxu0 0.0
      %1825 = vmatpush1.msra.mxu0 0.0
      %1826 = vmatprep.subr.mxu0 0.0
      %1827 = vmatpush1.msra.mxu0 0.0
      %1828 = vmatprep.subr.mxu0 0.0
      %1829 = vmatpush1.msra.mxu0 0.0
      %1830 = vmatprep.subr.mxu0 0.0
      %1831 = vmatpush1.msra.mxu0 0.0
      %1832 = vmatprep.subr.mxu0 0.0
      %1833 = vmatpush1.msra.mxu0 0.0
      %1834 = vmatprep.subr.mxu0 0.0
      %1835 = vmatpush1.msra.mxu0 0.0
      %1836 = vmatprep.subr.mxu0 0.0
      %1837 = vmatpush1.msra.mxu0 0.0
      %1838 = vmatprep.subr.mxu0 0.0
      %1839 = vmatpush1.msra.mxu0 0.0
      %1840 = vmatprep.subr.mxu0 0.0
      %1841 = vmatpush1.msra.mxu0 0.0
      %1842 = vmatprep.subr.mxu0 0.0
      %1843 = vmatpush1.msra.mxu0 0.0
      %1844 = vmatprep.subr.mxu0 0.0
      %1845 = vmatpush1.msra.mxu0 0.0
      %1846 = vmatprep.subr.mxu0 0.0
      %1847 = vmatpush1.msra.mxu0 0.0
      %1848 = vmatprep.subr.mxu0 0.0
      %1849 = vmatpush1.msra.mxu0 0.0
      %1850 = vmatprep.subr.mxu0 0.0
      %1851 = vmatpush1.msra.mxu0 0.0
      %1852 = vmatprep.subr.mxu0 0.0
      %1853 = vmatpush1.msra.mxu0 0.0
      %1854 = vmatprep.subr.mxu0 0.0
      %1855 = vmatpush1.msra.mxu0 0.0
      %1856 = vmatprep.subr.mxu0 0.0
      %1857 = vmatpush1.msra.mxu0 0.0
      %1858 = vmatprep.subr.mxu0 0.0
      %1859 = vmatpush1.msra.mxu0 0.0
      %1860 = vmatprep.subr.mxu0 0.0
      %1861 = vmatpush1.msra.mxu0 0.0
      %1862 = vmatprep.subr.mxu0 0.0
      %1863 = vmatpush1.msra.mxu0 0.0
      %1864 = vmatprep.subr.mxu0 0.0
      %1865 = vmatpush1.msra.mxu0 0.0
      %1866 = vmatprep.subr.mxu0 0.0
      %1867 = vmatpush1.msra.mxu0 0.0
      %1868 = vmatprep.subr.mxu0 0.0
      %1869 = vmatpush1.msra.mxu0 0.0
      %1870 = vmatprep.subr.mxu0 0.0
      %1871 = vmatpush1.msra.mxu0 0.0
      %1872 = vmatprep.subr.mxu0 0.0
      %1873 = vmatpush1.msra.mxu0 0.0
      %1874 = vmatprep.subr.mxu0 0.0
      %1875 = vmatpush1.msra.mxu0 0.0
      %1876 = vmatprep.subr.mxu0 0.0
      %1877 = vmatpush1.msra.mxu0 0.0
      %1878 = vmatprep.mubr.f32.mxu0 0.0
      %1879 = vmatmul.mubr.f32.gmra.mrb[0].mxu0 %v1797
      %v1880 = vpop.f32.mrb[0].mxu0
      %v1881 = vadd.f32 0.0, %v1880
      %v1882 = vpop.f32.mrb[0].mxu0
      %v1883 = vadd.f32 0.0, %v1882
      %1884 = vmatprep.mubr.f32.mxu0 0.0
      %1885 = vmatmul.mubr.f32.gmra.mrb[0].mxu0 %v1800
      %v1886 = vpop.f32.mrb[0].mxu0
      %v1887 = vadd.f32 0.0, %v1886
      %v1888 = vpop.f32.mrb[0].mxu0
      %v1889 = vadd.f32 0.0, %v1888
      %1890 = vmatprep.mubr.f32.mxu0 0.0
      %1891 = vmatmul.mubr.f32.gmra.mrb[0].mxu0 %v1803
      %v1892 = vpop.f32.mrb[0].mxu0
      %v1893 = vadd.f32 0.0, %v1892
      %v1894 = vpop.f32.mrb[0].mxu0
      %v1895 = vadd.f32 0.0, %v1894
      %1896 = vmatprep.mubr.f32.mxu0 0.0
      %1897 = vmatmul.mubr.f32.gmra.mrb[0].mxu0 %v1806
      %v1898 = vpop.f32.mrb[0].mxu0
      %v1899 = vadd.f32 0.0, %v1898
      %v1900 = vpop.f32.mrb[0].mxu0
      %v1901 = vadd.f32 0.0, %v1900
      %1902 = vdwg.mxu0
      %v1903 = vadd.f32 %v1765, %v1881
      %v1904 = vadd.f32 %v1766, %v1883
      %v1905 = vadd.f32 %v1767, %v1887
      %v1906 = vadd.f32 %v1768, %v1889
      %v1907 = vadd.f32 %v1769, %v1893
      %v1908 = vadd.f32 %v1770, %v1895
      %v1909 = vadd.f32 %v1771, %v1899
      %v1910 = vadd.f32 %v1772, %v1901
      %v1911 = vld [vmem:[#allocation3 + $0x8] sm:$0xff]
      %v1912 = vld [vmem:[#allocation3 + $0x10] sm:$0xff]
      %v1913 = vld [vmem:[#allocation3 + $0x18] sm:$0xff]
      %1917 = vrot.lane.b32.xlu0 %v1911, 127
      %v1918 = vpop.permute.xlu0 %1917
      %1919 = vrot.lane.b32.xlu0 %v1912, 127
      %v1920 = vpop.permute.xlu0 %1919
      %1921 = vrot.lane.b32.xlu0 %v1913, 127
      %v1922 = vpop.permute.xlu0 %1921
      %v1923 = vsel %vm1784, %v1918, %v1920
      %v1924 = vsel %vm1784, %v1920, %v1922
      %v1927 = vsel %vm996, %v1923, 0.0
      %v1928 = vsel %vm997, %v1924, 0.0
      %s1929 = scalar_lea.vmem %s4, 160
      %v1930 = vld [vmem:[%s1929] sm:$0xff]
      %v1931 = vld [vmem:[%s1929 + $0x8] sm:$0xff]
      %v1932 = vld [vmem:[%s1929 + $0x10] sm:$0xff]
      %v1933 = vld [vmem:[%s1929 + $0x18] sm:$0xff]
      %v1935 = vsel %vm519, %v1930, 0
      %v1938 = vsel %vm519, %v1931, 0
      %v1941 = vsel %vm519, %v1932, 0
      %v1944 = vsel %vm519, %v1933, 0
      %1946 = vmatprep.subr.mxu0 %v1928
      %1947 = vmatpush1.msra.mxu0 %v1927
      %1948 = vmatprep.subr.mxu0 0.0
      %1949 = vmatpush1.msra.mxu0 0.0
      %1950 = vmatprep.subr.mxu0 0.0
      %1951 = vmatpush1.msra.mxu0 0.0
      %1952 = vmatprep.subr.mxu0 0.0
      %1953 = vmatpush1.msra.mxu0 0.0
      %1954 = vmatprep.subr.mxu0 0.0
      %1955 = vmatpush1.msra.mxu0 0.0
      %1956 = vmatprep.subr.mxu0 0.0
      %1957 = vmatpush1.msra.mxu0 0.0
      %1958 = vmatprep.subr.mxu0 0.0
      %1959 = vmatpush1.msra.mxu0 0.0
      %1960 = vmatprep.subr.mxu0 0.0
      %1961 = vmatpush1.msra.mxu0 0.0
      %1962 = vmatprep.subr.mxu0 0.0
      %1963 = vmatpush1.msra.mxu0 0.0
      %1964 = vmatprep.subr.mxu0 0.0
      %1965 = vmatpush1.msra.mxu0 0.0
      %1966 = vmatprep.subr.mxu0 0.0
      %1967 = vmatpush1.msra.mxu0 0.0
      %1968 = vmatprep.subr.mxu0 0.0
      %1969 = vmatpush1.msra.mxu0 0.0
      %1970 = vmatprep.subr.mxu0 0.0
      %1971 = vmatpush1.msra.mxu0 0.0
      %1972 = vmatprep.subr.mxu0 0.0
      %1973 = vmatpush1.msra.mxu0 0.0
      %1974 = vmatprep.subr.mxu0 0.0
      %1975 = vmatpush1.msra.mxu0 0.0
      %1976 = vmatprep.subr.mxu0 0.0
      %1977 = vmatpush1.msra.mxu0 0.0
      %1978 = vmatprep.subr.mxu0 0.0
      %1979 = vmatpush1.msra.mxu0 0.0
      %1980 = vmatprep.subr.mxu0 0.0
      %1981 = vmatpush1.msra.mxu0 0.0
      %1982 = vmatprep.subr.mxu0 0.0
      %1983 = vmatpush1.msra.mxu0 0.0
      %1984 = vmatprep.subr.mxu0 0.0
      %1985 = vmatpush1.msra.mxu0 0.0
      %1986 = vmatprep.subr.mxu0 0.0
      %1987 = vmatpush1.msra.mxu0 0.0
      %1988 = vmatprep.subr.mxu0 0.0
      %1989 = vmatpush1.msra.mxu0 0.0
      %1990 = vmatprep.subr.mxu0 0.0
      %1991 = vmatpush1.msra.mxu0 0.0
      %1992 = vmatprep.subr.mxu0 0.0
      %1993 = vmatpush1.msra.mxu0 0.0
      %1994 = vmatprep.subr.mxu0 0.0
      %1995 = vmatpush1.msra.mxu0 0.0
      %1996 = vmatprep.subr.mxu0 0.0
      %1997 = vmatpush1.msra.mxu0 0.0
      %1998 = vmatprep.subr.mxu0 0.0
      %1999 = vmatpush1.msra.mxu0 0.0
      %2000 = vmatprep.subr.mxu0 0.0
      %2001 = vmatpush1.msra.mxu0 0.0
      %2002 = vmatprep.subr.mxu0 0.0
      %2003 = vmatpush1.msra.mxu0 0.0
      %2004 = vmatprep.subr.mxu0 0.0
      %2005 = vmatpush1.msra.mxu0 0.0
      %2006 = vmatprep.subr.mxu0 0.0
      %2007 = vmatpush1.msra.mxu0 0.0
      %2008 = vmatprep.subr.mxu0 0.0
      %2009 = vmatpush1.msra.mxu0 0.0
      %2010 = vmatprep.mubr.f32.mxu0 0.0
      %2011 = vmatmul.mubr.f32.gmra.mrb[0].mxu0 %v1935
      %v2012 = vpop.f32.mrb[0].mxu0
      %v2013 = vadd.f32 0.0, %v2012
      %v2014 = vpop.f32.mrb[0].mxu0
      %v2015 = vadd.f32 0.0, %v2014
      %2016 = vmatprep.mubr.f32.mxu0 0.0
      %2017 = vmatmul.mubr.f32.gmra.mrb[0].mxu0 %v1938
      %v2018 = vpop.f32.mrb[0].mxu0
      %v2019 = vadd.f32 0.0, %v2018
      %v2020 = vpop.f32.mrb[0].mxu0
      %v2021 = vadd.f32 0.0, %v2020
      %2022 = vmatprep.mubr.f32.mxu0 0.0
      %2023 = vmatmul.mubr.f32.gmra.mrb[0].mxu0 %v1941
      %v2024 = vpop.f32.mrb[0].mxu0
      %v2025 = vadd.f32 0.0, %v2024
      %v2026 = vpop.f32.mrb[0].mxu0
      %v2027 = vadd.f32 0.0, %v2026
      %2028 = vmatprep.mubr.f32.mxu0 0.0
      %2029 = vmatmul.mubr.f32.gmra.mrb[0].mxu0 %v1944
      %v2030 = vpop.f32.mrb[0].mxu0
      %v2031 = vadd.f32 0.0, %v2030
      %v2032 = vpop.f32.mrb[0].mxu0
      %v2033 = vadd.f32 0.0, %v2032
      %2034 = vdwg.mxu0
      %v2035 = vadd.f32 %v1903, %v2013
      %v2036 = vadd.f32 %v1904, %v2015
      %v2037 = vadd.f32 %v1905, %v2019
      %v2038 = vadd.f32 %v1906, %v2021
      %v2039 = vadd.f32 %v1907, %v2025
      %v2040 = vadd.f32 %v1908, %v2027
      %v2041 = vadd.f32 %v1909, %v2031
      %v2042 = vadd.f32 %v1910, %v2033
      %v2043 = vld [vmem:[#allocation2 + $0x4] sm:$0xff]
      %v2044 = vld [vmem:[#allocation2 + $0xc] sm:$0xf]
      %v2047 = vcombine.high %v2043, %v2043
      %2048 = vrot.lane.b32.xlu0 %v2043, 113
      %v2049 = vpop.permute.xlu0 %2048
      %2050 = vrot.lane.b32.xlu0 %v2047, 113
      %v2051 = vpop.permute.xlu0 %2050
      %2052 = vrot.lane.b32.xlu0 %v2044, 113
      %v2053 = vpop.permute.xlu0 %2052
      %vm2054 = vcmask 924672
      %v2055 = vsel %vm2054, %v2049, %v2051
      %v2056 = vsel %vm2054, %v2051, %v2053
      %v2059 = vsel %vm476, %v2055, 0.0
      %v2060 = vsel %vm477, %v2056, 0.0
      %s2061 = scalar_lea.vmem %s3, 192
      %v2062 = vld [vmem:[%s2061] sm:$0xff]
      %v2063 = vld [vmem:[%s2061 + $0x8] sm:$0xff]
      %v2064 = vld [vmem:[%s2061 + $0x10] sm:$0xff]
      %v2065 = vld [vmem:[%s2061 + $0x18] sm:$0xff]
      %v2067 = vsel %vm621, %v2062, 0
      %v2070 = vsel %vm621, %v2063, 0
      %v2073 = vsel %vm621, %v2064, 0
      %v2076 = vsel %vm621, %v2065, 0
      %v2079 = vsel %vm634, %v2059, 0
      %v2082 = vsel %vm634, %v2060, 0
      %2084 = vmatprep.subr.mxu0 %v2082
      %2085 = vmatpush1.msra.mxu0 %v2079
      %2086 = vmatprep.subr.mxu0 0.0
      %2087 = vmatpush1.msra.mxu0 0.0
      %2088 = vmatprep.subr.mxu0 0.0
      %2089 = vmatpush1.msra.mxu0 0.0
      %2090 = vmatprep.subr.mxu0 0.0
      %2091 = vmatpush1.msra.mxu0 0.0
      %2092 = vmatprep.subr.mxu0 0.0
      %2093 = vmatpush1.msra.mxu0 0.0
      %2094 = vmatprep.subr.mxu0 0.0
      %2095 = vmatpush1.msra.mxu0 0.0
      %2096 = vmatprep.subr.mxu0 0.0
      %2097 = vmatpush1.msra.mxu0 0.0
      %2098 = vmatprep.subr.mxu0 0.0
      %2099 = vmatpush1.msra.mxu0 0.0
      %2100 = vmatprep.subr.mxu0 0.0
      %2101 = vmatpush1.msra.mxu0 0.0
      %2102 = vmatprep.subr.mxu0 0.0
      %2103 = vmatpush1.msra.mxu0 0.0
      %2104 = vmatprep.subr.mxu0 0.0
      %2105 = vmatpush1.msra.mxu0 0.0
      %2106 = vmatprep.subr.mxu0 0.0
      %2107 = vmatpush1.msra.mxu0 0.0
      %2108 = vmatprep.subr.mxu0 0.0
      %2109 = vmatpush1.msra.mxu0 0.0
      %2110 = vmatprep.subr.mxu0 0.0
      %2111 = vmatpush1.msra.mxu0 0.0
      %2112 = vmatprep.subr.mxu0 0.0
      %2113 = vmatpush1.msra.mxu0 0.0
      %2114 = vmatprep.subr.mxu0 0.0
      %2115 = vmatpush1.msra.mxu0 0.0
      %2116 = vmatprep.subr.mxu0 0.0
      %2117 = vmatpush1.msra.mxu0 0.0
      %2118 = vmatprep.subr.mxu0 0.0
      %2119 = vmatpush1.msra.mxu0 0.0
      %2120 = vmatprep.subr.mxu0 0.0
      %2121 = vmatpush1.msra.mxu0 0.0
      %2122 = vmatprep.subr.mxu0 0.0
      %2123 = vmatpush1.msra.mxu0 0.0
      %2124 = vmatprep.subr.mxu0 0.0
      %2125 = vmatpush1.msra.mxu0 0.0
      %2126 = vmatprep.subr.mxu0 0.0
      %2127 = vmatpush1.msra.mxu0 0.0
      %2128 = vmatprep.subr.mxu0 0.0
      %2129 = vmatpush1.msra.mxu0 0.0
      %2130 = vmatprep.subr.mxu0 0.0
      %2131 = vmatpush1.msra.mxu0 0.0
      %2132 = vmatprep.subr.mxu0 0.0
      %2133 = vmatpush1.msra.mxu0 0.0
      %2134 = vmatprep.subr.mxu0 0.0
      %2135 = vmatpush1.msra.mxu0 0.0
      %2136 = vmatprep.subr.mxu0 0.0
      %2137 = vmatpush1.msra.mxu0 0.0
      %2138 = vmatprep.subr.mxu0 0.0
      %2139 = vmatpush1.msra.mxu0 0.0
      %2140 = vmatprep.subr.mxu0 0.0
      %2141 = vmatpush1.msra.mxu0 0.0
      %2142 = vmatprep.subr.mxu0 0.0
      %2143 = vmatpush1.msra.mxu0 0.0
      %2144 = vmatprep.subr.mxu0 0.0
      %2145 = vmatpush1.msra.mxu0 0.0
      %2146 = vmatprep.subr.mxu0 0.0
      %2147 = vmatpush1.msra.mxu0 0.0
      %2148 = vmatprep.mubr.f32.mxu0 0.0
      %2149 = vmatmul.mubr.f32.gmra.mrb[0].mxu0 %v2067
      %v2150 = vpop.f32.mrb[0].mxu0
      %v2151 = vadd.f32 0.0, %v2150
      %v2152 = vpop.f32.mrb[0].mxu0
      %v2153 = vadd.f32 0.0, %v2152
      %2154 = vmatprep.mubr.f32.mxu0 0.0
      %2155 = vmatmul.mubr.f32.gmra.mrb[0].mxu0 %v2070
      %v2156 = vpop.f32.mrb[0].mxu0
      %v2157 = vadd.f32 0.0, %v2156
      %v2158 = vpop.f32.mrb[0].mxu0
      %v2159 = vadd.f32 0.0, %v2158
      %2160 = vmatprep.mubr.f32.mxu0 0.0
      %2161 = vmatmul.mubr.f32.gmra.mrb[0].mxu0 %v2073
      %v2162 = vpop.f32.mrb[0].mxu0
      %v2163 = vadd.f32 0.0, %v2162
      %v2164 = vpop.f32.mrb[0].mxu0
      %v2165 = vadd.f32 0.0, %v2164
      %2166 = vmatprep.mubr.f32.mxu0 0.0
      %2167 = vmatmul.mubr.f32.gmra.mrb[0].mxu0 %v2076
      %v2168 = vpop.f32.mrb[0].mxu0
      %v2169 = vadd.f32 0.0, %v2168
      %v2170 = vpop.f32.mrb[0].mxu0
      %v2171 = vadd.f32 0.0, %v2170
      %2172 = vdwg.mxu0
      %v2173 = vadd.f32 %v2035, %v2151
      %v2174 = vadd.f32 %v2036, %v2153
      %v2175 = vadd.f32 %v2037, %v2157
      %v2176 = vadd.f32 %v2038, %v2159
      %v2177 = vadd.f32 %v2039, %v2163
      %v2178 = vadd.f32 %v2040, %v2165
      %v2179 = vadd.f32 %v2041, %v2169
      %v2180 = vadd.f32 %v2042, %v2171
      %v2181 = vld [vmem:[#allocation3 + $0x8] sm:$0xff]
      %v2182 = vld [vmem:[#allocation3 + $0x10] sm:$0xff]
      %v2183 = vld [vmem:[#allocation3 + $0x18] sm:$0xff]
      %2187 = vrot.lane.b32.xlu0 %v2181, 113
      %v2188 = vpop.permute.xlu0 %2187
      %2189 = vrot.lane.b32.xlu0 %v2182, 113
      %v2190 = vpop.permute.xlu0 %2189
      %2191 = vrot.lane.b32.xlu0 %v2183, 113
      %v2192 = vpop.permute.xlu0 %2191
      %v2193 = vsel %vm2054, %v2188, %v2190
      %v2194 = vsel %vm2054, %v2190, %v2192
      %v2197 = vsel %vm476, %v2193, 0.0
      %v2198 = vsel %vm477, %v2194, 0.0
      %s2199 = scalar_lea.vmem %s4, 192
      %v2200 = vld [vmem:[%s2199] sm:$0xff]
      %v2201 = vld [vmem:[%s2199 + $0x8] sm:$0xff]
      %v2202 = vld [vmem:[%s2199 + $0x10] sm:$0xff]
      %v2203 = vld [vmem:[%s2199 + $0x18] sm:$0xff]
      %v2205 = vsel %vm519, %v2200, 0
      %v2208 = vsel %vm519, %v2201, 0
      %v2211 = vsel %vm519, %v2202, 0
      %v2214 = vsel %vm519, %v2203, 0
      %2216 = vmatprep.subr.mxu0 %v2198
      %2217 = vmatpush1.msra.mxu0 %v2197
      %2218 = vmatprep.subr.mxu0 0.0
      %2219 = vmatpush1.msra.mxu0 0.0
      %2220 = vmatprep.subr.mxu0 0.0
      %2221 = vmatpush1.msra.mxu0 0.0
      %2222 = vmatprep.subr.mxu0 0.0
      %2223 = vmatpush1.msra.mxu0 0.0
      %2224 = vmatprep.subr.mxu0 0.0
      %2225 = vmatpush1.msra.mxu0 0.0
      %2226 = vmatprep.subr.mxu0 0.0
      %2227 = vmatpush1.msra.mxu0 0.0
      %2228 = vmatprep.subr.mxu0 0.0
      %2229 = vmatpush1.msra.mxu0 0.0
      %2230 = vmatprep.subr.mxu0 0.0
      %2231 = vmatpush1.msra.mxu0 0.0
      %2232 = vmatprep.subr.mxu0 0.0
      %2233 = vmatpush1.msra.mxu0 0.0
      %2234 = vmatprep.subr.mxu0 0.0
      %2235 = vmatpush1.msra.mxu0 0.0
      %2236 = vmatprep.subr.mxu0 0.0
      %2237 = vmatpush1.msra.mxu0 0.0
      %2238 = vmatprep.subr.mxu0 0.0
      %2239 = vmatpush1.msra.mxu0 0.0
      %2240 = vmatprep.subr.mxu0 0.0
      %2241 = vmatpush1.msra.mxu0 0.0
      %2242 = vmatprep.subr.mxu0 0.0
      %2243 = vmatpush1.msra.mxu0 0.0
      %2244 = vmatprep.subr.mxu0 0.0
      %2245 = vmatpush1.msra.mxu0 0.0
      %2246 = vmatprep.subr.mxu0 0.0
      %2247 = vmatpush1.msra.mxu0 0.0
      %2248 = vmatprep.subr.mxu0 0.0
      %2249 = vmatpush1.msra.mxu0 0.0
      %2250 = vmatprep.subr.mxu0 0.0
      %2251 = vmatpush1.msra.mxu0 0.0
      %2252 = vmatprep.subr.mxu0 0.0
      %2253 = vmatpush1.msra.mxu0 0.0
      %2254 = vmatprep.subr.mxu0 0.0
      %2255 = vmatpush1.msra.mxu0 0.0
      %2256 = vmatprep.subr.mxu0 0.0
      %2257 = vmatpush1.msra.mxu0 0.0
      %2258 = vmatprep.subr.mxu0 0.0
      %2259 = vmatpush1.msra.mxu0 0.0
      %2260 = vmatprep.subr.mxu0 0.0
      %2261 = vmatpush1.msra.mxu0 0.0
      %2262 = vmatprep.subr.mxu0 0.0
      %2263 = vmatpush1.msra.mxu0 0.0
      %2264 = vmatprep.subr.mxu0 0.0
      %2265 = vmatpush1.msra.mxu0 0.0
      %2266 = vmatprep.subr.mxu0 0.0
      %2267 = vmatpush1.msra.mxu0 0.0
      %2268 = vmatprep.subr.mxu0 0.0
      %2269 = vmatpush1.msra.mxu0 0.0
      %2270 = vmatprep.subr.mxu0 0.0
      %2271 = vmatpush1.msra.mxu0 0.0
      %2272 = vmatprep.subr.mxu0 0.0
      %2273 = vmatpush1.msra.mxu0 0.0
      %2274 = vmatprep.subr.mxu0 0.0
      %2275 = vmatpush1.msra.mxu0 0.0
      %2276 = vmatprep.subr.mxu0 0.0
      %2277 = vmatpush1.msra.mxu0 0.0
      %2278 = vmatprep.subr.mxu0 0.0
      %2279 = vmatpush1.msra.mxu0 0.0
      %2280 = vmatprep.mubr.f32.mxu0 0.0
      %2281 = vmatmul.mubr.f32.gmra.mrb[0].mxu0 %v2205
      %v2282 = vpop.f32.mrb[0].mxu0
      %v2283 = vadd.f32 0.0, %v2282
      %v2284 = vpop.f32.mrb[0].mxu0
      %v2285 = vadd.f32 0.0, %v2284
      %2286 = vmatprep.mubr.f32.mxu0 0.0
      %2287 = vmatmul.mubr.f32.gmra.mrb[0].mxu0 %v2208
      %v2288 = vpop.f32.mrb[0].mxu0
      %v2289 = vadd.f32 0.0, %v2288
      %v2290 = vpop.f32.mrb[0].mxu0
      %v2291 = vadd.f32 0.0, %v2290
      %2292 = vmatprep.mubr.f32.mxu0 0.0
      %2293 = vmatmul.mubr.f32.gmra.mrb[0].mxu0 %v2211
      %v2294 = vpop.f32.mrb[0].mxu0
      %v2295 = vadd.f32 0.0, %v2294
      %v2296 = vpop.f32.mrb[0].mxu0
      %v2297 = vadd.f32 0.0, %v2296
      %2298 = vmatprep.mubr.f32.mxu0 0.0
      %2299 = vmatmul.mubr.f32.gmra.mrb[0].mxu0 %v2214
      %v2300 = vpop.f32.mrb[0].mxu0
      %v2301 = vadd.f32 0.0, %v2300
      %v2302 = vpop.f32.mrb[0].mxu0
      %v2303 = vadd.f32 0.0, %v2302
      %2304 = vdwg.mxu0
      %v2305 = vadd.f32 %v2173, %v2283
      %v2306 = vadd.f32 %v2174, %v2285
      %v2307 = vadd.f32 %v2175, %v2289
      %v2308 = vadd.f32 %v2176, %v2291
      %v2309 = vadd.f32 %v2177, %v2295
      %v2310 = vadd.f32 %v2178, %v2297
      %v2311 = vadd.f32 %v2179, %v2301
      %v2312 = vadd.f32 %v2180, %v2303
      %v2313 = vld [vmem:[#allocation2 + $0x4] sm:$0xff]
      %v2314 = vld [vmem:[#allocation2 + $0xc] sm:$0xf]
      %s2315 = scalar_lea.vmem %s3, 224
      %v2316 = vld [vmem:[%s2315] sm:$0xff]
      %v2317 = vld [vmem:[%s2315 + $0x8] sm:$0xff]
      %v2318 = vld [vmem:[%s2315 + $0x10] sm:$0xff]
      %v2319 = vld [vmem:[%s2315 + $0x18] sm:$0xff]
      %v2322 = vcombine.high %v2313, %v2313
      %2323 = vrot.lane.b32.xlu0 %v2313, 112
      %v2324 = vpop.permute.xlu0 %2323
      %2325 = vrot.lane.b32.xlu0 %v2322, 112
      %v2326 = vpop.permute.xlu0 %2325
      %2327 = vrot.lane.b32.xlu0 %v2314, 112
      %v2328 = vpop.permute.xlu0 %2327
      %vm2329 = vcmask 916480
      %v2330 = vsel %vm2329, %v2324, %v2326
      %v2331 = vsel %vm2329, %v2326, %v2328
      %v2333 = vsel %vm621, %v2316, 0
      %v2336 = vsel %vm621, %v2317, 0
      %v2339 = vsel %vm621, %v2318, 0
      %v2342 = vsel %vm621, %v2319, 0
      %v2344 = vsel %vm634, %v2330, 0
      %v2346 = vsel %vm634, %v2331, 0
      %2348 = vmatprep.subr.mxu0 %v2346
      %2349 = vmatpush1.msra.mxu0 %v2344
      %2350 = vmatprep.subr.mxu0 0.0
      %2351 = vmatpush1.msra.mxu0 0.0
      %2352 = vmatprep.subr.mxu0 0.0
      %2353 = vmatpush1.msra.mxu0 0.0
      %2354 = vmatprep.subr.mxu0 0.0
      %2355 = vmatpush1.msra.mxu0 0.0
      %2356 = vmatprep.subr.mxu0 0.0
      %2357 = vmatpush1.msra.mxu0 0.0
      %2358 = vmatprep.subr.mxu0 0.0
      %2359 = vmatpush1.msra.mxu0 0.0
      %2360 = vmatprep.subr.mxu0 0.0
      %2361 = vmatpush1.msra.mxu0 0.0
      %2362 = vmatprep.subr.mxu0 0.0
      %2363 = vmatpush1.msra.mxu0 0.0
      %2364 = vmatprep.subr.mxu0 0.0
      %2365 = vmatpush1.msra.mxu0 0.0
      %2366 = vmatprep.subr.mxu0 0.0
      %2367 = vmatpush1.msra.mxu0 0.0
      %2368 = vmatprep.subr.mxu0 0.0
      %2369 = vmatpush1.msra.mxu0 0.0
      %2370 = vmatprep.subr.mxu0 0.0
      %2371 = vmatpush1.msra.mxu0 0.0
      %2372 = vmatprep.subr.mxu0 0.0
      %2373 = vmatpush1.msra.mxu0 0.0
      %2374 = vmatprep.subr.mxu0 0.0
      %2375 = vmatpush1.msra.mxu0 0.0
      %2376 = vmatprep.subr.mxu0 0.0
      %2377 = vmatpush1.msra.mxu0 0.0
      %2378 = vmatprep.subr.mxu0 0.0
      %2379 = vmatpush1.msra.mxu0 0.0
      %2380 = vmatprep.subr.mxu0 0.0
      %2381 = vmatpush1.msra.mxu0 0.0
      %2382 = vmatprep.subr.mxu0 0.0
      %2383 = vmatpush1.msra.mxu0 0.0
      %2384 = vmatprep.subr.mxu0 0.0
      %2385 = vmatpush1.msra.mxu0 0.0
      %2386 = vmatprep.subr.mxu0 0.0
      %2387 = vmatpush1.msra.mxu0 0.0
      %2388 = vmatprep.subr.mxu0 0.0
      %2389 = vmatpush1.msra.mxu0 0.0
      %2390 = vmatprep.subr.mxu0 0.0
      %2391 = vmatpush1.msra.mxu0 0.0
      %2392 = vmatprep.subr.mxu0 0.0
      %2393 = vmatpush1.msra.mxu0 0.0
      %2394 = vmatprep.subr.mxu0 0.0
      %2395 = vmatpush1.msra.mxu0 0.0
      %2396 = vmatprep.subr.mxu0 0.0
      %2397 = vmatpush1.msra.mxu0 0.0
      %2398 = vmatprep.subr.mxu0 0.0
      %2399 = vmatpush1.msra.mxu0 0.0
      %2400 = vmatprep.subr.mxu0 0.0
      %2401 = vmatpush1.msra.mxu0 0.0
      %2402 = vmatprep.subr.mxu0 0.0
      %2403 = vmatpush1.msra.mxu0 0.0
      %2404 = vmatprep.subr.mxu0 0.0
      %2405 = vmatpush1.msra.mxu0 0.0
      %2406 = vmatprep.subr.mxu0 0.0
      %2407 = vmatpush1.msra.mxu0 0.0
      %2408 = vmatprep.subr.mxu0 0.0
      %2409 = vmatpush1.msra.mxu0 0.0
      %2410 = vmatprep.subr.mxu0 0.0
      %2411 = vmatpush1.msra.mxu0 0.0
      %2412 = vmatprep.mubr.f32.mxu0 0.0
      %2413 = vmatmul.mubr.f32.gmra.mrb[0].mxu0 %v2333
      %v2414 = vpop.f32.mrb[0].mxu0
      %v2415 = vadd.f32 0.0, %v2414
      %v2416 = vpop.f32.mrb[0].mxu0
      %v2417 = vadd.f32 0.0, %v2416
      %2418 = vmatprep.mubr.f32.mxu0 0.0
      %2419 = vmatmul.mubr.f32.gmra.mrb[0].mxu0 %v2336
      %v2420 = vpop.f32.mrb[0].mxu0
      %v2421 = vadd.f32 0.0, %v2420
      %v2422 = vpop.f32.mrb[0].mxu0
      %v2423 = vadd.f32 0.0, %v2422
      %2424 = vmatprep.mubr.f32.mxu0 0.0
      %2425 = vmatmul.mubr.f32.gmra.mrb[0].mxu0 %v2339
      %v2426 = vpop.f32.mrb[0].mxu0
      %v2427 = vadd.f32 0.0, %v2426
      %v2428 = vpop.f32.mrb[0].mxu0
      %v2429 = vadd.f32 0.0, %v2428
      %2430 = vmatprep.mubr.f32.mxu0 0.0
      %2431 = vmatmul.mubr.f32.gmra.mrb[0].mxu0 %v2342
      %v2432 = vpop.f32.mrb[0].mxu0
      %v2433 = vadd.f32 0.0, %v2432
      %v2434 = vpop.f32.mrb[0].mxu0
      %v2435 = vadd.f32 0.0, %v2434
      %2436 = vdwg.mxu0
      %v2437 = vadd.f32 %v2305, %v2415
      %v2438 = vadd.f32 %v2306, %v2417
      %v2439 = vadd.f32 %v2307, %v2421
      %v2440 = vadd.f32 %v2308, %v2423
      %v2441 = vadd.f32 %v2309, %v2427
      %v2442 = vadd.f32 %v2310, %v2429
      %v2443 = vadd.f32 %v2311, %v2433
      %v2444 = vadd.f32 %v2312, %v2435
      %v2445 = vld [vmem:[#allocation3 + $0x8] sm:$0xff]
      %v2446 = vld [vmem:[#allocation3 + $0x10] sm:$0xff]
      %v2447 = vld [vmem:[#allocation3 + $0x18] sm:$0xff]
      %s2448 = scalar_lea.vmem %s4, 224
      %v2449 = vld [vmem:[%s2448] sm:$0xff]
      %v2450 = vld [vmem:[%s2448 + $0x8] sm:$0xff]
      %v2451 = vld [vmem:[%s2448 + $0x10] sm:$0xff]
      %v2452 = vld [vmem:[%s2448 + $0x18] sm:$0xff]
      %2456 = vrot.lane.b32.xlu0 %v2445, 112
      %v2457 = vpop.permute.xlu0 %2456
      %2458 = vrot.lane.b32.xlu0 %v2446, 112
      %v2459 = vpop.permute.xlu0 %2458
      %2460 = vrot.lane.b32.xlu0 %v2447, 112
      %v2461 = vpop.permute.xlu0 %2460
      %v2462 = vsel %vm2329, %v2457, %v2459
      %v2463 = vsel %vm2329, %v2459, %v2461
      %v2467 = vsel %vm519, %v2449, 0
      %v2470 = vsel %vm519, %v2450, 0
      %v2473 = vsel %vm519, %v2451, 0
      %v2476 = vsel %vm519, %v2452, 0
      %2478 = vmatprep.subr.mxu0 %v2463
      %2479 = vmatpush1.msra.mxu0 %v2462
      %2480 = vmatprep.subr.mxu0 0.0
      %2481 = vmatpush1.msra.mxu0 0.0
      %2482 = vmatprep.subr.mxu0 0.0
      %2483 = vmatpush1.msra.mxu0 0.0
      %2484 = vmatprep.subr.mxu0 0.0
      %2485 = vmatpush1.msra.mxu0 0.0
      %2486 = vmatprep.subr.mxu0 0.0
      %2487 = vmatpush1.msra.mxu0 0.0
      %2488 = vmatprep.subr.mxu0 0.0
      %2489 = vmatpush1.msra.mxu0 0.0
      %2490 = vmatprep.subr.mxu0 0.0
      %2491 = vmatpush1.msra.mxu0 0.0
      %2492 = vmatprep.subr.mxu0 0.0
      %2493 = vmatpush1.msra.mxu0 0.0
      %2494 = vmatprep.subr.mxu0 0.0
      %2495 = vmatpush1.msra.mxu0 0.0
      %2496 = vmatprep.subr.mxu0 0.0
      %2497 = vmatpush1.msra.mxu0 0.0
      %2498 = vmatprep.subr.mxu0 0.0
      %2499 = vmatpush1.msra.mxu0 0.0
      %2500 = vmatprep.subr.mxu0 0.0
      %2501 = vmatpush1.msra.mxu0 0.0
      %2502 = vmatprep.subr.mxu0 0.0
      %2503 = vmatpush1.msra.mxu0 0.0
      %2504 = vmatprep.subr.mxu0 0.0
      %2505 = vmatpush1.msra.mxu0 0.0
      %2506 = vmatprep.subr.mxu0 0.0
      %2507 = vmatpush1.msra.mxu0 0.0
      %2508 = vmatprep.subr.mxu0 0.0
      %2509 = vmatpush1.msra.mxu0 0.0
      %2510 = vmatprep.subr.mxu0 0.0
      %2511 = vmatpush1.msra.mxu0 0.0
      %2512 = vmatprep.subr.mxu0 0.0
      %2513 = vmatpush1.msra.mxu0 0.0
      %2514 = vmatprep.subr.mxu0 0.0
      %2515 = vmatpush1.msra.mxu0 0.0
      %2516 = vmatprep.subr.mxu0 0.0
      %2517 = vmatpush1.msra.mxu0 0.0
      %2518 = vmatprep.subr.mxu0 0.0
      %2519 = vmatpush1.msra.mxu0 0.0
      %2520 = vmatprep.subr.mxu0 0.0
      %2521 = vmatpush1.msra.mxu0 0.0
      %2522 = vmatprep.subr.mxu0 0.0
      %2523 = vmatpush1.msra.mxu0 0.0
      %2524 = vmatprep.subr.mxu0 0.0
      %2525 = vmatpush1.msra.mxu0 0.0
      %2526 = vmatprep.subr.mxu0 0.0
      %2527 = vmatpush1.msra.mxu0 0.0
      %2528 = vmatprep.subr.mxu0 0.0
      %2529 = vmatpush1.msra.mxu0 0.0
      %2530 = vmatprep.subr.mxu0 0.0
      %2531 = vmatpush1.msra.mxu0 0.0
      %2532 = vmatprep.subr.mxu0 0.0
      %2533 = vmatpush1.msra.mxu0 0.0
      %2534 = vmatprep.subr.mxu0 0.0
      %2535 = vmatpush1.msra.mxu0 0.0
      %2536 = vmatprep.subr.mxu0 0.0
      %2537 = vmatpush1.msra.mxu0 0.0
      %2538 = vmatprep.subr.mxu0 0.0
      %2539 = vmatpush1.msra.mxu0 0.0
      %2540 = vmatprep.subr.mxu0 0.0
      %2541 = vmatpush1.msra.mxu0 0.0
      %2542 = vmatprep.mubr.f32.mxu0 0.0
      %2543 = vmatmul.mubr.f32.gmra.mrb[0].mxu0 %v2467
      %v2544 = vpop.f32.mrb[0].mxu0
      %v2545 = vadd.f32 0.0, %v2544
      %v2546 = vpop.f32.mrb[0].mxu0
      %v2547 = vadd.f32 0.0, %v2546
      %2548 = vmatprep.mubr.f32.mxu0 0.0
      %2549 = vmatmul.mubr.f32.gmra.mrb[0].mxu0 %v2470
      %v2550 = vpop.f32.mrb[0].mxu0
      %v2551 = vadd.f32 0.0, %v2550
      %v2552 = vpop.f32.mrb[0].mxu0
      %v2553 = vadd.f32 0.0, %v2552
      %2554 = vmatprep.mubr.f32.mxu0 0.0
      %2555 = vmatmul.mubr.f32.gmra.mrb[0].mxu0 %v2473
      %v2556 = vpop.f32.mrb[0].mxu0
      %v2557 = vadd.f32 0.0, %v2556
      %v2558 = vpop.f32.mrb[0].mxu0
      %v2559 = vadd.f32 0.0, %v2558
      %2560 = vmatprep.mubr.f32.mxu0 0.0
      %2561 = vmatmul.mubr.f32.gmra.mrb[0].mxu0 %v2476
      %v2562 = vpop.f32.mrb[0].mxu0
      %v2563 = vadd.f32 0.0, %v2562
      %v2564 = vpop.f32.mrb[0].mxu0
      %v2565 = vadd.f32 0.0, %v2564
      %2566 = vdwg.mxu0
      %v2567 = vadd.f32 %v2437, %v2545
      %v2568 = vadd.f32 %v2438, %v2547
      %v2569 = vadd.f32 %v2439, %v2551
      %v2570 = vadd.f32 %v2440, %v2553
      %v2571 = vadd.f32 %v2441, %v2557
      %v2572 = vadd.f32 %v2442, %v2559
      %v2573 = vadd.f32 %v2443, %v2563
      %v2574 = vadd.f32 %v2444, %v2565
      %v2575 = vld [vmem:[#allocation2 + $0x4] sm:$0xff]
      %v2576 = vld [vmem:[#allocation2 + $0xc] sm:$0xf]
      %v2579 = vcombine.high %v2575, %v2575
      %2580 = vrot.lane.b32.xlu0 %v2575, 111
      %v2581 = vpop.permute.xlu0 %2580
      %2582 = vrot.lane.b32.xlu0 %v2579, 111
      %v2583 = vpop.permute.xlu0 %2582
      %2584 = vrot.lane.b32.xlu0 %v2576, 111
      %v2585 = vpop.permute.xlu0 %2584
      %vm2586 = vcmask 908288
      %v2587 = vsel %vm2586, %v2581, %v2583
      %v2588 = vsel %vm2586, %v2583, %v2585
      %v2591 = vsel %vm996, %v2587, 0.0
      %v2592 = vsel %vm997, %v2588, 0.0
      %s2593 = scalar_lea.vmem %s3, 256
      %v2594 = vld [vmem:[%s2593] sm:$0xff]
      %v2595 = vld [vmem:[%s2593 + $0x8] sm:$0xff]
      %v2596 = vld [vmem:[%s2593 + $0x10] sm:$0xff]
      %v2597 = vld [vmem:[%s2593 + $0x18] sm:$0xff]
      %v2599 = vsel %vm621, %v2594, 0
      %v2602 = vsel %vm621, %v2595, 0
      %v2605 = vsel %vm621, %v2596, 0
      %v2608 = vsel %vm621, %v2597, 0
      %v2611 = vsel %vm634, %v2591, 0
      %v2614 = vsel %vm634, %v2592, 0
      %2616 = vmatprep.subr.mxu0 %v2614
      %2617 = vmatpush1.msra.mxu0 %v2611
      %2618 = vmatprep.subr.mxu0 0.0
      %2619 = vmatpush1.msra.mxu0 0.0
      %2620 = vmatprep.subr.mxu0 0.0
      %2621 = vmatpush1.msra.mxu0 0.0
      %2622 = vmatprep.subr.mxu0 0.0
      %2623 = vmatpush1.msra.mxu0 0.0
      %2624 = vmatprep.subr.mxu0 0.0
      %2625 = vmatpush1.msra.mxu0 0.0
      %2626 = vmatprep.subr.mxu0 0.0
      %2627 = vmatpush1.msra.mxu0 0.0
      %2628 = vmatprep.subr.mxu0 0.0
      %2629 = vmatpush1.msra.mxu0 0.0
      %2630 = vmatprep.subr.mxu0 0.0
      %2631 = vmatpush1.msra.mxu0 0.0
      %2632 = vmatprep.subr.mxu0 0.0
      %2633 = vmatpush1.msra.mxu0 0.0
      %2634 = vmatprep.subr.mxu0 0.0
      %2635 = vmatpush1.msra.mxu0 0.0
      %2636 = vmatprep.subr.mxu0 0.0
      %2637 = vmatpush1.msra.mxu0 0.0
      %2638 = vmatprep.subr.mxu0 0.0
      %2639 = vmatpush1.msra.mxu0 0.0
      %2640 = vmatprep.subr.mxu0 0.0
      %2641 = vmatpush1.msra.mxu0 0.0
      %2642 = vmatprep.subr.mxu0 0.0
      %2643 = vmatpush1.msra.mxu0 0.0
      %2644 = vmatprep.subr.mxu0 0.0
      %2645 = vmatpush1.msra.mxu0 0.0
      %2646 = vmatprep.subr.mxu0 0.0
      %2647 = vmatpush1.msra.mxu0 0.0
      %2648 = vmatprep.subr.mxu0 0.0
      %2649 = vmatpush1.msra.mxu0 0.0
      %2650 = vmatprep.subr.mxu0 0.0
      %2651 = vmatpush1.msra.mxu0 0.0
      %2652 = vmatprep.subr.mxu0 0.0
      %2653 = vmatpush1.msra.mxu0 0.0
      %2654 = vmatprep.subr.mxu0 0.0
      %2655 = vmatpush1.msra.mxu0 0.0
      %2656 = vmatprep.subr.mxu0 0.0
      %2657 = vmatpush1.msra.mxu0 0.0
      %2658 = vmatprep.subr.mxu0 0.0
      %2659 = vmatpush1.msra.mxu0 0.0
      %2660 = vmatprep.subr.mxu0 0.0
      %2661 = vmatpush1.msra.mxu0 0.0
      %2662 = vmatprep.subr.mxu0 0.0
      %2663 = vmatpush1.msra.mxu0 0.0
      %2664 = vmatprep.subr.mxu0 0.0
      %2665 = vmatpush1.msra.mxu0 0.0
      %2666 = vmatprep.subr.mxu0 0.0
      %2667 = vmatpush1.msra.mxu0 0.0
      %2668 = vmatprep.subr.mxu0 0.0
      %2669 = vmatpush1.msra.mxu0 0.0
      %2670 = vmatprep.subr.mxu0 0.0
      %2671 = vmatpush1.msra.mxu0 0.0
      %2672 = vmatprep.subr.mxu0 0.0
      %2673 = vmatpush1.msra.mxu0 0.0
      %2674 = vmatprep.subr.mxu0 0.0
      %2675 = vmatpush1.msra.mxu0 0.0
      %2676 = vmatprep.subr.mxu0 0.0
      %2677 = vmatpush1.msra.mxu0 0.0
      %2678 = vmatprep.subr.mxu0 0.0
      %2679 = vmatpush1.msra.mxu0 0.0
      %2680 = vmatprep.mubr.f32.mxu0 0.0
      %2681 = vmatmul.mubr.f32.gmra.mrb[0].mxu0 %v2599
      %v2682 = vpop.f32.mrb[0].mxu0
      %v2683 = vadd.f32 0.0, %v2682
      %v2684 = vpop.f32.mrb[0].mxu0
      %v2685 = vadd.f32 0.0, %v2684
      %2686 = vmatprep.mubr.f32.mxu0 0.0
      %2687 = vmatmul.mubr.f32.gmra.mrb[0].mxu0 %v2602
      %v2688 = vpop.f32.mrb[0].mxu0
      %v2689 = vadd.f32 0.0, %v2688
      %v2690 = vpop.f32.mrb[0].mxu0
      %v2691 = vadd.f32 0.0, %v2690
      %2692 = vmatprep.mubr.f32.mxu0 0.0
      %2693 = vmatmul.mubr.f32.gmra.mrb[0].mxu0 %v2605
      %v2694 = vpop.f32.mrb[0].mxu0
      %v2695 = vadd.f32 0.0, %v2694
      %v2696 = vpop.f32.mrb[0].mxu0
      %v2697 = vadd.f32 0.0, %v2696
      %2698 = vmatprep.mubr.f32.mxu0 0.0
      %2699 = vmatmul.mubr.f32.gmra.mrb[0].mxu0 %v2608
      %v2700 = vpop.f32.mrb[0].mxu0
      %v2701 = vadd.f32 0.0, %v2700
      %v2702 = vpop.f32.mrb[0].mxu0
      %v2703 = vadd.f32 0.0, %v2702
      %2704 = vdwg.mxu0
      %v2705 = vadd.f32 %v2567, %v2683
      %v2706 = vadd.f32 %v2568, %v2685
      %v2707 = vadd.f32 %v2569, %v2689
      %v2708 = vadd.f32 %v2570, %v2691
      %v2709 = vadd.f32 %v2571, %v2695
      %v2710 = vadd.f32 %v2572, %v2697
      %v2711 = vadd.f32 %v2573, %v2701
      %v2712 = vadd.f32 %v2574, %v2703
      %v2713 = vld [vmem:[#allocation3 + $0x8] sm:$0xff]
      %v2714 = vld [vmem:[#allocation3 + $0x10] sm:$0xff]
      %v2715 = vld [vmem:[#allocation3 + $0x18] sm:$0xff]
      %2719 = vrot.lane.b32.xlu0 %v2713, 111
      %v2720 = vpop.permute.xlu0 %2719
      %2721 = vrot.lane.b32.xlu0 %v2714, 111
      %v2722 = vpop.permute.xlu0 %2721
      %2723 = vrot.lane.b32.xlu0 %v2715, 111
      %v2724 = vpop.permute.xlu0 %2723
      %v2725 = vsel %vm2586, %v2720, %v2722
      %v2726 = vsel %vm2586, %v2722, %v2724
      %v2729 = vsel %vm996, %v2725, 0.0
      %v2730 = vsel %vm997, %v2726, 0.0
      %s2731 = scalar_lea.vmem %s4, 256
      %v2732 = vld [vmem:[%s2731] sm:$0xff]
      %v2733 = vld [vmem:[%s2731 + $0x8] sm:$0xff]
      %v2734 = vld [vmem:[%s2731 + $0x10] sm:$0xff]
      %v2735 = vld [vmem:[%s2731 + $0x18] sm:$0xff]
      %v2737 = vsel %vm519, %v2732, 0
      %v2740 = vsel %vm519, %v2733, 0
      %v2743 = vsel %vm519, %v2734, 0
      %v2746 = vsel %vm519, %v2735, 0
      %2748 = vmatprep.subr.mxu0 %v2730
      %2749 = vmatpush1.msra.mxu0 %v2729
      %2750 = vmatprep.subr.mxu0 0.0
      %2751 = vmatpush1.msra.mxu0 0.0
      %2752 = vmatprep.subr.mxu0 0.0
      %2753 = vmatpush1.msra.mxu0 0.0
      %2754 = vmatprep.subr.mxu0 0.0
      %2755 = vmatpush1.msra.mxu0 0.0
      %2756 = vmatprep.subr.mxu0 0.0
      %2757 = vmatpush1.msra.mxu0 0.0
      %2758 = vmatprep.subr.mxu0 0.0
      %2759 = vmatpush1.msra.mxu0 0.0
      %2760 = vmatprep.subr.mxu0 0.0
      %2761 = vmatpush1.msra.mxu0 0.0
      %2762 = vmatprep.subr.mxu0 0.0
      %2763 = vmatpush1.msra.mxu0 0.0
      %2764 = vmatprep.subr.mxu0 0.0
      %2765 = vmatpush1.msra.mxu0 0.0
      %2766 = vmatprep.subr.mxu0 0.0
      %2767 = vmatpush1.msra.mxu0 0.0
      %2768 = vmatprep.subr.mxu0 0.0
      %2769 = vmatpush1.msra.mxu0 0.0
      %2770 = vmatprep.subr.mxu0 0.0
      %2771 = vmatpush1.msra.mxu0 0.0
      %2772 = vmatprep.subr.mxu0 0.0
      %2773 = vmatpush1.msra.mxu0 0.0
      %2774 = vmatprep.subr.mxu0 0.0
      %2775 = vmatpush1.msra.mxu0 0.0
      %2776 = vmatprep.subr.mxu0 0.0
      %2777 = vmatpush1.msra.mxu0 0.0
      %2778 = vmatprep.subr.mxu0 0.0
      %2779 = vmatpush1.msra.mxu0 0.0
      %2780 = vmatprep.subr.mxu0 0.0
      %2781 = vmatpush1.msra.mxu0 0.0
      %2782 = vmatprep.subr.mxu0 0.0
      %2783 = vmatpush1.msra.mxu0 0.0
      %2784 = vmatprep.subr.mxu0 0.0
      %2785 = vmatpush1.msra.mxu0 0.0
      %2786 = vmatprep.subr.mxu0 0.0
      %2787 = vmatpush1.msra.mxu0 0.0
      %2788 = vmatprep.subr.mxu0 0.0
      %2789 = vmatpush1.msra.mxu0 0.0
      %2790 = vmatprep.subr.mxu0 0.0
      %2791 = vmatpush1.msra.mxu0 0.0
      %2792 = vmatprep.subr.mxu0 0.0
      %2793 = vmatpush1.msra.mxu0 0.0
      %2794 = vmatprep.subr.mxu0 0.0
      %2795 = vmatpush1.msra.mxu0 0.0
      %2796 = vmatprep.subr.mxu0 0.0
      %2797 = vmatpush1.msra.mxu0 0.0
      %2798 = vmatprep.subr.mxu0 0.0
      %2799 = vmatpush1.msra.mxu0 0.0
      %2800 = vmatprep.subr.mxu0 0.0
      %2801 = vmatpush1.msra.mxu0 0.0
      %2802 = vmatprep.subr.mxu0 0.0
      %2803 = vmatpush1.msra.mxu0 0.0
      %2804 = vmatprep.subr.mxu0 0.0
      %2805 = vmatpush1.msra.mxu0 0.0
      %2806 = vmatprep.subr.mxu0 0.0
      %2807 = vmatpush1.msra.mxu0 0.0
      %2808 = vmatprep.subr.mxu0 0.0
      %2809 = vmatpush1.msra.mxu0 0.0
      %2810 = vmatprep.subr.mxu0 0.0
      %2811 = vmatpush1.msra.mxu0 0.0
      %2812 = vmatprep.mubr.f32.mxu0 0.0
      %2813 = vmatmul.mubr.f32.gmra.mrb[0].mxu0 %v2737
      %v2814 = vpop.f32.mrb[0].mxu0
      %v2815 = vadd.f32 0.0, %v2814
      %v2816 = vpop.f32.mrb[0].mxu0
      %v2817 = vadd.f32 0.0, %v2816
      %2818 = vmatprep.mubr.f32.mxu0 0.0
      %2819 = vmatmul.mubr.f32.gmra.mrb[0].mxu0 %v2740
      %v2820 = vpop.f32.mrb[0].mxu0
      %v2821 = vadd.f32 0.0, %v2820
      %v2822 = vpop.f32.mrb[0].mxu0
      %v2823 = vadd.f32 0.0, %v2822
      %2824 = vmatprep.mubr.f32.mxu0 0.0
      %2825 = vmatmul.mubr.f32.gmra.mrb[0].mxu0 %v2743
      %v2826 = vpop.f32.mrb[0].mxu0
      %v2827 = vadd.f32 0.0, %v2826
      %v2828 = vpop.f32.mrb[0].mxu0
      %v2829 = vadd.f32 0.0, %v2828
      %2830 = vmatprep.mubr.f32.mxu0 0.0
      %2831 = vmatmul.mubr.f32.gmra.mrb[0].mxu0 %v2746
      %v2832 = vpop.f32.mrb[0].mxu0
      %v2833 = vadd.f32 0.0, %v2832
      %v2834 = vpop.f32.mrb[0].mxu0
      %v2835 = vadd.f32 0.0, %v2834
      %2836 = vdwg.mxu0
      %v2837 = vadd.f32 %v2705, %v2815
      %v2838 = vadd.f32 %v2706, %v2817
      %v2839 = vadd.f32 %v2707, %v2821
      %v2840 = vadd.f32 %v2708, %v2823
      %v2841 = vadd.f32 %v2709, %v2827
      %v2842 = vadd.f32 %v2710, %v2829
      %v2843 = vadd.f32 %v2711, %v2833
      %v2844 = vadd.f32 %v2712, %v2835
      %v2845 = vld [vmem:[%s5] sm:$0xff]
      %v2846 = vld [vmem:[%s5 + $0x8] sm:$0xff]
      %v2847 = vld [vmem:[%s5 + $0x10] sm:$0xff]
      %v2848 = vld [vmem:[%s5 + $0x18] sm:$0xff]
      %2850 = vset.pattern.permute.xlu0 0
      %2851 = vperm.xlu0 %2850, %v2845
      %v2852 = vpop.permute.xlu0 %2851
      %2855 = vset.pattern.permute.xlu0 0
      %2856 = vperm.xlu0 %2855, %v2846
      %v2857 = vpop.permute.xlu0 %2856
      %2860 = vset.pattern.permute.xlu0 0
      %2861 = vperm.xlu0 %2860, %v2847
      %v2862 = vpop.permute.xlu0 %2861
      %2865 = vset.pattern.permute.xlu0 0
      %2866 = vperm.xlu0 %2865, %v2848
      %v2867 = vpop.permute.xlu0 %2866
      %v2869 = vadd.f32 %v2837, %v2852
      %v2870 = vadd.f32 %v2838, %v2852
      %v2871 = vadd.f32 %v2839, %v2857
      %v2872 = vadd.f32 %v2840, %v2857
      %v2873 = vadd.f32 %v2841, %v2862
      %v2874 = vadd.f32 %v2842, %v2862
      %v2875 = vadd.f32 %v2843, %v2867
      %v2876 = vadd.f32 %v2844, %v2867
      %v2877 = vld [vmem:[%s310] sm:$0xff]
      %v2878 = vld [vmem:[%s310 + $0x8] sm:$0xff]
      %v2879 = vld [vmem:[%s6] sm:$0xff]
      %v2880 = vld [vmem:[%s6 + $0x8] sm:$0xff]
      %v2881 = vld [vmem:[%s7] sm:$0xff]
      %v2882 = vld [vmem:[%s7 + $0x8] sm:$0xff]
      %v2883 = vld [vmem:[%s8] sm:$0xff]
      %v2884 = vld [vmem:[%s8 + $0x8] sm:$0xff]
      %v2885 = vmul.f32 %v2879, %v2877
      %v2886 = vmul.f32 %v2880, %v2878
      %v2887 = vadd.f32 %v2869, %v2885
      %v2888 = vadd.f32 %v2870, %v2886
      %v2889 = vmul.f32 %v2887, 0.5
      %v2890 = vmul.f32 %v2888, 0.5
      %v2891 = vtanh.pop %v2889
      %v2892 = vtanh.pop %v2890
      %v2893 = vmul.f32 %v2891, 0.5
      %v2894 = vmul.f32 %v2892, 0.5
      %v2895 = vadd.f32 %v2893, 0.5
      %v2896 = vadd.f32 %v2894, 0.5
      %v2897 = vmul.f32 %v2881, %v2877
      %v2898 = vmul.f32 %v2882, %v2878
      %v2899 = vadd.f32 %v2871, %v2897
      %v2900 = vadd.f32 %v2872, %v2898
      %v2901 = vmul.f32 %v2899, 0.5
      %v2902 = vmul.f32 %v2900, 0.5
      %v2903 = vtanh.pop %v2901
      %v2904 = vtanh.pop %v2902
      %v2905 = vmul.f32 %v2903, 0.5
      %v2906 = vmul.f32 %v2904, 0.5
      %v2907 = vadd.f32 %v2905, 0.5
      %v2908 = vadd.f32 %v2906, 0.5
      %v2909 = vtanh.pop %v2873
      %v2910 = vtanh.pop %v2874
      %v2911 = vmul.f32 %v2907, %v2877
      %v2912 = vmul.f32 %v2908, %v2878
      %v2913 = vmul.f32 %v2895, %v2909
      %v2914 = vmul.f32 %v2896, %v2910
      %v2915 = vadd.f32 %v2911, %v2913
      %v2916 = vadd.f32 %v2912, %v2914
      %v2917 = vmul.f32 %v2883, %v2915
      %v2918 = vmul.f32 %v2884, %v2916
      %v2919 = vadd.f32 %v2875, %v2917
      %v2920 = vadd.f32 %v2876, %v2918
      %v2921 = vmul.f32 %v2919, 0.5
      %v2922 = vmul.f32 %v2920, 0.5
      %v2923 = vtanh.pop %v2921
      %v2924 = vtanh.pop %v2922
      %v2925 = vmul.f32 %v2923, 0.5
      %v2926 = vmul.f32 %v2924, 0.5
      %v2927 = vadd.f32 %v2925, 0.5
      %v2928 = vadd.f32 %v2926, 0.5
      %v2929 = vtanh.pop %v2915
      %v2930 = vtanh.pop %v2916
      %v2931 = vmul.f32 %v2927, %v2929
      %v2932 = vmul.f32 %v2928, %v2930
      %2933 = vst [vmem:[%s315] sm:$0xff] %v2931
      %2934 = vst [vmem:[%s315 + $0x8] sm:$0xff] %v2932
      %2935 = vst [vmem:[%s320] sm:$0xff] %v2915
      %2936 = vst [vmem:[%s320 + $0x8] sm:$0xff] %v2916
      %p2937 = scmp.lt.s32.totalorder %s22, 1
      %s2938 = scalar_select %p2937, %s22, 1
      %s2939 = smul.addr %s2938, 2
      %s2940 = smul.addr %s2939, 8
      %s2941 = scalar_lea.vmem %s9, %s2940
      %p2942 = scmp.lt.s32.totalorder %s22, 1
      %s2943 = scalar_select %p2942, %s22, 1
      %s2944 = smul.addr %s2943, 2
      %s2945 = smul.addr %s2944, 8
      %s2946 = scalar_lea.vmem %s10, %s2945
      // Predicated region
      $region117: #{convlstm_cell_pallas.1} parent=47 // pred_check
        %p2947 = pneg %p192
      $region118: #{convlstm_cell_pallas.1} parent=47 // pred_check_branch
        %2949 = sbr.rel (%p2947) target = $region120
      $region119: #{convlstm_cell_pallas.1} parent=47 // pred_region
        _
      $region120: #{convlstm_cell_pallas.1} parent=47 // pred_fallthru
        _
      // Predicated region
      $region121: #{convlstm_cell_pallas.1} parent=47 // pred_check
        %p2950 = pneg %p218
      $region122: #{convlstm_cell_pallas.1} parent=47 // pred_check_branch
        %2952 = sbr.rel (%p2950) target = $region124
      $region123: #{convlstm_cell_pallas.1} parent=47 // pred_region
        _
      $region124: #{convlstm_cell_pallas.1} parent=47 // pred_fallthru
        _
    $region48: #{convlstm_cell_pallas.1} parent=5 // pred_fallthru
      _
    %p2953 = scmp.le.s32.totalorder 2, %s17
    // Predicated region
    $region125: #{convlstm_cell_pallas.1} parent=5 // pred_check
      %p2954 = pneg %p2953
    $region126: #{convlstm_cell_pallas.1} parent=5 // pred_check_branch
      %2956 = sbr.rel (%p2954) target = $region128
    $region127: #{convlstm_cell_pallas.1} parent=5 // pred_region
      %s2957 = ssub.s32 %s17, 2
      // Predicated region
      $region129: #{convlstm_cell_pallas.1} parent=127 // pred_check
        %p2958 = pneg %p198
      $region130: #{convlstm_cell_pallas.1} parent=127 // pred_check_branch
        %2960 = sbr.rel (%p2958) target = $region132
      $region131: #{convlstm_cell_pallas.1} parent=127 // pred_region
        %p2961 = scmp.lt.s32.totalorder %s23, 1
        %s2962 = scalar_select %p2961, %s23, 1
        %s2963 = smul.addr %s2962, 2
        %s2964 = smul.addr %s2963, 8
        %s2965 = scalar_lea.vmem %s9, %s2964
      $region132: #{convlstm_cell_pallas.1} parent=127 // pred_fallthru
        _
      // Predicated region
      $region133: #{convlstm_cell_pallas.1} parent=127 // pred_check
        %p2966 = pneg %p224
      $region134: #{convlstm_cell_pallas.1} parent=127 // pred_check_branch
        %2968 = sbr.rel (%p2966) target = $region136
      $region135: #{convlstm_cell_pallas.1} parent=127 // pred_region
        %p2969 = scmp.lt.s32.totalorder %s23, 1
        %s2970 = scalar_select %p2969, %s23, 1
        %s2971 = smul.addr %s2970, 2
        %s2972 = smul.addr %s2971, 8
        %s2973 = scalar_lea.vmem %s10, %s2972
      $region136: #{convlstm_cell_pallas.1} parent=127 // pred_fallthru
        _
    $region128: #{convlstm_cell_pallas.1} parent=5 // pred_fallthru
      _
  $region6: #{convlstm_cell_pallas.1} parent=0 // loop_footer
    %s21 = sadd.s32 1, %s17
  $region7: #{convlstm_cell_pallas.1} parent=0 // loop_footer_branch
    %16 = sbr.rel target = $region3
  $region8: #{convlstm_cell_pallas.1} parent=0 // loop_exit
    _
  %2974 = vsyncmov [#allocation4]
  %s2975 = vpop.sfrf %2974
  %p2976 = scmp.eq.s32.totalorder %s2975, 0
  %p2977 = pneg %p2976
  %2979 = shalt.err (%p2977)
  %s2980 = scalar_lea.sflag [#allocation4], 1
  %2981 = vsyncmov %s2980
  %s2982 = vpop.sfrf %2981
  %p2983 = scmp.eq.s32.totalorder %s2982, 0
  %p2984 = pneg %p2983
  %2986 = shalt.err (%p2984)

</llo_original>
